<compile_context>
chip_gen: v7x
topology: tpu7x:2x2x1
jax: 0.10.0
libtpu: 0.0.40
codegen_flags: <defaults>
</compile_context>

<pallas_src>
import functools

import jax
import jax.numpy as jnp
from jax import lax
from jax.experimental import pallas as pl
from jax.experimental.pallas import tpu as pltpu

_EPS = 1e-5


# ---------------------------------------------------------------------------
# In-kernel compute helpers
# ---------------------------------------------------------------------------
def _lane_iota(shape):
    return lax.broadcasted_iota(jnp.int32, shape, len(shape) - 1)


def _maxpool3_same(x):
    """MaxPool1d(kernel=3, stride=1, padding=1) along the last (lane) axis.
    Built from XLU rolls + boundary masks (-inf fill); no padded copy of x."""
    L = x.shape[-1]
    idx = _lane_iota(x.shape)
    left = jnp.where(idx >= 1, pltpu.roll(x, shift=1, axis=x.ndim - 1), -jnp.inf)
    right = jnp.where(idx < L - 1,
                      pltpu.roll(x, shift=(L - 1) % L, axis=x.ndim - 1), -jnp.inf)
    return jnp.maximum(jnp.maximum(left, x), right)


def _conv_k_same(a, wt, k):
    """'same' k-tap Conv1d on a (Cred, L) tile: k shifted matmuls accumulated.
    Shifted views come from pltpu.roll + zero boundary masks (no im2col, no pad)."""
    L = a.shape[-1]
    pad = (k - 1) // 2
    idx = _lane_iota(a.shape)
    y = None
    for t in range(k):
        s = pad - t                        # shifted[i] = a[i + t - pad]
        if s == 0:
            sh = a
        else:
            sh = pltpu.roll(a, shift=s % L, axis=a.ndim - 1)
            if s > 0:
                sh = jnp.where(idx >= s, sh, 0.0)
            else:
                sh = jnp.where(idx < L + s, sh, 0.0)
        term = jnp.dot(wt[t], sh, preferred_element_type=jnp.float32)
        y = term if y is None else y + term
    return y


def _unpack_ss(ss):
    # (C, 2) packed [scale | shift] -> two (C, 1) columns (lane-broadcast later).
    return ss[:, 0:1], ss[:, 1:2]


# ---------------------------------------------------------------------------
# Pallas kernels
# ---------------------------------------------------------------------------
def _stage_a_stats_kernel(x_ref, ws_ref, wp_ref,
                          sum_a_ref, sq_a_ref, sum_p_ref, sq_p_ref, *, batch_block):
    # Accumulators are resident outputs (constant out index_map, "arbitrary" grid).
    @pl.when(pl.program_id(0) == 0)
    def _():
        sum_a_ref[...] = jnp.zeros_like(sum_a_ref)
        sq_a_ref[...] = jnp.zeros_like(sq_a_ref)
        sum_p_ref[...] = jnp.zeros_like(sum_p_ref)
        sq_p_ref[...] = jnp.zeros_like(sq_p_ref)

    x = x_ref[...]                         # (B, Cin, L)
    pooled = _maxpool3_same(x)
    ws = ws_ref[...]                       # (Ca, Cin)  fused [w1 | w2a | w3a]
    wp = wp_ref[...]                       # (C4, Cin)

    sa = jnp.zeros(sum_a_ref.shape, jnp.float32)
    qa = jnp.zeros(sq_a_ref.shape, jnp.float32)
    sp = jnp.zeros(sum_p_ref.shape, jnp.float32)
    qp = jnp.zeros(sq_p_ref.shape, jnp.float32)
    for b in range(batch_block):
        ya = jnp.dot(ws, x[b], preferred_element_type=jnp.float32)
        yp = jnp.dot(wp, pooled[b], preferred_element_type=jnp.float32)
        sa = sa + jnp.sum(ya, axis=1, keepdims=True)
        qa = qa + jnp.sum(ya * ya, axis=1, keepdims=True)
        sp = sp + jnp.sum(yp, axis=1, keepdims=True)
        qp = qp + jnp.sum(yp * yp, axis=1, keepdims=True)

    sum_a_ref[...] += sa
    sq_a_ref[...] += qa
    sum_p_ref[...] += sp
    sq_p_ref[...] += qp


def _stage_b_stats_kernel(x_ref, w2a_ref, w3a_ref, ss2a_ref, ss3a_ref,
                          w2b_ref, w3b_ref,
                          sum2_ref, sq2_ref, sum3_ref, sq3_ref, *, batch_block):
    # Activate b2a/b3a in VMEM only, run the k=3/k=5 convs, accumulate their stats.
    @pl.when(pl.program_id(0) == 0)
    def _():
        sum2_ref[...] = jnp.zeros_like(sum2_ref)
        sq2_ref[...] = jnp.zeros_like(sq2_ref)
        sum3_ref[...] = jnp.zeros_like(sum3_ref)
        sq3_ref[...] = jnp.zeros_like(sq3_ref)

    x = x_ref[...]
    w2a = w2a_ref[...]
    w3a = w3a_ref[...]
    w2b = w2b_ref[...]                      # (3, c2b, c2a) per-tap matrices
    w3b = w3b_ref[...]                      # (5, c3b, c3a)
    sc2a, sh2a = _unpack_ss(ss2a_ref[...])
    sc3a, sh3a = _unpack_ss(ss3a_ref[...])

    s2 = jnp.zeros(sum2_ref.shape, jnp.float32)
    q2 = jnp.zeros(sq2_ref.shape, jnp.float32)
    s3 = jnp.zeros(sum3_ref.shape, jnp.float32)
    q3 = jnp.zeros(sq3_ref.shape, jnp.float32)
    for b in range(batch_block):
        xb = x[b]
        a2 = jnp.maximum(
            jnp.dot(w2a, xb, preferred_element_type=jnp.float32) * sc2a + sh2a, 0.0)
        y2 = _conv_k_same(a2, w2b, 3)
        s2 = s2 + jnp.sum(y2, axis=1, keepdims=True)
        q2 = q2 + jnp.sum(y2 * y2, axis=1, keepdims=True)

        a3 = jnp.maximum(
            jnp.dot(w3a, xb, preferred_element_type=jnp.float32) * sc3a + sh3a, 0.0)
        y3 = _conv_k_same(a3, w3b, 5)
        s3 = s3 + jnp.sum(y3, axis=1, keepdims=True)
        q3 = q3 + jnp.sum(y3 * y3, axis=1, keepdims=True)

    sum2_ref[...] += s2
    sq2_ref[...] += q2
    sum3_ref[...] += s3
    sq3_ref[...] += q3


def _apply_kernel(x_ref, w1_ref, w2a_ref, w3a_ref, w4_ref, w2b_ref, w3b_ref,
                  ss1_ref, ss2a_ref, ss3a_ref, ss4_ref, ss2b_ref, ss3b_ref,
                  o_ref, *, batch_block, c1, c2b, c3b, c4):
    # Recompute the cheap convs and write all four branches straight into the
    # final (B, C_total, L) block at their channel offsets (no XLA concat).
    x = x_ref[...]
    pooled = _maxpool3_same(x)
    w1 = w1_ref[...]
    w2a = w2a_ref[...]
    w3a = w3a_ref[...]
    w4 = w4_ref[...]
    w2b = w2b_ref[...]
    w3b = w3b_ref[...]
    sc1, sh1 = _unpack_ss(ss1_ref[...])
    sc2a, sh2a = _unpack_ss(ss2a_ref[...])
    sc3a, sh3a = _unpack_ss(ss3a_ref[...])
    sc4, sh4 = _unpack_ss(ss4_ref[...])
    sc2b, sh2b = _unpack_ss(ss2b_ref[...])
    sc3b, sh3b = _unpack_ss(ss3b_ref[...])

    o2 = c1 + c2b
    o3 = o2 + c3b
    o4 = o3 + c4
    for b in range(batch_block):
        xb = x[b]
        # branch1: 1x1 conv + BN + ReLU
        br1 = jnp.maximum(
            jnp.dot(w1, xb, preferred_element_type=jnp.float32) * sc1 + sh1, 0.0)
        o_ref[b, 0:c1, :] = br1
        # branch2: 1x1 reduce + BN + ReLU -> conv3 + BN + ReLU
        a2 = jnp.maximum(
            jnp.dot(w2a, xb, preferred_element_type=jnp.float32) * sc2a + sh2a, 0.0)
        br2 = jnp.maximum(_conv_k_same(a2, w2b, 3) * sc2b + sh2b, 0.0)
        o_ref[b, c1:o2, :] = br2
        # branch3: 1x1 reduce + BN + ReLU -> conv5 + BN + ReLU
        a3 = jnp.maximum(
            jnp.dot(w3a, xb, preferred_element_type=jnp.float32) * sc3a + sh3a, 0.0)
        br3 = jnp.maximum(_conv_k_same(a3, w3b, 5) * sc3b + sh3b, 0.0)
        o_ref[b, o2:o3, :] = br3
        # branch4: maxpool(3,1,1) -> 1x1 conv + BN + ReLU
        br4 = jnp.maximum(
            jnp.dot(w4, pooled[b], preferred_element_type=jnp.float32) * sc4 + sh4, 0.0)
        o_ref[b, o3:o4, :] = br4


# ---------------------------------------------------------------------------
# Wrapper
# ---------------------------------------------------------------------------
def _pick_batch_block(n, max_b=8):
    b = min(n, max_b)
    while n % b != 0:
        b -= 1
    return b


def _fold_bn(s, q, gamma, beta, count, eps=_EPS):
    # Fold BatchNorm (batch statistics) into a packed (C, 2) [scale | shift].
    s = s[:, 0]
    q = q[:, 0]
    mean = s / count
    var = jnp.maximum(q / count - mean * mean, 0.0)   # sumsq form can go slightly <0
    scale = gamma * lax.rsqrt(var + eps)
    shift = beta - mean * scale
    return jnp.stack([scale, shift], axis=1).astype(jnp.float32)


def _bcast_spec(shape):
    nd = len(shape)
    return pl.BlockSpec(shape, lambda n, _nd=nd: (0,) * _nd)


@jax.jit
def inception1d_block_forward(x_ncl, params):
    x = x_ncl.astype(jnp.float32)
    N, Cin, L = x.shape

    w1, _, g1, be1 = params["b1"]
    w2a, _, g2a, be2a = params["b2a"]
    w2b, _, g2b, be2b = params["b2b"]
    w3a, _, g3a, be3a = params["b3a"]
    w3b, _, g3b, be3b = params["b3b"]
    w4, _, g4, be4 = params["b4"]

    c1, c2a, c2b = w1.shape[0], w2a.shape[0], w2b.shape[0]
    c3a, c3b, c4 = w3a.shape[0], w3b.shape[0], w4.shape[0]
    c_total = c1 + c2b + c3b + c4
    Ca = c1 + c2a + c3a

    B = _pick_batch_block(N)
    grid = (N // B,)
    count = float(N * L)

    # Conv biases intentionally unused: a per-channel constant added before
    # batch-statistics BatchNorm is exactly cancelled by the mean subtraction.
    w1m, w2am, w3am, w4m = w1[:, :, 0], w2a[:, :, 0], w3a[:, :, 0], w4[:, :, 0]
    w_shared = jnp.concatenate([w1m, w2am, w3am], axis=0)     # (Ca, Cin)
    w2bt = jnp.transpose(w2b, (2, 0, 1))                      # (3, c2b, c2a)
    w3bt = jnp.transpose(w3b, (2, 0, 1))                      # (5, c3b, c3a)

    x_spec = pl.BlockSpec((B, Cin, L), lambda n: (n, 0, 0))
    col = lambda c: pl.BlockSpec((c, 1), lambda n: (0, 0))
    ss_spec = lambda c: pl.BlockSpec((c, 2), lambda n: (0, 0))
    arb = pltpu.CompilerParams(dimension_semantics=("arbitrary",))
    par = pltpu.CompilerParams(dimension_semantics=("parallel",))

    # --- Pass 1: stage-A conv batch statistics -----------------------------
    sum_a, sq_a, sum_p, sq_p = pl.pallas_call(
        functools.partial(_stage_a_stats_kernel, batch_block=B),
        grid=grid,
        in_specs=[x_spec, _bcast_spec((Ca, Cin)), _bcast_spec((c4, Cin))],
        out_specs=[col(Ca), col(Ca), col(c4), col(c4)],
        out_shape=[jax.ShapeDtypeStruct((Ca, 1), jnp.float32)] * 2
                  + [jax.ShapeDtypeStruct((c4, 1), jnp.float32)] * 2,
        compiler_params=arb,
    )(x, w_shared, w4m)

    g_a = jnp.concatenate([g1, g2a, g3a])
    be_a = jnp.concatenate([be1, be2a, be3a])
    ss_a = _fold_bn(sum_a, sq_a, g_a, be_a, count)            # (Ca, 2)
    ss1 = ss_a[:c1]
    ss2a = ss_a[c1:c1 + c2a]
    ss3a = ss_a[c1 + c2a:]
    ss4 = _fold_bn(sum_p, sq_p, g4, be4, count)

    # --- Pass 2: stage-B conv batch statistics (b2a/b3a never leave VMEM) ---
    sum2, sq2, sum3, sq3 = pl.pallas_call(
        functools.partial(_stage_b_stats_kernel, batch_block=B),
        grid=grid,
        in_specs=[x_spec, _bcast_spec((c2a, Cin)), _bcast_spec((c3a, Cin)),
                  ss_spec(c2a), ss_spec(c3a),
                  _bcast_spec((3, c2b, c2a)), _bcast_spec((5, c3b, c3a))],
        out_specs=[col(c2b), col(c2b), col(c3b), col(c3b)],
        out_shape=[jax.ShapeDtypeStruct((c2b, 1), jnp.float32)] * 2
                  + [jax.ShapeDtypeStruct((c3b, 1), jnp.float32)] * 2,
        compiler_params=arb,
    )(x, w2am, w3am, ss2a, ss3a, w2bt, w3bt)

    ss2b = _fold_bn(sum2, sq2, g2b, be2b, count)
    ss3b = _fold_bn(sum3, sq3, g3b, be3b, count)

    # --- Pass 3: apply everything, write the final concatenated buffer ------
    out = pl.pallas_call(
        functools.partial(_apply_kernel, batch_block=B,
                          c1=c1, c2b=c2b, c3b=c3b, c4=c4),
        grid=grid,
        in_specs=[x_spec,
                  _bcast_spec((c1, Cin)), _bcast_spec((c2a, Cin)),
                  _bcast_spec((c3a, Cin)), _bcast_spec((c4, Cin)),
                  _bcast_spec((3, c2b, c2a)), _bcast_spec((5, c3b, c3a)),
                  ss_spec(c1), ss_spec(c2a), ss_spec(c3a), ss_spec(c4),
                  ss_spec(c2b), ss_spec(c3b)],
        out_specs=pl.BlockSpec((B, c_total, L), lambda n: (n, 0, 0)),
        out_shape=jax.ShapeDtypeStruct((N, c_total, L), jnp.float32),
        compiler_params=par,
    )(x, w1m, w2am, w3am, w4m, w2bt, w3bt, ss1, ss2a, ss3a, ss4, ss2b, ss3b)
    return out


# ---------------------------------------------------------------------------
# Parameter init (matches torch layouts / defaults)
# ---------------------------------------------------------------------------
def _init_conv_block(key, cin, cout, k):
    kw, kb = jax.random.split(key)
    w = jax.random.normal(kw, (cout, cin, k), jnp.float32) * 0.1   # Conv1d weight
    b = jax.random.normal(kb, (cout,), jnp.float32) * 0.1          # cancelled by train BN
    gamma = jnp.ones((cout,), jnp.float32)                         # BN weight default
    beta = jnp.zeros((cout,), jnp.float32)                         # BN bias default
    return (w, b, gamma, beta)


def init_inception_params(key, in_channels, out_1x1, in_reduce_3x3, out_reduce_3x3,
                          in_reduce_5x5, out_reduce_5x5, out_1x1_maxpool):
    keys = jax.random.split(key, 6)
    return {
        "b1":  _init_conv_block(keys[0], in_channels, out_1x1, 1),
        "b2a": _init_conv_block(keys[1], in_channels, in_reduce_3x3, 1),
        "b2b": _init_conv_block(keys[2], in_reduce_3x3, out_reduce_3x3, 3),
        "b3a": _init_conv_block(keys[3], in_channels, in_reduce_5x5, 1),
        "b3b": _init_conv_block(keys[4], in_reduce_5x5, out_reduce_5x5, 5),
        "b4":  _init_conv_block(keys[5], in_channels, out_1x1_maxpool, 1),
    }


# ---------------------------------------------------------------------------
# Pure-JAX reference (independent: lax.conv / reduce_window) for verification
# ---------------------------------------------------------------------------
def _reference_forward(x, params):
    def conv_bn_relu_ref(x, w, b, g, be, pad):
        y = lax.conv_general_dilated(x, w, (1,), [(pad, pad)],
                                     dimension_numbers=("NCH", "OIH", "NCH"))
        y = y + b[None, :, None]
        mean = jnp.mean(y, axis=(0, 2), keepdims=True)
        var = jnp.mean((y - mean) ** 2, axis=(0, 2), keepdims=True)
        y = (y - mean) * lax.rsqrt(var + _EPS)
        y = y * g[None, :, None] + be[None, :, None]
        return jnp.maximum(y, 0.0)

    b1 = conv_bn_relu_ref(x, *params["b1"], 0)
    b2 = conv_bn_relu_ref(x, *params["b2a"], 0)
    b2 = conv_bn_relu_ref(b2, *params["b2b"], 1)
    b3 = conv_bn_relu_ref(x, *params["b3a"], 0)
    b3 = conv_bn_relu_ref(b3, *params["b3b"], 2)
    pooled = lax.reduce_window(x, -jnp.inf, lax.max, (1, 1, 3), (1, 1, 1),
                               ((0, 0), (0, 0), (1, 1)))
    b4 = conv_bn_relu_ref(pooled, *params["b4"], 0)
    return jnp.concatenate([b1, b2, b3, b4], axis=1)


if __name__ == "__main__":
    key = jax.random.PRNGKey(0)
    k_x, k_p = jax.random.split(key)

    # Small shapes: N=2, Cin=4, L=128 (128 keeps the spatial/lane axis dense).
    N, Cin, L = 2, 4, 128
    x = jax.random.normal(k_x, (N, Cin, L), jnp.float32)

    params = init_inception_params(
        k_p,
        in_channels=Cin,
        out_1x1=8,
        in_reduce_3x3=4, out_reduce_3x3=8,
        in_reduce_5x5=4, out_reduce_5x5=8,
        out_1x1_maxpool=8,
    )

    out = inception1d_block_forward(x, params)
    out = jax.block_until_ready(out)

    assert out.shape == (N, 8 + 8 + 8 + 8, L), out.shape
    assert bool(jnp.all(jnp.isfinite(out)))

    ref = _reference_forward(x, params)
    max_err = float(jnp.max(jnp.abs(out - ref)))
    assert max_err < 2e-3, f"mismatch vs reference: {max_err}"

    print("KERNEL_OK")
</pallas_src>

<mosaic_0001>
module attributes {stable_mosaic.version = 11 : i64} {
  func.func @_stage_a_stats_kernel(%arg0: i32, %arg1: memref<2x4x128xf32, #tpu.memory_space<vmem>>, %arg2: memref<16x4xf32, #tpu.memory_space<vmem>>, %arg3: memref<8x4xf32, #tpu.memory_space<vmem>>, %arg4: memref<16x1xf32, #tpu.memory_space<vmem>>, %arg5: memref<16x1xf32, #tpu.memory_space<vmem>>, %arg6: memref<8x1xf32, #tpu.memory_space<vmem>>, %arg7: memref<8x1xf32, #tpu.memory_space<vmem>>) attributes {dimension_semantics = [#tpu.dimension_semantics<arbitrary>], iteration_bounds = array<i64: 1>, scalar_prefetch = 0 : i64, scratch_operands = 0 : i64, tpu.core_type = #tpu.core_type<tc>, window_params = [{transform_indices = @transform_0, window_bounds = array<i64: 2, 4, 128>}, {pipeline_mode = #tpu.pipeline_mode<synchronous>, transform_indices = @transform_1, window_bounds = array<i64: 16, 4>}, {pipeline_mode = #tpu.pipeline_mode<synchronous>, transform_indices = @transform_2, window_bounds = array<i64: 8, 4>}, {pipeline_mode = #tpu.pipeline_mode<synchronous>, transform_indices = @transform_3, window_bounds = array<i64: 16, 1>}, {pipeline_mode = #tpu.pipeline_mode<synchronous>, transform_indices = @transform_4, window_bounds = array<i64: 16, 1>}, {pipeline_mode = #tpu.pipeline_mode<synchronous>, transform_indices = @transform_5, window_bounds = array<i64: 8, 1>}, {pipeline_mode = #tpu.pipeline_mode<synchronous>, transform_indices = @transform_6, window_bounds = array<i64: 8, 1>}]} {
    %c0_i32 = arith.constant 0 : i32
    %0 = arith.cmpi eq, %arg0, %c0_i32 : i32
    %1 = arith.extui %0 : i1 to i32
    %c0_i32_0 = arith.constant 0 : i32
    %2 = arith.cmpi ne, %1, %c0_i32_0 : i32
    scf.if %2 {
      %cst_42 = arith.constant 0.000000e+00 : f32
      %75 = vector.broadcast %cst_42 : f32 to vector<16x1xf32>
      %c0_43 = arith.constant 0 : index
      %c0_44 = arith.constant 0 : index
      %76 = vector.load %arg4[%c0_43, %c0_44] : memref<16x1xf32, #tpu.memory_space<vmem>>, vector<16x1xf32>
      tpu.vector_store %arg4[%c0_43, %c0_44], %75 {strides = array<i32>} : memref<16x1xf32, #tpu.memory_space<vmem>>, vector<16x1xf32>,
      %cst_45 = arith.constant 0.000000e+00 : f32
      %77 = vector.broadcast %cst_45 : f32 to vector<16x1xf32>
      %c0_46 = arith.constant 0 : index
      %c0_47 = arith.constant 0 : index
      %78 = vector.load %arg5[%c0_46, %c0_47] : memref<16x1xf32, #tpu.memory_space<vmem>>, vector<16x1xf32>
      tpu.vector_store %arg5[%c0_46, %c0_47], %77 {strides = array<i32>} : memref<16x1xf32, #tpu.memory_space<vmem>>, vector<16x1xf32>,
      %cst_48 = arith.constant 0.000000e+00 : f32
      %79 = vector.broadcast %cst_48 : f32 to vector<8x1xf32>
      %c0_49 = arith.constant 0 : index
      %c0_50 = arith.constant 0 : index
      %80 = vector.load %arg6[%c0_49, %c0_50] : memref<8x1xf32, #tpu.memory_space<vmem>>, vector<8x1xf32>
      tpu.vector_store %arg6[%c0_49, %c0_50], %79 {strides = array<i32>} : memref<8x1xf32, #tpu.memory_space<vmem>>, vector<8x1xf32>,
      %cst_51 = arith.constant 0.000000e+00 : f32
      %81 = vector.broadcast %cst_51 : f32 to vector<8x1xf32>
      %c0_52 = arith.constant 0 : index
      %c0_53 = arith.constant 0 : index
      %82 = vector.load %arg7[%c0_52, %c0_53] : memref<8x1xf32, #tpu.memory_space<vmem>>, vector<8x1xf32>
      tpu.vector_store %arg7[%c0_52, %c0_53], %81 {strides = array<i32>} : memref<8x1xf32, #tpu.memory_space<vmem>>, vector<8x1xf32>,
    } else {
    }
    %c0 = arith.constant 0 : index
    %c0_1 = arith.constant 0 : index
    %c0_2 = arith.constant 0 : index
    %3 = vector.load %arg1[%c0, %c0_1, %c0_2] : memref<2x4x128xf32, #tpu.memory_space<vmem>>, vector<2x4x128xf32>
    %4 = tpu.iota {dimensions = array<i32: 2>} : vector<2x4x128xi32>
    %c1_i32 = arith.constant 1 : i32
    %5 = vector.broadcast %c1_i32 : i32 to vector<2x4x128xi32>
    %6 = arith.cmpi sge, %4, %5 : vector<2x4x128xi32>
    %c1_i32_3 = arith.constant 1 : i32
    %7 = tpu.dynamic_rotate %3 by %c1_i32_3 dim 2 : vector<2x4x128xf32>, i32 -> vector<2x4x128xf32>
    %cst = arith.constant 0xFF800000 : f32
    %8 = vector.broadcast %cst : f32 to vector<2x4x128xf32>
    %9 = arith.select %6, %7, %8 : vector<2x4x128xi1>, vector<2x4x128xf32>
    %c127_i32 = arith.constant 127 : i32
    %10 = vector.broadcast %c127_i32 : i32 to vector<2x4x128xi32>
    %11 = arith.cmpi slt, %4, %10 : vector<2x4x128xi32>
    %c127_i32_4 = arith.constant 127 : i32
    %12 = tpu.dynamic_rotate %3 by %c127_i32_4 dim 2 : vector<2x4x128xf32>, i32 -> vector<2x4x128xf32>
    %cst_5 = arith.constant 0xFF800000 : f32
    %13 = vector.broadcast %cst_5 : f32 to vector<2x4x128xf32>
    %14 = arith.select %11, %12, %13 : vector<2x4x128xi1>, vector<2x4x128xf32>
    %15 = arith.maximumf %9, %3 : vector<2x4x128xf32>
    %16 = arith.maximumf %15, %14 : vector<2x4x128xf32>
    %c0_6 = arith.constant 0 : index
    %c0_7 = arith.constant 0 : index
    %17 = vector.load %arg2[%c0_6, %c0_7] : memref<16x4xf32, #tpu.memory_space<vmem>>, vector<16x4xf32>
    %c0_8 = arith.constant 0 : index
    %c0_9 = arith.constant 0 : index
    %18 = vector.load %arg3[%c0_8, %c0_9] : memref<8x4xf32, #tpu.memory_space<vmem>>, vector<8x4xf32>
    %cst_10 = arith.constant 0.000000e+00 : f32
    %19 = vector.broadcast %cst_10 : f32 to vector<16x1xf32>
    %cst_11 = arith.constant 0.000000e+00 : f32
    %20 = vector.broadcast %cst_11 : f32 to vector<16x1xf32>
    %cst_12 = arith.constant 0.000000e+00 : f32
    %21 = vector.broadcast %cst_12 : f32 to vector<8x1xf32>
    %cst_13 = arith.constant 0.000000e+00 : f32
    %22 = vector.broadcast %cst_13 : f32 to vector<8x1xf32>
    %23 = vector.extract_strided_slice %3 {offsets = [0, 0, 0], sizes = [1, 4, 128], strides = [1, 1, 1]} : vector<2x4x128xf32> to vector<1x4x128xf32>
    %24 = vector.shape_cast %23 : vector<1x4x128xf32> to vector<4x128xf32>
    %cst_14 = arith.constant dense<0.000000e+00> : vector<16x128xf32>
    %25 = tpu.matmul %17, %24, %cst_14 {dimension_numbers = #tpu.dot_dimension_numbers<[1], [0], [0], [1], [0, 0, 1, 1], [], []>} : vector<16x4xf32>, vector<4x128xf32>, vector<16x128xf32> -> vector<16x128xf32>
    %26 = vector.extract_strided_slice %16 {offsets = [0, 0, 0], sizes = [1, 4, 128], strides = [1, 1, 1]} : vector<2x4x128xf32> to vector<1x4x128xf32>
    %27 = vector.shape_cast %26 : vector<1x4x128xf32> to vector<4x128xf32>
    %cst_15 = arith.constant dense<0.000000e+00> : vector<8x128xf32>
    %28 = tpu.matmul %18, %27, %cst_15 {dimension_numbers = #tpu.dot_dimension_numbers<[1], [0], [0], [1], [0, 0, 1, 1], [], []>} : vector<8x4xf32>, vector<4x128xf32>, vector<8x128xf32> -> vector<8x128xf32>
    %cst_16 = arith.constant dense<0.000000e+00> : vector<16xf32>
    %29 = vector.multi_reduction <add>, %25, %cst_16 [1] : vector<16x128xf32> to vector<16xf32>
    %30 = vector.shape_cast %29 : vector<16xf32> to vector<16x1xf32>
    %31 = arith.addf %19, %30 : vector<16x1xf32>
    %32 = arith.mulf %25, %25 : vector<16x128xf32>
    %cst_17 = arith.constant dense<0.000000e+00> : vector<16xf32>
    %33 = vector.multi_reduction <add>, %32, %cst_17 [1] : vector<16x128xf32> to vector<16xf32>
    %34 = vector.shape_cast %33 : vector<16xf32> to vector<16x1xf32>
    %35 = arith.addf %20, %34 : vector<16x1xf32>
    %cst_18 = arith.constant dense<0.000000e+00> : vector<8xf32>
    %36 = vector.multi_reduction <add>, %28, %cst_18 [1] : vector<8x128xf32> to vector<8xf32>
    %37 = vector.shape_cast %36 : vector<8xf32> to vector<8x1xf32>
    %38 = arith.addf %21, %37 : vector<8x1xf32>
    %39 = arith.mulf %28, %28 : vector<8x128xf32>
    %cst_19 = arith.constant dense<0.000000e+00> : vector<8xf32>
    %40 = vector.multi_reduction <add>, %39, %cst_19 [1] : vector<8x128xf32> to vector<8xf32>
    %41 = vector.shape_cast %40 : vector<8xf32> to vector<8x1xf32>
    %42 = arith.addf %22, %41 : vector<8x1xf32>
    %43 = vector.extract_strided_slice %3 {offsets = [1, 0, 0], sizes = [1, 4, 128], strides = [1, 1, 1]} : vector<2x4x128xf32> to vector<1x4x128xf32>
    %44 = vector.shape_cast %43 : vector<1x4x128xf32> to vector<4x128xf32>
    %cst_20 = arith.constant dense<0.000000e+00> : vector<16x128xf32>
    %45 = tpu.matmul %17, %44, %cst_20 {dimension_numbers = #tpu.dot_dimension_numbers<[1], [0], [0], [1], [0, 0, 1, 1], [], []>} : vector<16x4xf32>, vector<4x128xf32>, vector<16x128xf32> -> vector<16x128xf32>
    %46 = vector.extract_strided_slice %16 {offsets = [1, 0, 0], sizes = [1, 4, 128], strides = [1, 1, 1]} : vector<2x4x128xf32> to vector<1x4x128xf32>
    %47 = vector.shape_cast %46 : vector<1x4x128xf32> to vector<4x128xf32>
    %cst_21 = arith.constant dense<0.000000e+00> : vector<8x128xf32>
    %48 = tpu.matmul %18, %47, %cst_21 {dimension_numbers = #tpu.dot_dimension_numbers<[1], [0], [0], [1], [0, 0, 1, 1], [], []>} : vector<8x4xf32>, vector<4x128xf32>, vector<8x128xf32> -> vector<8x128xf32>
    %cst_22 = arith.constant dense<0.000000e+00> : vector<16xf32>
    %49 = vector.multi_reduction <add>, %45, %cst_22 [1] : vector<16x128xf32> to vector<16xf32>
    %50 = vector.shape_cast %49 : vector<16xf32> to vector<16x1xf32>
    %51 = arith.addf %31, %50 : vector<16x1xf32>
    %52 = arith.mulf %45, %45 : vector<16x128xf32>
    %cst_23 = arith.constant dense<0.000000e+00> : vector<16xf32>
    %53 = vector.multi_reduction <add>, %52, %cst_23 [1] : vector<16x128xf32> to vector<16xf32>
    %54 = vector.shape_cast %53 : vector<16xf32> to vector<16x1xf32>
    %55 = arith.addf %35, %54 : vector<16x1xf32>
    %cst_24 = arith.constant dense<0.000000e+00> : vector<8xf32>
    %56 = vector.multi_reduction <add>, %48, %cst_24 [1] : vector<8x128xf32> to vector<8xf32>
    %57 = vector.shape_cast %56 : vector<8xf32> to vector<8x1xf32>
    %58 = arith.addf %38, %57 : vector<8x1xf32>
    %59 = arith.mulf %48, %48 : vector<8x128xf32>
    %cst_25 = arith.constant dense<0.000000e+00> : vector<8xf32>
    %60 = vector.multi_reduction <add>, %59, %cst_25 [1] : vector<8x128xf32> to vector<8xf32>
    %61 = vector.shape_cast %60 : vector<8xf32> to vector<8x1xf32>
    %62 = arith.addf %42, %61 : vector<8x1xf32>
    %c0_26 = arith.constant 0 : index
    %c0_27 = arith.constant 0 : index
    %63 = vector.load %arg4[%c0_26, %c0_27] : memref<16x1xf32, #tpu.memory_space<vmem>>, vector<16x1xf32>
    %64 = arith.addf %63, %51 : vector<16x1xf32>
    %c0_28 = arith.constant 0 : index
    %c0_29 = arith.constant 0 : index
    %65 = vector.load %arg4[%c0_28, %c0_29] : memref<16x1xf32, #tpu.memory_space<vmem>>, vector<16x1xf32>
    tpu.vector_store %arg4[%c0_28, %c0_29], %64 {strides = array<i32>} : memref<16x1xf32, #tpu.memory_space<vmem>>, vector<16x1xf32>,
    %c0_30 = arith.constant 0 : index
    %c0_31 = arith.constant 0 : index
    %66 = vector.load %arg5[%c0_30, %c0_31] : memref<16x1xf32, #tpu.memory_space<vmem>>, vector<16x1xf32>
    %67 = arith.addf %66, %55 : vector<16x1xf32>
    %c0_32 = arith.constant 0 : index
    %c0_33 = arith.constant 0 : index
    %68 = vector.load %arg5[%c0_32, %c0_33] : memref<16x1xf32, #tpu.memory_space<vmem>>, vector<16x1xf32>
    tpu.vector_store %arg5[%c0_32, %c0_33], %67 {strides = array<i32>} : memref<16x1xf32, #tpu.memory_space<vmem>>, vector<16x1xf32>,
    %c0_34 = arith.constant 0 : index
    %c0_35 = arith.constant 0 : index
    %69 = vector.load %arg6[%c0_34, %c0_35] : memref<8x1xf32, #tpu.memory_space<vmem>>, vector<8x1xf32>
    %70 = arith.addf %69, %58 : vector<8x1xf32>
    %c0_36 = arith.constant 0 : index
    %c0_37 = arith.constant 0 : index
    %71 = vector.load %arg6[%c0_36, %c0_37] : memref<8x1xf32, #tpu.memory_space<vmem>>, vector<8x1xf32>
    tpu.vector_store %arg6[%c0_36, %c0_37], %70 {strides = array<i32>} : memref<8x1xf32, #tpu.memory_space<vmem>>, vector<8x1xf32>,
    %c0_38 = arith.constant 0 : index
    %c0_39 = arith.constant 0 : index
    %72 = vector.load %arg7[%c0_38, %c0_39] : memref<8x1xf32, #tpu.memory_space<vmem>>, vector<8x1xf32>
    %73 = arith.addf %72, %62 : vector<8x1xf32>
    %c0_40 = arith.constant 0 : index
    %c0_41 = arith.constant 0 : index
    %74 = vector.load %arg7[%c0_40, %c0_41] : memref<8x1xf32, #tpu.memory_space<vmem>>, vector<8x1xf32>
    tpu.vector_store %arg7[%c0_40, %c0_41], %73 {strides = array<i32>} : memref<8x1xf32, #tpu.memory_space<vmem>>, vector<8x1xf32>,
    return
  }
  func.func @transform_0(%arg0: i32) -> (i32, i32, i32) {
    %c0_i32 = arith.constant 0 : i32
    %c0_i32_0 = arith.constant 0 : i32
    %c0_i32_1 = arith.constant 0 : i32
    return %arg0, %c0_i32, %c0_i32_0 : i32, i32, i32
  }
  func.func @transform_1(%arg0: i32) -> (i32, i32) {
    %c0_i32 = arith.constant 0 : i32
    %c0_i32_0 = arith.constant 0 : i32
    %c0_i32_1 = arith.constant 0 : i32
    return %c0_i32, %c0_i32_0 : i32, i32
  }
  func.func @transform_2(%arg0: i32) -> (i32, i32) {
    %c0_i32 = arith.constant 0 : i32
    %c0_i32_0 = arith.constant 0 : i32
    %c0_i32_1 = arith.constant 0 : i32
    return %c0_i32, %c0_i32_0 : i32, i32
  }
  func.func @transform_3(%arg0: i32) -> (i32, i32) {
    %c0_i32 = arith.constant 0 : i32
    %c0_i32_0 = arith.constant 0 : i32
    %c0_i32_1 = arith.constant 0 : i32
    return %c0_i32, %c0_i32_0 : i32, i32
  }
  func.func @transform_4(%arg0: i32) -> (i32, i32) {
    %c0_i32 = arith.constant 0 : i32
    %c0_i32_0 = arith.constant 0 : i32
    %c0_i32_1 = arith.constant 0 : i32
    return %c0_i32, %c0_i32_0 : i32, i32
  }
  func.func @transform_5(%arg0: i32) -> (i32, i32) {
    %c0_i32 = arith.constant 0 : i32
    %c0_i32_0 = arith.constant 0 : i32
    %c0_i32_1 = arith.constant 0 : i32
    return %c0_i32, %c0_i32_0 : i32, i32
  }
  func.func @transform_6(%arg0: i32) -> (i32, i32) {
    %c0_i32 = arith.constant 0 : i32
    %c0_i32_0 = arith.constant 0 : i32
    %c0_i32_1 = arith.constant 0 : i32
    return %c0_i32, %c0_i32_0 : i32, i32
  }
}

module attributes {stable_mosaic.version = 11 : i64} {
  func.func @_stage_b_stats_kernel(%arg0: i32, %arg1: memref<2x4x128xf32, #tpu.memory_space<vmem>>, %arg2: memref<4x4xf32, #tpu.memory_space<vmem>>, %arg3: memref<4x4xf32, #tpu.memory_space<vmem>>, %arg4: memref<4x2xf32, #tpu.memory_space<vmem>>, %arg5: memref<4x2xf32, #tpu.memory_space<vmem>>, %arg6: memref<3x8x4xf32, #tpu.memory_space<vmem>>, %arg7: memref<5x8x4xf32, #tpu.memory_space<vmem>>, %arg8: memref<8x1xf32, #tpu.memory_space<vmem>>, %arg9: memref<8x1xf32, #tpu.memory_space<vmem>>, %arg10: memref<8x1xf32, #tpu.memory_space<vmem>>, %arg11: memref<8x1xf32, #tpu.memory_space<vmem>>) attributes {dimension_semantics = [#tpu.dimension_semantics<arbitrary>], iteration_bounds = array<i64: 1>, scalar_prefetch = 0 : i64, scratch_operands = 0 : i64, tpu.core_type = #tpu.core_type<tc>, window_params = [{transform_indices = @transform_0, window_bounds = array<i64: 2, 4, 128>}, {pipeline_mode = #tpu.pipeline_mode<synchronous>, transform_indices = @transform_1, window_bounds = array<i64: 4, 4>}, {pipeline_mode = #tpu.pipeline_mode<synchronous>, transform_indices = @transform_2, window_bounds = array<i64: 4, 4>}, {pipeline_mode = #tpu.pipeline_mode<synchronous>, transform_indices = @transform_3, window_bounds = array<i64: 4, 2>}, {pipeline_mode = #tpu.pipeline_mode<synchronous>, transform_indices = @transform_4, window_bounds = array<i64: 4, 2>}, {pipeline_mode = #tpu.pipeline_mode<synchronous>, transform_indices = @transform_5, window_bounds = array<i64: 3, 8, 4>}, {pipeline_mode = #tpu.pipeline_mode<synchronous>, transform_indices = @transform_6, window_bounds = array<i64: 5, 8, 4>}, {pipeline_mode = #tpu.pipeline_mode<synchronous>, transform_indices = @transform_7, window_bounds = array<i64: 8, 1>}, {pipeline_mode = #tpu.pipeline_mode<synchronous>, transform_indices = @transform_8, window_bounds = array<i64: 8, 1>}, {pipeline_mode = #tpu.pipeline_mode<synchronous>, transform_indices = @transform_9, window_bounds = array<i64: 8, 1>}, {pipeline_mode = #tpu.pipeline_mode<synchronous>, transform_indices = @transform_10, window_bounds = array<i64: 8, 1>}]} {
    %c0_i32 = arith.constant 0 : i32
    %0 = arith.cmpi eq, %arg0, %c0_i32 : i32
    %1 = arith.extui %0 : i1 to i32
    %c0_i32_0 = arith.constant 0 : i32
    %2 = arith.cmpi ne, %1, %c0_i32_0 : i32
    scf.if %2 {
      %cst_100 = arith.constant 0.000000e+00 : f32
      %214 = vector.broadcast %cst_100 : f32 to vector<8x1xf32>
      %c0_101 = arith.constant 0 : index
      %c0_102 = arith.constant 0 : index
      %215 = vector.load %arg8[%c0_101, %c0_102] : memref<8x1xf32, #tpu.memory_space<vmem>>, vector<8x1xf32>
      tpu.vector_store %arg8[%c0_101, %c0_102], %214 {strides = array<i32>} : memref<8x1xf32, #tpu.memory_space<vmem>>, vector<8x1xf32>,
      %cst_103 = arith.constant 0.000000e+00 : f32
      %216 = vector.broadcast %cst_103 : f32 to vector<8x1xf32>
      %c0_104 = arith.constant 0 : index
      %c0_105 = arith.constant 0 : index
      %217 = vector.load %arg9[%c0_104, %c0_105] : memref<8x1xf32, #tpu.memory_space<vmem>>, vector<8x1xf32>
      tpu.vector_store %arg9[%c0_104, %c0_105], %216 {strides = array<i32>} : memref<8x1xf32, #tpu.memory_space<vmem>>, vector<8x1xf32>,
      %cst_106 = arith.constant 0.000000e+00 : f32
      %218 = vector.broadcast %cst_106 : f32 to vector<8x1xf32>
      %c0_107 = arith.constant 0 : index
      %c0_108 = arith.constant 0 : index
      %219 = vector.load %arg10[%c0_107, %c0_108] : memref<8x1xf32, #tpu.memory_space<vmem>>, vector<8x1xf32>
      tpu.vector_store %arg10[%c0_107, %c0_108], %218 {strides = array<i32>} : memref<8x1xf32, #tpu.memory_space<vmem>>, vector<8x1xf32>,
      %cst_109 = arith.constant 0.000000e+00 : f32
      %220 = vector.broadcast %cst_109 : f32 to vector<8x1xf32>
      %c0_110 = arith.constant 0 : index
      %c0_111 = arith.constant 0 : index
      %221 = vector.load %arg11[%c0_110, %c0_111] : memref<8x1xf32, #tpu.memory_space<vmem>>, vector<8x1xf32>
      tpu.vector_store %arg11[%c0_110, %c0_111], %220 {strides = array<i32>} : memref<8x1xf32, #tpu.memory_space<vmem>>, vector<8x1xf32>,
    } else {
    }
    %c0 = arith.constant 0 : index
    %c0_1 = arith.constant 0 : index
    %c0_2 = arith.constant 0 : index
    %3 = vector.load %arg1[%c0, %c0_1, %c0_2] : memref<2x4x128xf32, #tpu.memory_space<vmem>>, vector<2x4x128xf32>
    %c0_3 = arith.constant 0 : index
    %c0_4 = arith.constant 0 : index
    %4 = vector.load %arg2[%c0_3, %c0_4] : memref<4x4xf32, #tpu.memory_space<vmem>>, vector<4x4xf32>
    %c0_5 = arith.constant 0 : index
    %c0_6 = arith.constant 0 : index
    %5 = vector.load %arg3[%c0_5, %c0_6] : memref<4x4xf32, #tpu.memory_space<vmem>>, vector<4x4xf32>
    %c0_7 = arith.constant 0 : index
    %c0_8 = arith.constant 0 : index
    %c0_9 = arith.constant 0 : index
    %6 = vector.load %arg6[%c0_7, %c0_8, %c0_9] : memref<3x8x4xf32, #tpu.memory_space<vmem>>, vector<3x8x4xf32>
    %c0_10 = arith.constant 0 : index
    %c0_11 = arith.constant 0 : index
    %c0_12 = arith.constant 0 : index
    %7 = vector.load %arg7[%c0_10, %c0_11, %c0_12] : memref<5x8x4xf32, #tpu.memory_space<vmem>>, vector<5x8x4xf32>
    %c0_13 = arith.constant 0 : index
    %c0_14 = arith.constant 0 : index
    %8 = vector.load %arg4[%c0_13, %c0_14] : memref<4x2xf32, #tpu.memory_space<vmem>>, vector<4x2xf32>
    %9 = vector.extract_strided_slice %8 {offsets = [0, 0], sizes = [4, 1], strides = [1, 1]} : vector<4x2xf32> to vector<4x1xf32>
    %10 = vector.extract_strided_slice %8 {offsets = [0, 1], sizes = [4, 1], strides = [1, 1]} : vector<4x2xf32> to vector<4x1xf32>
    %c0_15 = arith.constant 0 : index
    %c0_16 = arith.constant 0 : index
    %11 = vector.load %arg5[%c0_15, %c0_16] : memref<4x2xf32, #tpu.memory_space<vmem>>, vector<4x2xf32>
    %12 = vector.extract_strided_slice %11 {offsets = [0, 0], sizes = [4, 1], strides = [1, 1]} : vector<4x2xf32> to vector<4x1xf32>
    %13 = vector.extract_strided_slice %11 {offsets = [0, 1], sizes = [4, 1], strides = [1, 1]} : vector<4x2xf32> to vector<4x1xf32>
    %cst = arith.constant 0.000000e+00 : f32
    %14 = vector.broadcast %cst : f32 to vector<8x1xf32>
    %cst_17 = arith.constant 0.000000e+00 : f32
    %15 = vector.broadcast %cst_17 : f32 to vector<8x1xf32>
    %cst_18 = arith.constant 0.000000e+00 : f32
    %16 = vector.broadcast %cst_18 : f32 to vector<8x1xf32>
    %cst_19 = arith.constant 0.000000e+00 : f32
    %17 = vector.broadcast %cst_19 : f32 to vector<8x1xf32>
    %18 = vector.extract_strided_slice %3 {offsets = [0, 0, 0], sizes = [1, 4, 128], strides = [1, 1, 1]} : vector<2x4x128xf32> to vector<1x4x128xf32>
    %19 = vector.shape_cast %18 : vector<1x4x128xf32> to vector<4x128xf32>
    %cst_20 = arith.constant dense<0.000000e+00> : vector<4x128xf32>
    %20 = tpu.matmul %4, %19, %cst_20 {dimension_numbers = #tpu.dot_dimension_numbers<[1], [0], [0], [1], [0, 0, 1, 1], [], []>} : vector<4x4xf32>, vector<4x128xf32>, vector<4x128xf32> -> vector<4x128xf32>
    %21 = vector.broadcast %9 : vector<4x1xf32> to vector<4x128xf32>
    %22 = arith.mulf %20, %21 : vector<4x128xf32>
    %23 = vector.broadcast %10 : vector<4x1xf32> to vector<4x128xf32>
    %24 = arith.addf %22, %23 : vector<4x128xf32>
    %cst_21 = arith.constant 0.000000e+00 : f32
    %25 = vector.broadcast %cst_21 : f32 to vector<4x128xf32>
    %26 = arith.maximumf %24, %25 : vector<4x128xf32>
    %27 = tpu.iota {dimensions = array<i32: 1>} : vector<4x128xi32>
    %c1_i32 = arith.constant 1 : i32
    %28 = tpu.dynamic_rotate %26 by %c1_i32 dim 1 : vector<4x128xf32>, i32 -> vector<4x128xf32>
    %c1_i32_22 = arith.constant 1 : i32
    %29 = vector.broadcast %c1_i32_22 : i32 to vector<4x128xi32>
    %30 = arith.cmpi sge, %27, %29 : vector<4x128xi32>
    %cst_23 = arith.constant 0.000000e+00 : f32
    %31 = vector.broadcast %cst_23 : f32 to vector<4x128xf32>
    %32 = arith.select %30, %28, %31 : vector<4x128xi1>, vector<4x128xf32>
    %33 = vector.extract_strided_slice %6 {offsets = [0, 0, 0], sizes = [1, 8, 4], strides = [1, 1, 1]} : vector<3x8x4xf32> to vector<1x8x4xf32>
    %34 = vector.shape_cast %33 : vector<1x8x4xf32> to vector<8x4xf32>
    %cst_24 = arith.constant dense<0.000000e+00> : vector<8x128xf32>
    %35 = tpu.matmul %34, %32, %cst_24 {dimension_numbers = #tpu.dot_dimension_numbers<[1], [0], [0], [1], [0, 0, 1, 1], [], []>} : vector<8x4xf32>, vector<4x128xf32>, vector<8x128xf32> -> vector<8x128xf32>
    %36 = vector.extract_strided_slice %6 {offsets = [1, 0, 0], sizes = [1, 8, 4], strides = [1, 1, 1]} : vector<3x8x4xf32> to vector<1x8x4xf32>
    %37 = vector.shape_cast %36 : vector<1x8x4xf32> to vector<8x4xf32>
    %cst_25 = arith.constant dense<0.000000e+00> : vector<8x128xf32>
    %38 = tpu.matmul %37, %26, %cst_25 {dimension_numbers = #tpu.dot_dimension_numbers<[1], [0], [0], [1], [0, 0, 1, 1], [], []>} : vector<8x4xf32>, vector<4x128xf32>, vector<8x128xf32> -> vector<8x128xf32>
    %39 = arith.addf %35, %38 : vector<8x128xf32>
    %c127_i32 = arith.constant 127 : i32
    %40 = tpu.dynamic_rotate %26 by %c127_i32 dim 1 : vector<4x128xf32>, i32 -> vector<4x128xf32>
    %c127_i32_26 = arith.constant 127 : i32
    %41 = vector.broadcast %c127_i32_26 : i32 to vector<4x128xi32>
    %42 = arith.cmpi slt, %27, %41 : vector<4x128xi32>
    %cst_27 = arith.constant 0.000000e+00 : f32
    %43 = vector.broadcast %cst_27 : f32 to vector<4x128xf32>
    %44 = arith.select %42, %40, %43 : vector<4x128xi1>, vector<4x128xf32>
    %45 = vector.extract_strided_slice %6 {offsets = [2, 0, 0], sizes = [1, 8, 4], strides = [1, 1, 1]} : vector<3x8x4xf32> to vector<1x8x4xf32>
    %46 = vector.shape_cast %45 : vector<1x8x4xf32> to vector<8x4xf32>
    %cst_28 = arith.constant dense<0.000000e+00> : vector<8x128xf32>
    %47 = tpu.matmul %46, %44, %cst_28 {dimension_numbers = #tpu.dot_dimension_numbers<[1], [0], [0], [1], [0, 0, 1, 1], [], []>} : vector<8x4xf32>, vector<4x128xf32>, vector<8x128xf32> -> vector<8x128xf32>
    %48 = arith.addf %39, %47 : vector<8x128xf32>
    %cst_29 = arith.constant dense<0.000000e+00> : vector<8xf32>
    %49 = vector.multi_reduction <add>, %48, %cst_29 [1] : vector<8x128xf32> to vector<8xf32>
    %50 = vector.shape_cast %49 : vector<8xf32> to vector<8x1xf32>
    %51 = arith.addf %14, %50 : vector<8x1xf32>
    %52 = arith.mulf %48, %48 : vector<8x128xf32>
    %cst_30 = arith.constant dense<0.000000e+00> : vector<8xf32>
    %53 = vector.multi_reduction <add>, %52, %cst_30 [1] : vector<8x128xf32> to vector<8xf32>
    %54 = vector.shape_cast %53 : vector<8xf32> to vector<8x1xf32>
    %55 = arith.addf %15, %54 : vector<8x1xf32>
    %cst_31 = arith.constant dense<0.000000e+00> : vector<4x128xf32>
    %56 = tpu.matmul %5, %19, %cst_31 {dimension_numbers = #tpu.dot_dimension_numbers<[1], [0], [0], [1], [0, 0, 1, 1], [], []>} : vector<4x4xf32>, vector<4x128xf32>, vector<4x128xf32> -> vector<4x128xf32>
    %57 = vector.broadcast %12 : vector<4x1xf32> to vector<4x128xf32>
    %58 = arith.mulf %56, %57 : vector<4x128xf32>
    %59 = vector.broadcast %13 : vector<4x1xf32> to vector<4x128xf32>
    %60 = arith.addf %58, %59 : vector<4x128xf32>
    %cst_32 = arith.constant 0.000000e+00 : f32
    %61 = vector.broadcast %cst_32 : f32 to vector<4x128xf32>
    %62 = arith.maximumf %60, %61 : vector<4x128xf32>
    %63 = tpu.iota {dimensions = array<i32: 1>} : vector<4x128xi32>
    %c2_i32 = arith.constant 2 : i32
    %64 = tpu.dynamic_rotate %62 by %c2_i32 dim 1 : vector<4x128xf32>, i32 -> vector<4x128xf32>
    %c2_i32_33 = arith.constant 2 : i32
    %65 = vector.broadcast %c2_i32_33 : i32 to vector<4x128xi32>
    %66 = arith.cmpi sge, %63, %65 : vector<4x128xi32>
    %cst_34 = arith.constant 0.000000e+00 : f32
    %67 = vector.broadcast %cst_34 : f32 to vector<4x128xf32>
    %68 = arith.select %66, %64, %67 : vector<4x128xi1>, vector<4x128xf32>
    %69 = vector.extract_strided_slice %7 {offsets = [0, 0, 0], sizes = [1, 8, 4], strides = [1, 1, 1]} : vector<5x8x4xf32> to vector<1x8x4xf32>
    %70 = vector.shape_cast %69 : vector<1x8x4xf32> to vector<8x4xf32>
    %cst_35 = arith.constant dense<0.000000e+00> : vector<8x128xf32>
    %71 = tpu.matmul %70, %68, %cst_35 {dimension_numbers = #tpu.dot_dimension_numbers<[1], [0], [0], [1], [0, 0, 1, 1], [], []>} : vector<8x4xf32>, vector<4x128xf32>, vector<8x128xf32> -> vector<8x128xf32>
    %c1_i32_36 = arith.constant 1 : i32
    %72 = tpu.dynamic_rotate %62 by %c1_i32_36 dim 1 : vector<4x128xf32>, i32 -> vector<4x128xf32>
    %c1_i32_37 = arith.constant 1 : i32
    %73 = vector.broadcast %c1_i32_37 : i32 to vector<4x128xi32>
    %74 = arith.cmpi sge, %63, %73 : vector<4x128xi32>
    %cst_38 = arith.constant 0.000000e+00 : f32
    %75 = vector.broadcast %cst_38 : f32 to vector<4x128xf32>
    %76 = arith.select %74, %72, %75 : vector<4x128xi1>, vector<4x128xf32>
    %77 = vector.extract_strided_slice %7 {offsets = [1, 0, 0], sizes = [1, 8, 4], strides = [1, 1, 1]} : vector<5x8x4xf32> to vector<1x8x4xf32>
    %78 = vector.shape_cast %77 : vector<1x8x4xf32> to vector<8x4xf32>
    %cst_39 = arith.constant dense<0.000000e+00> : vector<8x128xf32>
    %79 = tpu.matmul %78, %76, %cst_39 {dimension_numbers = #tpu.dot_dimension_numbers<[1], [0], [0], [1], [0, 0, 1, 1], [], []>} : vector<8x4xf32>, vector<4x128xf32>, vector<8x128xf32> -> vector<8x128xf32>
    %80 = arith.addf %71, %79 : vector<8x128xf32>
    %81 = vector.extract_strided_slice %7 {offsets = [2, 0, 0], sizes = [1, 8, 4], strides = [1, 1, 1]} : vector<5x8x4xf32> to vector<1x8x4xf32>
    %82 = vector.shape_cast %81 : vector<1x8x4xf32> to vector<8x4xf32>
    %cst_40 = arith.constant dense<0.000000e+00> : vector<8x128xf32>
    %83 = tpu.matmul %82, %62, %cst_40 {dimension_numbers = #tpu.dot_dimension_numbers<[1], [0], [0], [1], [0, 0, 1, 1], [], []>} : vector<8x4xf32>, vector<4x128xf32>, vector<8x128xf32> -> vector<8x128xf32>
    %84 = arith.addf %80, %83 : vector<8x128xf32>
    %c127_i32_41 = arith.constant 127 : i32
    %85 = tpu.dynamic_rotate %62 by %c127_i32_41 dim 1 : vector<4x128xf32>, i32 -> vector<4x128xf32>
    %c127_i32_42 = arith.constant 127 : i32
    %86 = vector.broadcast %c127_i32_42 : i32 to vector<4x128xi32>
    %87 = arith.cmpi slt, %63, %86 : vector<4x128xi32>
    %cst_43 = arith.constant 0.000000e+00 : f32
    %88 = vector.broadcast %cst_43 : f32 to vector<4x128xf32>
    %89 = arith.select %87, %85, %88 : vector<4x128xi1>, vector<4x128xf32>
    %90 = vector.extract_strided_slice %7 {offsets = [3, 0, 0], sizes = [1, 8, 4], strides = [1, 1, 1]} : vector<5x8x4xf32> to vector<1x8x4xf32>
    %91 = vector.shape_cast %90 : vector<1x8x4xf32> to vector<8x4xf32>
    %cst_44 = arith.constant dense<0.000000e+00> : vector<8x128xf32>
    %92 = tpu.matmul %91, %89, %cst_44 {dimension_numbers = #tpu.dot_dimension_numbers<[1], [0], [0], [1], [0, 0, 1, 1], [], []>} : vector<8x4xf32>, vector<4x128xf32>, vector<8x128xf32> -> vector<8x128xf32>
    %93 = arith.addf %84, %92 : vector<8x128xf32>
    %c126_i32 = arith.constant 126 : i32
    %94 = tpu.dynamic_rotate %62 by %c126_i32 dim 1 : vector<4x128xf32>, i32 -> vector<4x128xf32>
    %c126_i32_45 = arith.constant 126 : i32
    %95 = vector.broadcast %c126_i32_45 : i32 to vector<4x128xi32>
    %96 = arith.cmpi slt, %63, %95 : vector<4x128xi32>
    %cst_46 = arith.constant 0.000000e+00 : f32
    %97 = vector.broadcast %cst_46 : f32 to vector<4x128xf32>
    %98 = arith.select %96, %94, %97 : vector<4x128xi1>, vector<4x128xf32>
    %99 = vector.extract_strided_slice %7 {offsets = [4, 0, 0], sizes = [1, 8, 4], strides = [1, 1, 1]} : vector<5x8x4xf32> to vector<1x8x4xf32>
    %100 = vector.shape_cast %99 : vector<1x8x4xf32> to vector<8x4xf32>
    %cst_47 = arith.constant dense<0.000000e+00> : vector<8x128xf32>
    %101 = tpu.matmul %100, %98, %cst_47 {dimension_numbers = #tpu.dot_dimension_numbers<[1], [0], [0], [1], [0, 0, 1, 1], [], []>} : vector<8x4xf32>, vector<4x128xf32>, vector<8x128xf32> -> vector<8x128xf32>
    %102 = arith.addf %93, %101 : vector<8x128xf32>
    %cst_48 = arith.constant dense<0.000000e+00> : vector<8xf32>
    %103 = vector.multi_reduction <add>, %102, %cst_48 [1] : vector<8x128xf32> to vector<8xf32>
    %104 = vector.shape_cast %103 : vector<8xf32> to vector<8x1xf32>
    %105 = arith.addf %16, %104 : vector<8x1xf32>
    %106 = arith.mulf %102, %102 : vector<8x128xf32>
    %cst_49 = arith.constant dense<0.000000e+00> : vector<8xf32>
    %107 = vector.multi_reduction <add>, %106, %cst_49 [1] : vector<8x128xf32> to vector<8xf32>
    %108 = vector.shape_cast %107 : vector<8xf32> to vector<8x1xf32>
    %109 = arith.addf %17, %108 : vector<8x1xf32>
    %110 = vector.extract_strided_slice %3 {offsets = [1, 0, 0], sizes = [1, 4, 128], strides = [1, 1, 1]} : vector<2x4x128xf32> to vector<1x4x128xf32>
    %111 = vector.shape_cast %110 : vector<1x4x128xf32> to vector<4x128xf32>
    %cst_50 = arith.constant dense<0.000000e+00> : vector<4x128xf32>
    %112 = tpu.matmul %4, %111, %cst_50 {dimension_numbers = #tpu.dot_dimension_numbers<[1], [0], [0], [1], [0, 0, 1, 1], [], []>} : vector<4x4xf32>, vector<4x128xf32>, vector<4x128xf32> -> vector<4x128xf32>
    %113 = vector.broadcast %9 : vector<4x1xf32> to vector<4x128xf32>
    %114 = arith.mulf %112, %113 : vector<4x128xf32>
    %115 = vector.broadcast %10 : vector<4x1xf32> to vector<4x128xf32>
    %116 = arith.addf %114, %115 : vector<4x128xf32>
    %cst_51 = arith.constant 0.000000e+00 : f32
    %117 = vector.broadcast %cst_51 : f32 to vector<4x128xf32>
    %118 = arith.maximumf %116, %117 : vector<4x128xf32>
    %119 = tpu.iota {dimensions = array<i32: 1>} : vector<4x128xi32>
    %c1_i32_52 = arith.constant 1 : i32
    %120 = tpu.dynamic_rotate %118 by %c1_i32_52 dim 1 : vector<4x128xf32>, i32 -> vector<4x128xf32>
    %c1_i32_53 = arith.constant 1 : i32
    %121 = vector.broadcast %c1_i32_53 : i32 to vector<4x128xi32>
    %122 = arith.cmpi sge, %119, %121 : vector<4x128xi32>
    %cst_54 = arith.constant 0.000000e+00 : f32
    %123 = vector.broadcast %cst_54 : f32 to vector<4x128xf32>
    %124 = arith.select %122, %120, %123 : vector<4x128xi1>, vector<4x128xf32>
    %125 = vector.extract_strided_slice %6 {offsets = [0, 0, 0], sizes = [1, 8, 4], strides = [1, 1, 1]} : vector<3x8x4xf32> to vector<1x8x4xf32>
    %126 = vector.shape_cast %125 : vector<1x8x4xf32> to vector<8x4xf32>
    %cst_55 = arith.constant dense<0.000000e+00> : vector<8x128xf32>
    %127 = tpu.matmul %126, %124, %cst_55 {dimension_numbers = #tpu.dot_dimension_numbers<[1], [0], [0], [1], [0, 0, 1, 1], [], []>} : vector<8x4xf32>, vector<4x128xf32>, vector<8x128xf32> -> vector<8x128xf32>
    %128 = vector.extract_strided_slice %6 {offsets = [1, 0, 0], sizes = [1, 8, 4], strides = [1, 1, 1]} : vector<3x8x4xf32> to vector<1x8x4xf32>
    %129 = vector.shape_cast %128 : vector<1x8x4xf32> to vector<8x4xf32>
    %cst_56 = arith.constant dense<0.000000e+00> : vector<8x128xf32>
    %130 = tpu.matmul %129, %118, %cst_56 {dimension_numbers = #tpu.dot_dimension_numbers<[1], [0], [0], [1], [0, 0, 1, 1], [], []>} : vector<8x4xf32>, vector<4x128xf32>, vector<8x128xf32> -> vector<8x128xf32>
    %131 = arith.addf %127, %130 : vector<8x128xf32>
    %c127_i32_57 = arith.constant 127 : i32
    %132 = tpu.dynamic_rotate %118 by %c127_i32_57 dim 1 : vector<4x128xf32>, i32 -> vector<4x128xf32>
    %c127_i32_58 = arith.constant 127 : i32
    %133 = vector.broadcast %c127_i32_58 : i32 to vector<4x128xi32>
    %134 = arith.cmpi slt, %119, %133 : vector<4x128xi32>
    %cst_59 = arith.constant 0.000000e+00 : f32
    %135 = vector.broadcast %cst_59 : f32 to vector<4x128xf32>
    %136 = arith.select %134, %132, %135 : vector<4x128xi1>, vector<4x128xf32>
    %137 = vector.extract_strided_slice %6 {offsets = [2, 0, 0], sizes = [1, 8, 4], strides = [1, 1, 1]} : vector<3x8x4xf32> to vector<1x8x4xf32>
    %138 = vector.shape_cast %137 : vector<1x8x4xf32> to vector<8x4xf32>
    %cst_60 = arith.constant dense<0.000000e+00> : vector<8x128xf32>
    %139 = tpu.matmul %138, %136, %cst_60 {dimension_numbers = #tpu.dot_dimension_numbers<[1], [0], [0], [1], [0, 0, 1, 1], [], []>} : vector<8x4xf32>, vector<4x128xf32>, vector<8x128xf32> -> vector<8x128xf32>
    %140 = arith.addf %131, %139 : vector<8x128xf32>
    %cst_61 = arith.constant dense<0.000000e+00> : vector<8xf32>
    %141 = vector.multi_reduction <add>, %140, %cst_61 [1] : vector<8x128xf32> to vector<8xf32>
    %142 = vector.shape_cast %141 : vector<8xf32> to vector<8x1xf32>
    %143 = arith.addf %51, %142 : vector<8x1xf32>
    %144 = arith.mulf %140, %140 : vector<8x128xf32>
    %cst_62 = arith.constant dense<0.000000e+00> : vector<8xf32>
    %145 = vector.multi_reduction <add>, %144, %cst_62 [1] : vector<8x128xf32> to vector<8xf32>
    %146 = vector.shape_cast %145 : vector<8xf32> to vector<8x1xf32>
    %147 = arith.addf %55, %146 : vector<8x1xf32>
    %cst_63 = arith.constant dense<0.000000e+00> : vector<4x128xf32>
    %148 = tpu.matmul %5, %111, %cst_63 {dimension_numbers = #tpu.dot_dimension_numbers<[1], [0], [0], [1], [0, 0, 1, 1], [], []>} : vector<4x4xf32>, vector<4x128xf32>, vector<4x128xf32> -> vector<4x128xf32>
    %149 = vector.broadcast %12 : vector<4x1xf32> to vector<4x128xf32>
    %150 = arith.mulf %148, %149 : vector<4x128xf32>
    %151 = vector.broadcast %13 : vector<4x1xf32> to vector<4x128xf32>
    %152 = arith.addf %150, %151 : vector<4x128xf32>
    %cst_64 = arith.constant 0.000000e+00 : f32
    %153 = vector.broadcast %cst_64 : f32 to vector<4x128xf32>
    %154 = arith.maximumf %152, %153 : vector<4x128xf32>
    %155 = tpu.iota {dimensions = array<i32: 1>} : vector<4x128xi32>
    %c2_i32_65 = arith.constant 2 : i32
    %156 = tpu.dynamic_rotate %154 by %c2_i32_65 dim 1 : vector<4x128xf32>, i32 -> vector<4x128xf32>
    %c2_i32_66 = arith.constant 2 : i32
    %157 = vector.broadcast %c2_i32_66 : i32 to vector<4x128xi32>
    %158 = arith.cmpi sge, %155, %157 : vector<4x128xi32>
    %cst_67 = arith.constant 0.000000e+00 : f32
    %159 = vector.broadcast %cst_67 : f32 to vector<4x128xf32>
    %160 = arith.select %158, %156, %159 : vector<4x128xi1>, vector<4x128xf32>
    %161 = vector.extract_strided_slice %7 {offsets = [0, 0, 0], sizes = [1, 8, 4], strides = [1, 1, 1]} : vector<5x8x4xf32> to vector<1x8x4xf32>
    %162 = vector.shape_cast %161 : vector<1x8x4xf32> to vector<8x4xf32>
    %cst_68 = arith.constant dense<0.000000e+00> : vector<8x128xf32>
    %163 = tpu.matmul %162, %160, %cst_68 {dimension_numbers = #tpu.dot_dimension_numbers<[1], [0], [0], [1], [0, 0, 1, 1], [], []>} : vector<8x4xf32>, vector<4x128xf32>, vector<8x128xf32> -> vector<8x128xf32>
    %c1_i32_69 = arith.constant 1 : i32
    %164 = tpu.dynamic_rotate %154 by %c1_i32_69 dim 1 : vector<4x128xf32>, i32 -> vector<4x128xf32>
    %c1_i32_70 = arith.constant 1 : i32
    %165 = vector.broadcast %c1_i32_70 : i32 to vector<4x128xi32>
    %166 = arith.cmpi sge, %155, %165 : vector<4x128xi32>
    %cst_71 = arith.constant 0.000000e+00 : f32
    %167 = vector.broadcast %cst_71 : f32 to vector<4x128xf32>
    %168 = arith.select %166, %164, %167 : vector<4x128xi1>, vector<4x128xf32>
    %169 = vector.extract_strided_slice %7 {offsets = [1, 0, 0], sizes = [1, 8, 4], strides = [1, 1, 1]} : vector<5x8x4xf32> to vector<1x8x4xf32>
    %170 = vector.shape_cast %169 : vector<1x8x4xf32> to vector<8x4xf32>
    %cst_72 = arith.constant dense<0.000000e+00> : vector<8x128xf32>
    %171 = tpu.matmul %170, %168, %cst_72 {dimension_numbers = #tpu.dot_dimension_numbers<[1], [0], [0], [1], [0, 0, 1, 1], [], []>} : vector<8x4xf32>, vector<4x128xf32>, vector<8x128xf32> -> vector<8x128xf32>
    %172 = arith.addf %163, %171 : vector<8x128xf32>
    %173 = vector.extract_strided_slice %7 {offsets = [2, 0, 0], sizes = [1, 8, 4], strides = [1, 1, 1]} : vector<5x8x4xf32> to vector<1x8x4xf32>
    %174 = vector.shape_cast %173 : vector<1x8x4xf32> to vector<8x4xf32>
    %cst_73 = arith.constant dense<0.000000e+00> : vector<8x128xf32>
    %175 = tpu.matmul %174, %154, %cst_73 {dimension_numbers = #tpu.dot_dimension_numbers<[1], [0], [0], [1], [0, 0, 1, 1], [], []>} : vector<8x4xf32>, vector<4x128xf32>, vector<8x128xf32> -> vector<8x128xf32>
    %176 = arith.addf %172, %175 : vector<8x128xf32>
    %c127_i32_74 = arith.constant 127 : i32
    %177 = tpu.dynamic_rotate %154 by %c127_i32_74 dim 1 : vector<4x128xf32>, i32 -> vector<4x128xf32>
    %c127_i32_75 = arith.constant 127 : i32
    %178 = vector.broadcast %c127_i32_75 : i32 to vector<4x128xi32>
    %179 = arith.cmpi slt, %155, %178 : vector<4x128xi32>
    %cst_76 = arith.constant 0.000000e+00 : f32
    %180 = vector.broadcast %cst_76 : f32 to vector<4x128xf32>
    %181 = arith.select %179, %177, %180 : vector<4x128xi1>, vector<4x128xf32>
    %182 = vector.extract_strided_slice %7 {offsets = [3, 0, 0], sizes = [1, 8, 4], strides = [1, 1, 1]} : vector<5x8x4xf32> to vector<1x8x4xf32>
    %183 = vector.shape_cast %182 : vector<1x8x4xf32> to vector<8x4xf32>
    %cst_77 = arith.constant dense<0.000000e+00> : vector<8x128xf32>
    %184 = tpu.matmul %183, %181, %cst_77 {dimension_numbers = #tpu.dot_dimension_numbers<[1], [0], [0], [1], [0, 0, 1, 1], [], []>} : vector<8x4xf32>, vector<4x128xf32>, vector<8x128xf32> -> vector<8x128xf32>
    %185 = arith.addf %176, %184 : vector<8x128xf32>
    %c126_i32_78 = arith.constant 126 : i32
    %186 = tpu.dynamic_rotate %154 by %c126_i32_78 dim 1 : vector<4x128xf32>, i32 -> vector<4x128xf32>
    %c126_i32_79 = arith.constant 126 : i32
    %187 = vector.broadcast %c126_i32_79 : i32 to vector<4x128xi32>
    %188 = arith.cmpi slt, %155, %187 : vector<4x128xi32>
    %cst_80 = arith.constant 0.000000e+00 : f32
    %189 = vector.broadcast %cst_80 : f32 to vector<4x128xf32>
    %190 = arith.select %188, %186, %189 : vector<4x128xi1>, vector<4x128xf32>
    %191 = vector.extract_strided_slice %7 {offsets = [4, 0, 0], sizes = [1, 8, 4], strides = [1, 1, 1]} : vector<5x8x4xf32> to vector<1x8x4xf32>
    %192 = vector.shape_cast %191 : vector<1x8x4xf32> to vector<8x4xf32>
    %cst_81 = arith.constant dense<0.000000e+00> : vector<8x128xf32>
    %193 = tpu.matmul %192, %190, %cst_81 {dimension_numbers = #tpu.dot_dimension_numbers<[1], [0], [0], [1], [0, 0, 1, 1], [], []>} : vector<8x4xf32>, vector<4x128xf32>, vector<8x128xf32> -> vector<8x128xf32>
    %194 = arith.addf %185, %193 : vector<8x128xf32>
    %cst_82 = arith.constant dense<0.000000e+00> : vector<8xf32>
    %195 = vector.multi_reduction <add>, %194, %cst_82 [1] : vector<8x128xf32> to vector<8xf32>
    %196 = vector.shape_cast %195 : vector<8xf32> to vector<8x1xf32>
    %197 = arith.addf %105, %196 : vector<8x1xf32>
    %198 = arith.mulf %194, %194 : vector<8x128xf32>
    %cst_83 = arith.constant dense<0.000000e+00> : vector<8xf32>
    %199 = vector.multi_reduction <add>, %198, %cst_83 [1] : vector<8x128xf32> to vector<8xf32>
    %200 = vector.shape_cast %199 : vector<8xf32> to vector<8x1xf32>
    %201 = arith.addf %109, %200 : vector<8x1xf32>
    %c0_84 = arith.constant 0 : index
    %c0_85 = arith.constant 0 : index
    %202 = vector.load %arg8[%c0_84, %c0_85] : memref<8x1xf32, #tpu.memory_space<vmem>>, vector<8x1xf32>
    %203 = arith.addf %202, %143 : vector<8x1xf32>
    %c0_86 = arith.constant 0 : index
    %c0_87 = arith.constant 0 : index
    %204 = vector.load %arg8[%c0_86, %c0_87] : memref<8x1xf32, #tpu.memory_space<vmem>>, vector<8x1xf32>
    tpu.vector_store %arg8[%c0_86, %c0_87], %203 {strides = array<i32>} : memref<8x1xf32, #tpu.memory_space<vmem>>, vector<8x1xf32>,
    %c0_88 = arith.constant 0 : index
    %c0_89 = arith.constant 0 : index
    %205 = vector.load %arg9[%c0_88, %c0_89] : memref<8x1xf32, #tpu.memory_space<vmem>>, vector<8x1xf32>
    %206 = arith.addf %205, %147 : vector<8x1xf32>
    %c0_90 = arith.constant 0 : index
    %c0_91 = arith.constant 0 : index
    %207 = vector.load %arg9[%c0_90, %c0_91] : memref<8x1xf32, #tpu.memory_space<vmem>>, vector<8x1xf32>
    tpu.vector_store %arg9[%c0_90, %c0_91], %206 {strides = array<i32>} : memref<8x1xf32, #tpu.memory_space<vmem>>, vector<8x1xf32>,
    %c0_92 = arith.constant 0 : index
    %c0_93 = arith.constant 0 : index
    %208 = vector.load %arg10[%c0_92, %c0_93] : memref<8x1xf32, #tpu.memory_space<vmem>>, vector<8x1xf32>
    %209 = arith.addf %208, %197 : vector<8x1xf32>
    %c0_94 = arith.constant 0 : index
    %c0_95 = arith.constant 0 : index
    %210 = vector.load %arg10[%c0_94, %c0_95] : memref<8x1xf32, #tpu.memory_space<vmem>>, vector<8x1xf32>
    tpu.vector_store %arg10[%c0_94, %c0_95], %209 {strides = array<i32>} : memref<8x1xf32, #tpu.memory_space<vmem>>, vector<8x1xf32>,
    %c0_96 = arith.constant 0 : index
    %c0_97 = arith.constant 0 : index
    %211 = vector.load %arg11[%c0_96, %c0_97] : memref<8x1xf32, #tpu.memory_space<vmem>>, vector<8x1xf32>
    %212 = arith.addf %211, %201 : vector<8x1xf32>
    %c0_98 = arith.constant 0 : index
    %c0_99 = arith.constant 0 : index
    %213 = vector.load %arg11[%c0_98, %c0_99] : memref<8x1xf32, #tpu.memory_space<vmem>>, vector<8x1xf32>
    tpu.vector_store %arg11[%c0_98, %c0_99], %212 {strides = array<i32>} : memref<8x1xf32, #tpu.memory_space<vmem>>, vector<8x1xf32>,
    return
  }
  func.func @transform_0(%arg0: i32) -> (i32, i32, i32) {
    %c0_i32 = arith.constant 0 : i32
    %c0_i32_0 = arith.constant 0 : i32
    %c0_i32_1 = arith.constant 0 : i32
    return %arg0, %c0_i32, %c0_i32_0 : i32, i32, i32
  }
  func.func @transform_1(%arg0: i32) -> (i32, i32) {
    %c0_i32 = arith.constant 0 : i32
    %c0_i32_0 = arith.constant 0 : i32
    %c0_i32_1 = arith.constant 0 : i32
    return %c0_i32, %c0_i32_0 : i32, i32
  }
  func.func @transform_2(%arg0: i32) -> (i32, i32) {
    %c0_i32 = arith.constant 0 : i32
    %c0_i32_0 = arith.constant 0 : i32
    %c0_i32_1 = arith.constant 0 : i32
    return %c0_i32, %c0_i32_0 : i32, i32
  }
  func.func @transform_3(%arg0: i32) -> (i32, i32) {
    %c0_i32 = arith.constant 0 : i32
    %c0_i32_0 = arith.constant 0 : i32
    %c0_i32_1 = arith.constant 0 : i32
    return %c0_i32, %c0_i32_0 : i32, i32
  }
  func.func @transform_4(%arg0: i32) -> (i32, i32) {
    %c0_i32 = arith.constant 0 : i32
    %c0_i32_0 = arith.constant 0 : i32
    %c0_i32_1 = arith.constant 0 : i32
    return %c0_i32, %c0_i32_0 : i32, i32
  }
  func.func @transform_5(%arg0: i32) -> (i32, i32, i32) {
    %c0_i32 = arith.constant 0 : i32
    %c0_i32_0 = arith.constant 0 : i32
    %c0_i32_1 = arith.constant 0 : i32
    %c0_i32_2 = arith.constant 0 : i32
    return %c0_i32, %c0_i32_0, %c0_i32_1 : i32, i32, i32
  }
  func.func @transform_6(%arg0: i32) -> (i32, i32, i32) {
    %c0_i32 = arith.constant 0 : i32
    %c0_i32_0 = arith.constant 0 : i32
    %c0_i32_1 = arith.constant 0 : i32
    %c0_i32_2 = arith.constant 0 : i32
    return %c0_i32, %c0_i32_0, %c0_i32_1 : i32, i32, i32
  }
  func.func @transform_7(%arg0: i32) -> (i32, i32) {
    %c0_i32 = arith.constant 0 : i32
    %c0_i32_0 = arith.constant 0 : i32
    %c0_i32_1 = arith.constant 0 : i32
    return %c0_i32, %c0_i32_0 : i32, i32
  }
  func.func @transform_8(%arg0: i32) -> (i32, i32) {
    %c0_i32 = arith.constant 0 : i32
    %c0_i32_0 = arith.constant 0 : i32
    %c0_i32_1 = arith.constant 0 : i32
    return %c0_i32, %c0_i32_0 : i32, i32
  }
  func.func @transform_9(%arg0: i32) -> (i32, i32) {
    %c0_i32 = arith.constant 0 : i32
    %c0_i32_0 = arith.constant 0 : i32
    %c0_i32_1 = arith.constant 0 : i32
    return %c0_i32, %c0_i32_0 : i32, i32
  }
  func.func @transform_10(%arg0: i32) -> (i32, i32) {
    %c0_i32 = arith.constant 0 : i32
    %c0_i32_0 = arith.constant 0 : i32
    %c0_i32_1 = arith.constant 0 : i32
    return %c0_i32, %c0_i32_0 : i32, i32
  }
}

module attributes {stable_mosaic.version = 11 : i64} {
  func.func @_apply_kernel(%arg0: i32, %arg1: memref<2x4x128xf32, #tpu.memory_space<vmem>>, %arg2: memref<8x4xf32, #tpu.memory_space<vmem>>, %arg3: memref<4x4xf32, #tpu.memory_space<vmem>>, %arg4: memref<4x4xf32, #tpu.memory_space<vmem>>, %arg5: memref<8x4xf32, #tpu.memory_space<vmem>>, %arg6: memref<3x8x4xf32, #tpu.memory_space<vmem>>, %arg7: memref<5x8x4xf32, #tpu.memory_space<vmem>>, %arg8: memref<8x2xf32, #tpu.memory_space<vmem>>, %arg9: memref<4x2xf32, #tpu.memory_space<vmem>>, %arg10: memref<4x2xf32, #tpu.memory_space<vmem>>, %arg11: memref<8x2xf32, #tpu.memory_space<vmem>>, %arg12: memref<8x2xf32, #tpu.memory_space<vmem>>, %arg13: memref<8x2xf32, #tpu.memory_space<vmem>>, %arg14: memref<2x32x128xf32, #tpu.memory_space<vmem>>) attributes {dimension_semantics = [#tpu.dimension_semantics<parallel>], iteration_bounds = array<i64: 1>, scalar_prefetch = 0 : i64, scratch_operands = 0 : i64, tpu.core_type = #tpu.core_type<tc>, window_params = [{transform_indices = @transform_0, window_bounds = array<i64: 2, 4, 128>}, {pipeline_mode = #tpu.pipeline_mode<synchronous>, transform_indices = @transform_1, window_bounds = array<i64: 8, 4>}, {pipeline_mode = #tpu.pipeline_mode<synchronous>, transform_indices = @transform_2, window_bounds = array<i64: 4, 4>}, {pipeline_mode = #tpu.pipeline_mode<synchronous>, transform_indices = @transform_3, window_bounds = array<i64: 4, 4>}, {pipeline_mode = #tpu.pipeline_mode<synchronous>, transform_indices = @transform_4, window_bounds = array<i64: 8, 4>}, {pipeline_mode = #tpu.pipeline_mode<synchronous>, transform_indices = @transform_5, window_bounds = array<i64: 3, 8, 4>}, {pipeline_mode = #tpu.pipeline_mode<synchronous>, transform_indices = @transform_6, window_bounds = array<i64: 5, 8, 4>}, {pipeline_mode = #tpu.pipeline_mode<synchronous>, transform_indices = @transform_7, window_bounds = array<i64: 8, 2>}, {pipeline_mode = #tpu.pipeline_mode<synchronous>, transform_indices = @transform_8, window_bounds = array<i64: 4, 2>}, {pipeline_mode = #tpu.pipeline_mode<synchronous>, transform_indices = @transform_9, window_bounds = array<i64: 4, 2>}, {pipeline_mode = #tpu.pipeline_mode<synchronous>, transform_indices = @transform_10, window_bounds = array<i64: 8, 2>}, {pipeline_mode = #tpu.pipeline_mode<synchronous>, transform_indices = @transform_11, window_bounds = array<i64: 8, 2>}, {pipeline_mode = #tpu.pipeline_mode<synchronous>, transform_indices = @transform_12, window_bounds = array<i64: 8, 2>}, {transform_indices = @transform_13, window_bounds = array<i64: 2, 32, 128>}]} {
    %c0 = arith.constant 0 : index
    %c0_0 = arith.constant 0 : index
    %c0_1 = arith.constant 0 : index
    %0 = vector.load %arg1[%c0, %c0_0, %c0_1] : memref<2x4x128xf32, #tpu.memory_space<vmem>>, vector<2x4x128xf32>
    %1 = tpu.iota {dimensions = array<i32: 2>} : vector<2x4x128xi32>
    %c1_i32 = arith.constant 1 : i32
    %2 = vector.broadcast %c1_i32 : i32 to vector<2x4x128xi32>
    %3 = arith.cmpi sge, %1, %2 : vector<2x4x128xi32>
    %c1_i32_2 = arith.constant 1 : i32
    %4 = tpu.dynamic_rotate %0 by %c1_i32_2 dim 2 : vector<2x4x128xf32>, i32 -> vector<2x4x128xf32>
    %cst = arith.constant 0xFF800000 : f32
    %5 = vector.broadcast %cst : f32 to vector<2x4x128xf32>
    %6 = arith.select %3, %4, %5 : vector<2x4x128xi1>, vector<2x4x128xf32>
    %c127_i32 = arith.constant 127 : i32
    %7 = vector.broadcast %c127_i32 : i32 to vector<2x4x128xi32>
    %8 = arith.cmpi slt, %1, %7 : vector<2x4x128xi32>
    %c127_i32_3 = arith.constant 127 : i32
    %9 = tpu.dynamic_rotate %0 by %c127_i32_3 dim 2 : vector<2x4x128xf32>, i32 -> vector<2x4x128xf32>
    %cst_4 = arith.constant 0xFF800000 : f32
    %10 = vector.broadcast %cst_4 : f32 to vector<2x4x128xf32>
    %11 = arith.select %8, %9, %10 : vector<2x4x128xi1>, vector<2x4x128xf32>
    %12 = arith.maximumf %6, %0 : vector<2x4x128xf32>
    %13 = arith.maximumf %12, %11 : vector<2x4x128xf32>
    %c0_5 = arith.constant 0 : index
    %c0_6 = arith.constant 0 : index
    %14 = vector.load %arg2[%c0_5, %c0_6] : memref<8x4xf32, #tpu.memory_space<vmem>>, vector<8x4xf32>
    %c0_7 = arith.constant 0 : index
    %c0_8 = arith.constant 0 : index
    %15 = vector.load %arg3[%c0_7, %c0_8] : memref<4x4xf32, #tpu.memory_space<vmem>>, vector<4x4xf32>
    %c0_9 = arith.constant 0 : index
    %c0_10 = arith.constant 0 : index
    %16 = vector.load %arg4[%c0_9, %c0_10] : memref<4x4xf32, #tpu.memory_space<vmem>>, vector<4x4xf32>
    %c0_11 = arith.constant 0 : index
    %c0_12 = arith.constant 0 : index
    %17 = vector.load %arg5[%c0_11, %c0_12] : memref<8x4xf32, #tpu.memory_space<vmem>>, vector<8x4xf32>
    %c0_13 = arith.constant 0 : index
    %c0_14 = arith.constant 0 : index
    %c0_15 = arith.constant 0 : index
    %18 = vector.load %arg6[%c0_13, %c0_14, %c0_15] : memref<3x8x4xf32, #tpu.memory_space<vmem>>, vector<3x8x4xf32>
    %c0_16 = arith.constant 0 : index
    %c0_17 = arith.constant 0 : index
    %c0_18 = arith.constant 0 : index
    %19 = vector.load %arg7[%c0_16, %c0_17, %c0_18] : memref<5x8x4xf32, #tpu.memory_space<vmem>>, vector<5x8x4xf32>
    %c0_19 = arith.constant 0 : index
    %c0_20 = arith.constant 0 : index
    %20 = vector.load %arg8[%c0_19, %c0_20] : memref<8x2xf32, #tpu.memory_space<vmem>>, vector<8x2xf32>
    %21 = vector.extract_strided_slice %20 {offsets = [0, 0], sizes = [8, 1], strides = [1, 1]} : vector<8x2xf32> to vector<8x1xf32>
    %22 = vector.extract_strided_slice %20 {offsets = [0, 1], sizes = [8, 1], strides = [1, 1]} : vector<8x2xf32> to vector<8x1xf32>
    %c0_21 = arith.constant 0 : index
    %c0_22 = arith.constant 0 : index
    %23 = vector.load %arg9[%c0_21, %c0_22] : memref<4x2xf32, #tpu.memory_space<vmem>>, vector<4x2xf32>
    %24 = vector.extract_strided_slice %23 {offsets = [0, 0], sizes = [4, 1], strides = [1, 1]} : vector<4x2xf32> to vector<4x1xf32>
    %25 = vector.extract_strided_slice %23 {offsets = [0, 1], sizes = [4, 1], strides = [1, 1]} : vector<4x2xf32> to vector<4x1xf32>
    %c0_23 = arith.constant 0 : index
    %c0_24 = arith.constant 0 : index
    %26 = vector.load %arg10[%c0_23, %c0_24] : memref<4x2xf32, #tpu.memory_space<vmem>>, vector<4x2xf32>
    %27 = vector.extract_strided_slice %26 {offsets = [0, 0], sizes = [4, 1], strides = [1, 1]} : vector<4x2xf32> to vector<4x1xf32>
    %28 = vector.extract_strided_slice %26 {offsets = [0, 1], sizes = [4, 1], strides = [1, 1]} : vector<4x2xf32> to vector<4x1xf32>
    %c0_25 = arith.constant 0 : index
    %c0_26 = arith.constant 0 : index
    %29 = vector.load %arg11[%c0_25, %c0_26] : memref<8x2xf32, #tpu.memory_space<vmem>>, vector<8x2xf32>
    %30 = vector.extract_strided_slice %29 {offsets = [0, 0], sizes = [8, 1], strides = [1, 1]} : vector<8x2xf32> to vector<8x1xf32>
    %31 = vector.extract_strided_slice %29 {offsets = [0, 1], sizes = [8, 1], strides = [1, 1]} : vector<8x2xf32> to vector<8x1xf32>
    %c0_27 = arith.constant 0 : index
    %c0_28 = arith.constant 0 : index
    %32 = vector.load %arg12[%c0_27, %c0_28] : memref<8x2xf32, #tpu.memory_space<vmem>>, vector<8x2xf32>
    %33 = vector.extract_strided_slice %32 {offsets = [0, 0], sizes = [8, 1], strides = [1, 1]} : vector<8x2xf32> to vector<8x1xf32>
    %34 = vector.extract_strided_slice %32 {offsets = [0, 1], sizes = [8, 1], strides = [1, 1]} : vector<8x2xf32> to vector<8x1xf32>
    %c0_29 = arith.constant 0 : index
    %c0_30 = arith.constant 0 : index
    %35 = vector.load %arg13[%c0_29, %c0_30] : memref<8x2xf32, #tpu.memory_space<vmem>>, vector<8x2xf32>
    %36 = vector.extract_strided_slice %35 {offsets = [0, 0], sizes = [8, 1], strides = [1, 1]} : vector<8x2xf32> to vector<8x1xf32>
    %37 = vector.extract_strided_slice %35 {offsets = [0, 1], sizes = [8, 1], strides = [1, 1]} : vector<8x2xf32> to vector<8x1xf32>
    %38 = vector.extract_strided_slice %0 {offsets = [0, 0, 0], sizes = [1, 4, 128], strides = [1, 1, 1]} : vector<2x4x128xf32> to vector<1x4x128xf32>
    %39 = vector.shape_cast %38 : vector<1x4x128xf32> to vector<4x128xf32>
    %cst_31 = arith.constant dense<0.000000e+00> : vector<8x128xf32>
    %40 = tpu.matmul %14, %39, %cst_31 {dimension_numbers = #tpu.dot_dimension_numbers<[1], [0], [0], [1], [0, 0, 1, 1], [], []>} : vector<8x4xf32>, vector<4x128xf32>, vector<8x128xf32> -> vector<8x128xf32>
    %41 = vector.broadcast %21 : vector<8x1xf32> to vector<8x128xf32>
    %42 = arith.mulf %40, %41 : vector<8x128xf32>
    %43 = vector.broadcast %22 : vector<8x1xf32> to vector<8x128xf32>
    %44 = arith.addf %42, %43 : vector<8x128xf32>
    %cst_32 = arith.constant 0.000000e+00 : f32
    %45 = vector.broadcast %cst_32 : f32 to vector<8x128xf32>
    %46 = arith.maximumf %44, %45 : vector<8x128xf32>
    %c0_33 = arith.constant 0 : index
    %c0_34 = arith.constant 0 : index
    %c0_35 = arith.constant 0 : index
    %47 = vector.load %arg14[%c0_33, %c0_34, %c0_35] : memref<2x32x128xf32, #tpu.memory_space<vmem>>, vector<1x8x128xf32>
    %48 = vector.shape_cast %47 : vector<1x8x128xf32> to vector<8x128xf32>
    %49 = vector.shape_cast %46 : vector<8x128xf32> to vector<1x8x128xf32>
    tpu.vector_store %arg14[%c0_33, %c0_34, %c0_35], %49 {strides = array<i32>} : memref<2x32x128xf32, #tpu.memory_space<vmem>>, vector<1x8x128xf32>,
    %cst_36 = arith.constant dense<0.000000e+00> : vector<4x128xf32>
    %50 = tpu.matmul %15, %39, %cst_36 {dimension_numbers = #tpu.dot_dimension_numbers<[1], [0], [0], [1], [0, 0, 1, 1], [], []>} : vector<4x4xf32>, vector<4x128xf32>, vector<4x128xf32> -> vector<4x128xf32>
    %51 = vector.broadcast %24 : vector<4x1xf32> to vector<4x128xf32>
    %52 = arith.mulf %50, %51 : vector<4x128xf32>
    %53 = vector.broadcast %25 : vector<4x1xf32> to vector<4x128xf32>
    %54 = arith.addf %52, %53 : vector<4x128xf32>
    %cst_37 = arith.constant 0.000000e+00 : f32
    %55 = vector.broadcast %cst_37 : f32 to vector<4x128xf32>
    %56 = arith.maximumf %54, %55 : vector<4x128xf32>
    %57 = tpu.iota {dimensions = array<i32: 1>} : vector<4x128xi32>
    %c1_i32_38 = arith.constant 1 : i32
    %58 = tpu.dynamic_rotate %56 by %c1_i32_38 dim 1 : vector<4x128xf32>, i32 -> vector<4x128xf32>
    %c1_i32_39 = arith.constant 1 : i32
    %59 = vector.broadcast %c1_i32_39 : i32 to vector<4x128xi32>
    %60 = arith.cmpi sge, %57, %59 : vector<4x128xi32>
    %cst_40 = arith.constant 0.000000e+00 : f32
    %61 = vector.broadcast %cst_40 : f32 to vector<4x128xf32>
    %62 = arith.select %60, %58, %61 : vector<4x128xi1>, vector<4x128xf32>
    %63 = vector.extract_strided_slice %18 {offsets = [0, 0, 0], sizes = [1, 8, 4], strides = [1, 1, 1]} : vector<3x8x4xf32> to vector<1x8x4xf32>
    %64 = vector.shape_cast %63 : vector<1x8x4xf32> to vector<8x4xf32>
    %cst_41 = arith.constant dense<0.000000e+00> : vector<8x128xf32>
    %65 = tpu.matmul %64, %62, %cst_41 {dimension_numbers = #tpu.dot_dimension_numbers<[1], [0], [0], [1], [0, 0, 1, 1], [], []>} : vector<8x4xf32>, vector<4x128xf32>, vector<8x128xf32> -> vector<8x128xf32>
    %66 = vector.extract_strided_slice %18 {offsets = [1, 0, 0], sizes = [1, 8, 4], strides = [1, 1, 1]} : vector<3x8x4xf32> to vector<1x8x4xf32>
    %67 = vector.shape_cast %66 : vector<1x8x4xf32> to vector<8x4xf32>
    %cst_42 = arith.constant dense<0.000000e+00> : vector<8x128xf32>
    %68 = tpu.matmul %67, %56, %cst_42 {dimension_numbers = #tpu.dot_dimension_numbers<[1], [0], [0], [1], [0, 0, 1, 1], [], []>} : vector<8x4xf32>, vector<4x128xf32>, vector<8x128xf32> -> vector<8x128xf32>
    %69 = arith.addf %65, %68 : vector<8x128xf32>
    %c127_i32_43 = arith.constant 127 : i32
    %70 = tpu.dynamic_rotate %56 by %c127_i32_43 dim 1 : vector<4x128xf32>, i32 -> vector<4x128xf32>
    %c127_i32_44 = arith.constant 127 : i32
    %71 = vector.broadcast %c127_i32_44 : i32 to vector<4x128xi32>
    %72 = arith.cmpi slt, %57, %71 : vector<4x128xi32>
    %cst_45 = arith.constant 0.000000e+00 : f32
    %73 = vector.broadcast %cst_45 : f32 to vector<4x128xf32>
    %74 = arith.select %72, %70, %73 : vector<4x128xi1>, vector<4x128xf32>
    %75 = vector.extract_strided_slice %18 {offsets = [2, 0, 0], sizes = [1, 8, 4], strides = [1, 1, 1]} : vector<3x8x4xf32> to vector<1x8x4xf32>
    %76 = vector.shape_cast %75 : vector<1x8x4xf32> to vector<8x4xf32>
    %cst_46 = arith.constant dense<0.000000e+00> : vector<8x128xf32>
    %77 = tpu.matmul %76, %74, %cst_46 {dimension_numbers = #tpu.dot_dimension_numbers<[1], [0], [0], [1], [0, 0, 1, 1], [], []>} : vector<8x4xf32>, vector<4x128xf32>, vector<8x128xf32> -> vector<8x128xf32>
    %78 = arith.addf %69, %77 : vector<8x128xf32>
    %79 = vector.broadcast %33 : vector<8x1xf32> to vector<8x128xf32>
    %80 = arith.mulf %78, %79 : vector<8x128xf32>
    %81 = vector.broadcast %34 : vector<8x1xf32> to vector<8x128xf32>
    %82 = arith.addf %80, %81 : vector<8x128xf32>
    %cst_47 = arith.constant 0.000000e+00 : f32
    %83 = vector.broadcast %cst_47 : f32 to vector<8x128xf32>
    %84 = arith.maximumf %82, %83 : vector<8x128xf32>
    %c0_48 = arith.constant 0 : index
    %c8 = arith.constant 8 : index
    %c0_49 = arith.constant 0 : index
    %85 = vector.load %arg14[%c0_48, %c8, %c0_49] : memref<2x32x128xf32, #tpu.memory_space<vmem>>, vector<1x8x128xf32>
    %86 = vector.shape_cast %85 : vector<1x8x128xf32> to vector<8x128xf32>
    %87 = vector.shape_cast %84 : vector<8x128xf32> to vector<1x8x128xf32>
    tpu.vector_store %arg14[%c0_48, %c8, %c0_49], %87 {strides = array<i32>} : memref<2x32x128xf32, #tpu.memory_space<vmem>>, vector<1x8x128xf32>,
    %cst_50 = arith.constant dense<0.000000e+00> : vector<4x128xf32>
    %88 = tpu.matmul %16, %39, %cst_50 {dimension_numbers = #tpu.dot_dimension_numbers<[1], [0], [0], [1], [0, 0, 1, 1], [], []>} : vector<4x4xf32>, vector<4x128xf32>, vector<4x128xf32> -> vector<4x128xf32>
    %89 = vector.broadcast %27 : vector<4x1xf32> to vector<4x128xf32>
    %90 = arith.mulf %88, %89 : vector<4x128xf32>
    %91 = vector.broadcast %28 : vector<4x1xf32> to vector<4x128xf32>
    %92 = arith.addf %90, %91 : vector<4x128xf32>
    %cst_51 = arith.constant 0.000000e+00 : f32
    %93 = vector.broadcast %cst_51 : f32 to vector<4x128xf32>
    %94 = arith.maximumf %92, %93 : vector<4x128xf32>
    %95 = tpu.iota {dimensions = array<i32: 1>} : vector<4x128xi32>
    %c2_i32 = arith.constant 2 : i32
    %96 = tpu.dynamic_rotate %94 by %c2_i32 dim 1 : vector<4x128xf32>, i32 -> vector<4x128xf32>
    %c2_i32_52 = arith.constant 2 : i32
    %97 = vector.broadcast %c2_i32_52 : i32 to vector<4x128xi32>
    %98 = arith.cmpi sge, %95, %97 : vector<4x128xi32>
    %cst_53 = arith.constant 0.000000e+00 : f32
    %99 = vector.broadcast %cst_53 : f32 to vector<4x128xf32>
    %100 = arith.select %98, %96, %99 : vector<4x128xi1>, vector<4x128xf32>
    %101 = vector.extract_strided_slice %19 {offsets = [0, 0, 0], sizes = [1, 8, 4], strides = [1, 1, 1]} : vector<5x8x4xf32> to vector<1x8x4xf32>
    %102 = vector.shape_cast %101 : vector<1x8x4xf32> to vector<8x4xf32>
    %cst_54 = arith.constant dense<0.000000e+00> : vector<8x128xf32>
    %103 = tpu.matmul %102, %100, %cst_54 {dimension_numbers = #tpu.dot_dimension_numbers<[1], [0], [0], [1], [0, 0, 1, 1], [], []>} : vector<8x4xf32>, vector<4x128xf32>, vector<8x128xf32> -> vector<8x128xf32>
    %c1_i32_55 = arith.constant 1 : i32
    %104 = tpu.dynamic_rotate %94 by %c1_i32_55 dim 1 : vector<4x128xf32>, i32 -> vector<4x128xf32>
    %c1_i32_56 = arith.constant 1 : i32
    %105 = vector.broadcast %c1_i32_56 : i32 to vector<4x128xi32>
    %106 = arith.cmpi sge, %95, %105 : vector<4x128xi32>
    %cst_57 = arith.constant 0.000000e+00 : f32
    %107 = vector.broadcast %cst_57 : f32 to vector<4x128xf32>
    %108 = arith.select %106, %104, %107 : vector<4x128xi1>, vector<4x128xf32>
    %109 = vector.extract_strided_slice %19 {offsets = [1, 0, 0], sizes = [1, 8, 4], strides = [1, 1, 1]} : vector<5x8x4xf32> to vector<1x8x4xf32>
    %110 = vector.shape_cast %109 : vector<1x8x4xf32> to vector<8x4xf32>
    %cst_58 = arith.constant dense<0.000000e+00> : vector<8x128xf32>
    %111 = tpu.matmul %110, %108, %cst_58 {dimension_numbers = #tpu.dot_dimension_numbers<[1], [0], [0], [1], [0, 0, 1, 1], [], []>} : vector<8x4xf32>, vector<4x128xf32>, vector<8x128xf32> -> vector<8x128xf32>
    %112 = arith.addf %103, %111 : vector<8x128xf32>
    %113 = vector.extract_strided_slice %19 {offsets = [2, 0, 0], sizes = [1, 8, 4], strides = [1, 1, 1]} : vector<5x8x4xf32> to vector<1x8x4xf32>
    %114 = vector.shape_cast %113 : vector<1x8x4xf32> to vector<8x4xf32>
    %cst_59 = arith.constant dense<0.000000e+00> : vector<8x128xf32>
    %115 = tpu.matmul %114, %94, %cst_59 {dimension_numbers = #tpu.dot_dimension_numbers<[1], [0], [0], [1], [0, 0, 1, 1], [], []>} : vector<8x4xf32>, vector<4x128xf32>, vector<8x128xf32> -> vector<8x128xf32>
    %116 = arith.addf %112, %115 : vector<8x128xf32>
    %c127_i32_60 = arith.constant 127 : i32
    %117 = tpu.dynamic_rotate %94 by %c127_i32_60 dim 1 : vector<4x128xf32>, i32 -> vector<4x128xf32>
    %c127_i32_61 = arith.constant 127 : i32
    %118 = vector.broadcast %c127_i32_61 : i32 to vector<4x128xi32>
    %119 = arith.cmpi slt, %95, %118 : vector<4x128xi32>
    %cst_62 = arith.constant 0.000000e+00 : f32
    %120 = vector.broadcast %cst_62 : f32 to vector<4x128xf32>
    %121 = arith.select %119, %117, %120 : vector<4x128xi1>, vector<4x128xf32>
    %122 = vector.extract_strided_slice %19 {offsets = [3, 0, 0], sizes = [1, 8, 4], strides = [1, 1, 1]} : vector<5x8x4xf32> to vector<1x8x4xf32>
    %123 = vector.shape_cast %122 : vector<1x8x4xf32> to vector<8x4xf32>
    %cst_63 = arith.constant dense<0.000000e+00> : vector<8x128xf32>
    %124 = tpu.matmul %123, %121, %cst_63 {dimension_numbers = #tpu.dot_dimension_numbers<[1], [0], [0], [1], [0, 0, 1, 1], [], []>} : vector<8x4xf32>, vector<4x128xf32>, vector<8x128xf32> -> vector<8x128xf32>
    %125 = arith.addf %116, %124 : vector<8x128xf32>
    %c126_i32 = arith.constant 126 : i32
    %126 = tpu.dynamic_rotate %94 by %c126_i32 dim 1 : vector<4x128xf32>, i32 -> vector<4x128xf32>
    %c126_i32_64 = arith.constant 126 : i32
    %127 = vector.broadcast %c126_i32_64 : i32 to vector<4x128xi32>
    %128 = arith.cmpi slt, %95, %127 : vector<4x128xi32>
    %cst_65 = arith.constant 0.000000e+00 : f32
    %129 = vector.broadcast %cst_65 : f32 to vector<4x128xf32>
    %130 = arith.select %128, %126, %129 : vector<4x128xi1>, vector<4x128xf32>
    %131 = vector.extract_strided_slice %19 {offsets = [4, 0, 0], sizes = [1, 8, 4], strides = [1, 1, 1]} : vector<5x8x4xf32> to vector<1x8x4xf32>
    %132 = vector.shape_cast %131 : vector<1x8x4xf32> to vector<8x4xf32>
    %cst_66 = arith.constant dense<0.000000e+00> : vector<8x128xf32>
    %133 = tpu.matmul %132, %130, %cst_66 {dimension_numbers = #tpu.dot_dimension_numbers<[1], [0], [0], [1], [0, 0, 1, 1], [], []>} : vector<8x4xf32>, vector<4x128xf32>, vector<8x128xf32> -> vector<8x128xf32>
    %134 = arith.addf %125, %133 : vector<8x128xf32>
    %135 = vector.broadcast %36 : vector<8x1xf32> to vector<8x128xf32>
    %136 = arith.mulf %134, %135 : vector<8x128xf32>
    %137 = vector.broadcast %37 : vector<8x1xf32> to vector<8x128xf32>
    %138 = arith.addf %136, %137 : vector<8x128xf32>
    %cst_67 = arith.constant 0.000000e+00 : f32
    %139 = vector.broadcast %cst_67 : f32 to vector<8x128xf32>
    %140 = arith.maximumf %138, %139 : vector<8x128xf32>
    %c0_68 = arith.constant 0 : index
    %c16 = arith.constant 16 : index
    %c0_69 = arith.constant 0 : index
    %141 = vector.load %arg14[%c0_68, %c16, %c0_69] : memref<2x32x128xf32, #tpu.memory_space<vmem>>, vector<1x8x128xf32>
    %142 = vector.shape_cast %141 : vector<1x8x128xf32> to vector<8x128xf32>
    %143 = vector.shape_cast %140 : vector<8x128xf32> to vector<1x8x128xf32>
    tpu.vector_store %arg14[%c0_68, %c16, %c0_69], %143 {strides = array<i32>} : memref<2x32x128xf32, #tpu.memory_space<vmem>>, vector<1x8x128xf32>,
    %144 = vector.extract_strided_slice %13 {offsets = [0, 0, 0], sizes = [1, 4, 128], strides = [1, 1, 1]} : vector<2x4x128xf32> to vector<1x4x128xf32>
    %145 = vector.shape_cast %144 : vector<1x4x128xf32> to vector<4x128xf32>
    %cst_70 = arith.constant dense<0.000000e+00> : vector<8x128xf32>
    %146 = tpu.matmul %17, %145, %cst_70 {dimension_numbers = #tpu.dot_dimension_numbers<[1], [0], [0], [1], [0, 0, 1, 1], [], []>} : vector<8x4xf32>, vector<4x128xf32>, vector<8x128xf32> -> vector<8x128xf32>
    %147 = vector.broadcast %30 : vector<8x1xf32> to vector<8x128xf32>
    %148 = arith.mulf %146, %147 : vector<8x128xf32>
    %149 = vector.broadcast %31 : vector<8x1xf32> to vector<8x128xf32>
    %150 = arith.addf %148, %149 : vector<8x128xf32>
    %cst_71 = arith.constant 0.000000e+00 : f32
    %151 = vector.broadcast %cst_71 : f32 to vector<8x128xf32>
    %152 = arith.maximumf %150, %151 : vector<8x128xf32>
    %c0_72 = arith.constant 0 : index
    %c24 = arith.constant 24 : index
    %c0_73 = arith.constant 0 : index
    %153 = vector.load %arg14[%c0_72, %c24, %c0_73] : memref<2x32x128xf32, #tpu.memory_space<vmem>>, vector<1x8x128xf32>
    %154 = vector.shape_cast %153 : vector<1x8x128xf32> to vector<8x128xf32>
    %155 = vector.shape_cast %152 : vector<8x128xf32> to vector<1x8x128xf32>
    tpu.vector_store %arg14[%c0_72, %c24, %c0_73], %155 {strides = array<i32>} : memref<2x32x128xf32, #tpu.memory_space<vmem>>, vector<1x8x128xf32>,
    %156 = vector.extract_strided_slice %0 {offsets = [1, 0, 0], sizes = [1, 4, 128], strides = [1, 1, 1]} : vector<2x4x128xf32> to vector<1x4x128xf32>
    %157 = vector.shape_cast %156 : vector<1x4x128xf32> to vector<4x128xf32>
    %cst_74 = arith.constant dense<0.000000e+00> : vector<8x128xf32>
    %158 = tpu.matmul %14, %157, %cst_74 {dimension_numbers = #tpu.dot_dimension_numbers<[1], [0], [0], [1], [0, 0, 1, 1], [], []>} : vector<8x4xf32>, vector<4x128xf32>, vector<8x128xf32> -> vector<8x128xf32>
    %159 = vector.broadcast %21 : vector<8x1xf32> to vector<8x128xf32>
    %160 = arith.mulf %158, %159 : vector<8x128xf32>
    %161 = vector.broadcast %22 : vector<8x1xf32> to vector<8x128xf32>
    %162 = arith.addf %160, %161 : vector<8x128xf32>
    %cst_75 = arith.constant 0.000000e+00 : f32
    %163 = vector.broadcast %cst_75 : f32 to vector<8x128xf32>
    %164 = arith.maximumf %162, %163 : vector<8x128xf32>
    %c1 = arith.constant 1 : index
    %c0_76 = arith.constant 0 : index
    %c0_77 = arith.constant 0 : index
    %165 = vector.load %arg14[%c1, %c0_76, %c0_77] : memref<2x32x128xf32, #tpu.memory_space<vmem>>, vector<1x8x128xf32>
    %166 = vector.shape_cast %165 : vector<1x8x128xf32> to vector<8x128xf32>
    %167 = vector.shape_cast %164 : vector<8x128xf32> to vector<1x8x128xf32>
    tpu.vector_store %arg14[%c1, %c0_76, %c0_77], %167 {strides = array<i32>} : memref<2x32x128xf32, #tpu.memory_space<vmem>>, vector<1x8x128xf32>,
    %cst_78 = arith.constant dense<0.000000e+00> : vector<4x128xf32>
    %168 = tpu.matmul %15, %157, %cst_78 {dimension_numbers = #tpu.dot_dimension_numbers<[1], [0], [0], [1], [0, 0, 1, 1], [], []>} : vector<4x4xf32>, vector<4x128xf32>, vector<4x128xf32> -> vector<4x128xf32>
    %169 = vector.broadcast %24 : vector<4x1xf32> to vector<4x128xf32>
    %170 = arith.mulf %168, %169 : vector<4x128xf32>
    %171 = vector.broadcast %25 : vector<4x1xf32> to vector<4x128xf32>
    %172 = arith.addf %170, %171 : vector<4x128xf32>
    %cst_79 = arith.constant 0.000000e+00 : f32
    %173 = vector.broadcast %cst_79 : f32 to vector<4x128xf32>
    %174 = arith.maximumf %172, %173 : vector<4x128xf32>
    %175 = tpu.iota {dimensions = array<i32: 1>} : vector<4x128xi32>
    %c1_i32_80 = arith.constant 1 : i32
    %176 = tpu.dynamic_rotate %174 by %c1_i32_80 dim 1 : vector<4x128xf32>, i32 -> vector<4x128xf32>
    %c1_i32_81 = arith.constant 1 : i32
    %177 = vector.broadcast %c1_i32_81 : i32 to vector<4x128xi32>
    %178 = arith.cmpi sge, %175, %177 : vector<4x128xi32>
    %cst_82 = arith.constant 0.000000e+00 : f32
    %179 = vector.broadcast %cst_82 : f32 to vector<4x128xf32>
    %180 = arith.select %178, %176, %179 : vector<4x128xi1>, vector<4x128xf32>
    %181 = vector.extract_strided_slice %18 {offsets = [0, 0, 0], sizes = [1, 8, 4], strides = [1, 1, 1]} : vector<3x8x4xf32> to vector<1x8x4xf32>
    %182 = vector.shape_cast %181 : vector<1x8x4xf32> to vector<8x4xf32>
    %cst_83 = arith.constant dense<0.000000e+00> : vector<8x128xf32>
    %183 = tpu.matmul %182, %180, %cst_83 {dimension_numbers = #tpu.dot_dimension_numbers<[1], [0], [0], [1], [0, 0, 1, 1], [], []>} : vector<8x4xf32>, vector<4x128xf32>, vector<8x128xf32> -> vector<8x128xf32>
    %184 = vector.extract_strided_slice %18 {offsets = [1, 0, 0], sizes = [1, 8, 4], strides = [1, 1, 1]} : vector<3x8x4xf32> to vector<1x8x4xf32>
    %185 = vector.shape_cast %184 : vector<1x8x4xf32> to vector<8x4xf32>
    %cst_84 = arith.constant dense<0.000000e+00> : vector<8x128xf32>
    %186 = tpu.matmul %185, %174, %cst_84 {dimension_numbers = #tpu.dot_dimension_numbers<[1], [0], [0], [1], [0, 0, 1, 1], [], []>} : vector<8x4xf32>, vector<4x128xf32>, vector<8x128xf32> -> vector<8x128xf32>
    %187 = arith.addf %183, %186 : vector<8x128xf32>
    %c127_i32_85 = arith.constant 127 : i32
    %188 = tpu.dynamic_rotate %174 by %c127_i32_85 dim 1 : vector<4x128xf32>, i32 -> vector<4x128xf32>
    %c127_i32_86 = arith.constant 127 : i32
    %189 = vector.broadcast %c127_i32_86 : i32 to vector<4x128xi32>
    %190 = arith.cmpi slt, %175, %189 : vector<4x128xi32>
    %cst_87 = arith.constant 0.000000e+00 : f32
    %191 = vector.broadcast %cst_87 : f32 to vector<4x128xf32>
    %192 = arith.select %190, %188, %191 : vector<4x128xi1>, vector<4x128xf32>
    %193 = vector.extract_strided_slice %18 {offsets = [2, 0, 0], sizes = [1, 8, 4], strides = [1, 1, 1]} : vector<3x8x4xf32> to vector<1x8x4xf32>
    %194 = vector.shape_cast %193 : vector<1x8x4xf32> to vector<8x4xf32>
    %cst_88 = arith.constant dense<0.000000e+00> : vector<8x128xf32>
    %195 = tpu.matmul %194, %192, %cst_88 {dimension_numbers = #tpu.dot_dimension_numbers<[1], [0], [0], [1], [0, 0, 1, 1], [], []>} : vector<8x4xf32>, vector<4x128xf32>, vector<8x128xf32> -> vector<8x128xf32>
    %196 = arith.addf %187, %195 : vector<8x128xf32>
    %197 = vector.broadcast %33 : vector<8x1xf32> to vector<8x128xf32>
    %198 = arith.mulf %196, %197 : vector<8x128xf32>
    %199 = vector.broadcast %34 : vector<8x1xf32> to vector<8x128xf32>
    %200 = arith.addf %198, %199 : vector<8x128xf32>
    %cst_89 = arith.constant 0.000000e+00 : f32
    %201 = vector.broadcast %cst_89 : f32 to vector<8x128xf32>
    %202 = arith.maximumf %200, %201 : vector<8x128xf32>
    %c1_90 = arith.constant 1 : index
    %c8_91 = arith.constant 8 : index
    %c0_92 = arith.constant 0 : index
    %203 = vector.load %arg14[%c1_90, %c8_91, %c0_92] : memref<2x32x128xf32, #tpu.memory_space<vmem>>, vector<1x8x128xf32>
    %204 = vector.shape_cast %203 : vector<1x8x128xf32> to vector<8x128xf32>
    %205 = vector.shape_cast %202 : vector<8x128xf32> to vector<1x8x128xf32>
    tpu.vector_store %arg14[%c1_90, %c8_91, %c0_92], %205 {strides = array<i32>} : memref<2x32x128xf32, #tpu.memory_space<vmem>>, vector<1x8x128xf32>,
    %cst_93 = arith.constant dense<0.000000e+00> : vector<4x128xf32>
    %206 = tpu.matmul %16, %157, %cst_93 {dimension_numbers = #tpu.dot_dimension_numbers<[1], [0], [0], [1], [0, 0, 1, 1], [], []>} : vector<4x4xf32>, vector<4x128xf32>, vector<4x128xf32> -> vector<4x128xf32>
    %207 = vector.broadcast %27 : vector<4x1xf32> to vector<4x128xf32>
    %208 = arith.mulf %206, %207 : vector<4x128xf32>
    %209 = vector.broadcast %28 : vector<4x1xf32> to vector<4x128xf32>
    %210 = arith.addf %208, %209 : vector<4x128xf32>
    %cst_94 = arith.constant 0.000000e+00 : f32
    %211 = vector.broadcast %cst_94 : f32 to vector<4x128xf32>
    %212 = arith.maximumf %210, %211 : vector<4x128xf32>
    %213 = tpu.iota {dimensions = array<i32: 1>} : vector<4x128xi32>
    %c2_i32_95 = arith.constant 2 : i32
    %214 = tpu.dynamic_rotate %212 by %c2_i32_95 dim 1 : vector<4x128xf32>, i32 -> vector<4x128xf32>
    %c2_i32_96 = arith.constant 2 : i32
    %215 = vector.broadcast %c2_i32_96 : i32 to vector<4x128xi32>
    %216 = arith.cmpi sge, %213, %215 : vector<4x128xi32>
    %cst_97 = arith.constant 0.000000e+00 : f32
    %217 = vector.broadcast %cst_97 : f32 to vector<4x128xf32>
    %218 = arith.select %216, %214, %217 : vector<4x128xi1>, vector<4x128xf32>
    %219 = vector.extract_strided_slice %19 {offsets = [0, 0, 0], sizes = [1, 8, 4], strides = [1, 1, 1]} : vector<5x8x4xf32> to vector<1x8x4xf32>
    %220 = vector.shape_cast %219 : vector<1x8x4xf32> to vector<8x4xf32>
    %cst_98 = arith.constant dense<0.000000e+00> : vector<8x128xf32>
    %221 = tpu.matmul %220, %218, %cst_98 {dimension_numbers = #tpu.dot_dimension_numbers<[1], [0], [0], [1], [0, 0, 1, 1], [], []>} : vector<8x4xf32>, vector<4x128xf32>, vector<8x128xf32> -> vector<8x128xf32>
    %c1_i32_99 = arith.constant 1 : i32
    %222 = tpu.dynamic_rotate %212 by %c1_i32_99 dim 1 : vector<4x128xf32>, i32 -> vector<4x128xf32>
    %c1_i32_100 = arith.constant 1 : i32
    %223 = vector.broadcast %c1_i32_100 : i32 to vector<4x128xi32>
    %224 = arith.cmpi sge, %213, %223 : vector<4x128xi32>
    %cst_101 = arith.constant 0.000000e+00 : f32
    %225 = vector.broadcast %cst_101 : f32 to vector<4x128xf32>
    %226 = arith.select %224, %222, %225 : vector<4x128xi1>, vector<4x128xf32>
    %227 = vector.extract_strided_slice %19 {offsets = [1, 0, 0], sizes = [1, 8, 4], strides = [1, 1, 1]} : vector<5x8x4xf32> to vector<1x8x4xf32>
    %228 = vector.shape_cast %227 : vector<1x8x4xf32> to vector<8x4xf32>
    %cst_102 = arith.constant dense<0.000000e+00> : vector<8x128xf32>
    %229 = tpu.matmul %228, %226, %cst_102 {dimension_numbers = #tpu.dot_dimension_numbers<[1], [0], [0], [1], [0, 0, 1, 1], [], []>} : vector<8x4xf32>, vector<4x128xf32>, vector<8x128xf32> -> vector<8x128xf32>
    %230 = arith.addf %221, %229 : vector<8x128xf32>
    %231 = vector.extract_strided_slice %19 {offsets = [2, 0, 0], sizes = [1, 8, 4], strides = [1, 1, 1]} : vector<5x8x4xf32> to vector<1x8x4xf32>
    %232 = vector.shape_cast %231 : vector<1x8x4xf32> to vector<8x4xf32>
    %cst_103 = arith.constant dense<0.000000e+00> : vector<8x128xf32>
    %233 = tpu.matmul %232, %212, %cst_103 {dimension_numbers = #tpu.dot_dimension_numbers<[1], [0], [0], [1], [0, 0, 1, 1], [], []>} : vector<8x4xf32>, vector<4x128xf32>, vector<8x128xf32> -> vector<8x128xf32>
    %234 = arith.addf %230, %233 : vector<8x128xf32>
    %c127_i32_104 = arith.constant 127 : i32
    %235 = tpu.dynamic_rotate %212 by %c127_i32_104 dim 1 : vector<4x128xf32>, i32 -> vector<4x128xf32>
    %c127_i32_105 = arith.constant 127 : i32
    %236 = vector.broadcast %c127_i32_105 : i32 to vector<4x128xi32>
    %237 = arith.cmpi slt, %213, %236 : vector<4x128xi32>
    %cst_106 = arith.constant 0.000000e+00 : f32
    %238 = vector.broadcast %cst_106 : f32 to vector<4x128xf32>
    %239 = arith.select %237, %235, %238 : vector<4x128xi1>, vector<4x128xf32>
    %240 = vector.extract_strided_slice %19 {offsets = [3, 0, 0], sizes = [1, 8, 4], strides = [1, 1, 1]} : vector<5x8x4xf32> to vector<1x8x4xf32>
    %241 = vector.shape_cast %240 : vector<1x8x4xf32> to vector<8x4xf32>
    %cst_107 = arith.constant dense<0.000000e+00> : vector<8x128xf32>
    %242 = tpu.matmul %241, %239, %cst_107 {dimension_numbers = #tpu.dot_dimension_numbers<[1], [0], [0], [1], [0, 0, 1, 1], [], []>} : vector<8x4xf32>, vector<4x128xf32>, vector<8x128xf32> -> vector<8x128xf32>
    %243 = arith.addf %234, %242 : vector<8x128xf32>
    %c126_i32_108 = arith.constant 126 : i32
    %244 = tpu.dynamic_rotate %212 by %c126_i32_108 dim 1 : vector<4x128xf32>, i32 -> vector<4x128xf32>
    %c126_i32_109 = arith.constant 126 : i32
    %245 = vector.broadcast %c126_i32_109 : i32 to vector<4x128xi32>
    %246 = arith.cmpi slt, %213, %245 : vector<4x128xi32>
    %cst_110 = arith.constant 0.000000e+00 : f32
    %247 = vector.broadcast %cst_110 : f32 to vector<4x128xf32>
    %248 = arith.select %246, %244, %247 : vector<4x128xi1>, vector<4x128xf32>
    %249 = vector.extract_strided_slice %19 {offsets = [4, 0, 0], sizes = [1, 8, 4], strides = [1, 1, 1]} : vector<5x8x4xf32> to vector<1x8x4xf32>
    %250 = vector.shape_cast %249 : vector<1x8x4xf32> to vector<8x4xf32>
    %cst_111 = arith.constant dense<0.000000e+00> : vector<8x128xf32>
    %251 = tpu.matmul %250, %248, %cst_111 {dimension_numbers = #tpu.dot_dimension_numbers<[1], [0], [0], [1], [0, 0, 1, 1], [], []>} : vector<8x4xf32>, vector<4x128xf32>, vector<8x128xf32> -> vector<8x128xf32>
    %252 = arith.addf %243, %251 : vector<8x128xf32>
    %253 = vector.broadcast %36 : vector<8x1xf32> to vector<8x128xf32>
    %254 = arith.mulf %252, %253 : vector<8x128xf32>
    %255 = vector.broadcast %37 : vector<8x1xf32> to vector<8x128xf32>
    %256 = arith.addf %254, %255 : vector<8x128xf32>
    %cst_112 = arith.constant 0.000000e+00 : f32
    %257 = vector.broadcast %cst_112 : f32 to vector<8x128xf32>
    %258 = arith.maximumf %256, %257 : vector<8x128xf32>
    %c1_113 = arith.constant 1 : index
    %c16_114 = arith.constant 16 : index
    %c0_115 = arith.constant 0 : index
    %259 = vector.load %arg14[%c1_113, %c16_114, %c0_115] : memref<2x32x128xf32, #tpu.memory_space<vmem>>, vector<1x8x128xf32>
    %260 = vector.shape_cast %259 : vector<1x8x128xf32> to vector<8x128xf32>
    %261 = vector.shape_cast %258 : vector<8x128xf32> to vector<1x8x128xf32>
    tpu.vector_store %arg14[%c1_113, %c16_114, %c0_115], %261 {strides = array<i32>} : memref<2x32x128xf32, #tpu.memory_space<vmem>>, vector<1x8x128xf32>,
    %262 = vector.extract_strided_slice %13 {offsets = [1, 0, 0], sizes = [1, 4, 128], strides = [1, 1, 1]} : vector<2x4x128xf32> to vector<1x4x128xf32>
    %263 = vector.shape_cast %262 : vector<1x4x128xf32> to vector<4x128xf32>
    %cst_116 = arith.constant dense<0.000000e+00> : vector<8x128xf32>
    %264 = tpu.matmul %17, %263, %cst_116 {dimension_numbers = #tpu.dot_dimension_numbers<[1], [0], [0], [1], [0, 0, 1, 1], [], []>} : vector<8x4xf32>, vector<4x128xf32>, vector<8x128xf32> -> vector<8x128xf32>
    %265 = vector.broadcast %30 : vector<8x1xf32> to vector<8x128xf32>
    %266 = arith.mulf %264, %265 : vector<8x128xf32>
    %267 = vector.broadcast %31 : vector<8x1xf32> to vector<8x128xf32>
    %268 = arith.addf %266, %267 : vector<8x128xf32>
    %cst_117 = arith.constant 0.000000e+00 : f32
    %269 = vector.broadcast %cst_117 : f32 to vector<8x128xf32>
    %270 = arith.maximumf %268, %269 : vector<8x128xf32>
    %c1_118 = arith.constant 1 : index
    %c24_119 = arith.constant 24 : index
    %c0_120 = arith.constant 0 : index
    %271 = vector.load %arg14[%c1_118, %c24_119, %c0_120] : memref<2x32x128xf32, #tpu.memory_space<vmem>>, vector<1x8x128xf32>
    %272 = vector.shape_cast %271 : vector<1x8x128xf32> to vector<8x128xf32>
    %273 = vector.shape_cast %270 : vector<8x128xf32> to vector<1x8x128xf32>
    tpu.vector_store %arg14[%c1_118, %c24_119, %c0_120], %273 {strides = array<i32>} : memref<2x32x128xf32, #tpu.memory_space<vmem>>, vector<1x8x128xf32>,
    return
  }
  func.func @transform_0(%arg0: i32) -> (i32, i32, i32) {
    %c0_i32 = arith.constant 0 : i32
    %c0_i32_0 = arith.constant 0 : i32
    %c0_i32_1 = arith.constant 0 : i32
    return %arg0, %c0_i32, %c0_i32_0 : i32, i32, i32
  }
  func.func @transform_1(%arg0: i32) -> (i32, i32) {
    %c0_i32 = arith.constant 0 : i32
    %c0_i32_0 = arith.constant 0 : i32
    %c0_i32_1 = arith.constant 0 : i32
    return %c0_i32, %c0_i32_0 : i32, i32
  }
  func.func @transform_2(%arg0: i32) -> (i32, i32) {
    %c0_i32 = arith.constant 0 : i32
    %c0_i32_0 = arith.constant 0 : i32
    %c0_i32_1 = arith.constant 0 : i32
    return %c0_i32, %c0_i32_0 : i32, i32
  }
  func.func @transform_3(%arg0: i32) -> (i32, i32) {
    %c0_i32 = arith.constant 0 : i32
    %c0_i32_0 = arith.constant 0 : i32
    %c0_i32_1 = arith.constant 0 : i32
    return %c0_i32, %c0_i32_0 : i32, i32
  }
  func.func @transform_4(%arg0: i32) -> (i32, i32) {
    %c0_i32 = arith.constant 0 : i32
    %c0_i32_0 = arith.constant 0 : i32
    %c0_i32_1 = arith.constant 0 : i32
    return %c0_i32, %c0_i32_0 : i32, i32
  }
  func.func @transform_5(%arg0: i32) -> (i32, i32, i32) {
    %c0_i32 = arith.constant 0 : i32
    %c0_i32_0 = arith.constant 0 : i32
    %c0_i32_1 = arith.constant 0 : i32
    %c0_i32_2 = arith.constant 0 : i32
    return %c0_i32, %c0_i32_0, %c0_i32_1 : i32, i32, i32
  }
  func.func @transform_6(%arg0: i32) -> (i32, i32, i32) {
    %c0_i32 = arith.constant 0 : i32
    %c0_i32_0 = arith.constant 0 : i32
    %c0_i32_1 = arith.constant 0 : i32
    %c0_i32_2 = arith.constant 0 : i32
    return %c0_i32, %c0_i32_0, %c0_i32_1 : i32, i32, i32
  }
  func.func @transform_7(%arg0: i32) -> (i32, i32) {
    %c0_i32 = arith.constant 0 : i32
    %c0_i32_0 = arith.constant 0 : i32
    %c0_i32_1 = arith.constant 0 : i32
    return %c0_i32, %c0_i32_0 : i32, i32
  }
  func.func @transform_8(%arg0: i32) -> (i32, i32) {
    %c0_i32 = arith.constant 0 : i32
    %c0_i32_0 = arith.constant 0 : i32
    %c0_i32_1 = arith.constant 0 : i32
    return %c0_i32, %c0_i32_0 : i32, i32
  }
  func.func @transform_9(%arg0: i32) -> (i32, i32) {
    %c0_i32 = arith.constant 0 : i32
    %c0_i32_0 = arith.constant 0 : i32
    %c0_i32_1 = arith.constant 0 : i32
    return %c0_i32, %c0_i32_0 : i32, i32
  }
  func.func @transform_10(%arg0: i32) -> (i32, i32) {
    %c0_i32 = arith.constant 0 : i32
    %c0_i32_0 = arith.constant 0 : i32
    %c0_i32_1 = arith.constant 0 : i32
    return %c0_i32, %c0_i32_0 : i32, i32
  }
  func.func @transform_11(%arg0: i32) -> (i32, i32) {
    %c0_i32 = arith.constant 0 : i32
    %c0_i32_0 = arith.constant 0 : i32
    %c0_i32_1 = arith.constant 0 : i32
    return %c0_i32, %c0_i32_0 : i32, i32
  }
  func.func @transform_12(%arg0: i32) -> (i32, i32) {
    %c0_i32 = arith.constant 0 : i32
    %c0_i32_0 = arith.constant 0 : i32
    %c0_i32_1 = arith.constant 0 : i32
    return %c0_i32, %c0_i32_0 : i32, i32
  }
  func.func @transform_13(%arg0: i32) -> (i32, i32, i32) {
    %c0_i32 = arith.constant 0 : i32
    %c0_i32_0 = arith.constant 0 : i32
    %c0_i32_1 = arith.constant 0 : i32
    return %arg0, %c0_i32, %c0_i32_0 : i32, i32, i32
  }
}

</mosaic_0001>

<llo_original>
// kernel: inception1d_block_forward.3
$region0: #{inception1d_block_forward.3}
  #allocation0 [shape = 'u32[]', space=smem, size = 0x4, offset = 0x4, fixed_abs, tag = 'smem constant byte address 0x4 - core index']
  #allocation1 [shape = 'u32[144,128]{1,0:T(1,128)}', space=vmem, size = 0x12000, scoped, tag = 'internal scratch']
  %s0 = inlined_call_operand.vmem [shape: f32[2,4,128], index: 0, kind: input, shape index: {}]
  %s1 = inlined_call_operand.vmem [shape: f32[16,4], index: 1, kind: input, shape index: {}]
  %s2 = inlined_call_operand.vmem [shape: f32[8,4], index: 2, kind: input, shape index: {}]
  %s3 = inlined_call_operand.vmem [shape: f32[16,1], index: 3, kind: output, shape index: {0}]
  %s4 = inlined_call_operand.vmem [shape: f32[16,1], index: 4, kind: output, shape index: {1}]
  %s5 = inlined_call_operand.vmem [shape: f32[8,1], index: 5, kind: output, shape index: {2}]
  %s6 = inlined_call_operand.vmem [shape: f32[8,1], index: 6, kind: output, shape index: {3}]
  %7 = xla_tuple %s3, %s4, %s5, %s6
  %s8 = sld [smem:[#allocation0]]
  $region50: #{inception1d_block_forward.3} parent=0
    _
  %s10 = ssub.s32 1, %s8
  %s11 = scalar_select 0, %s10, %s8
  // Predicated region
  $region2: #{inception1d_block_forward.3} parent=0 // pred_check
    _
  $region3: #{inception1d_block_forward.3} parent=0 // pred_check_branch
    %13 = sbr.rel (0) target = $region5
  $region4: #{inception1d_block_forward.3} parent=0 // pred_region
    _
  $region5: #{inception1d_block_forward.3} parent=0 // pred_fallthru
    _
  // Predicated region
  $region6: #{inception1d_block_forward.3} parent=0 // pred_check
    _
  $region7: #{inception1d_block_forward.3} parent=0 // pred_check_branch
    %15 = sbr.rel (0) target = $region9
  $region8: #{inception1d_block_forward.3} parent=0 // pred_region
    _
  $region9: #{inception1d_block_forward.3} parent=0 // pred_fallthru
    _
  // Predicated region
  $region10: #{inception1d_block_forward.3} parent=0 // pred_check
    _
  $region11: #{inception1d_block_forward.3} parent=0 // pred_check_branch
    %17 = sbr.rel (0) target = $region13
  $region12: #{inception1d_block_forward.3} parent=0 // pred_region
    _
  $region13: #{inception1d_block_forward.3} parent=0 // pred_fallthru
    _
  %p18 = scmp.eq.s32.totalorder 0, 0
  // Predicated region
  $region14: #{inception1d_block_forward.3} parent=0 // pred_check
    %p19 = pneg %p18
  $region15: #{inception1d_block_forward.3} parent=0 // pred_check_branch
    %21 = sbr.rel (%p19) target = $region17
  $region16: #{inception1d_block_forward.3} parent=0 // pred_region
    %vm22 = vcmask 7168
    %23 = vst.msk [vmem:[%s3] sm:$0xff] %vm22, 0.0
    %24 = vst.msk [vmem:[%s3 + $0x8] sm:$0xff] %vm22, 0.0
    %25 = vst.msk [vmem:[%s4] sm:$0xff] %vm22, 0.0
    %26 = vst.msk [vmem:[%s4 + $0x8] sm:$0xff] %vm22, 0.0
    %27 = vst.msk [vmem:[%s5] sm:$0xff] %vm22, 0.0
    %28 = vst.msk [vmem:[%s6] sm:$0xff] %vm22, 0.0
  $region17: #{inception1d_block_forward.3} parent=0 // pred_fallthru
    _
  %v29 = vld [vmem:[%s0] sm:$0xf]
  %v30 = vld [vmem:[%s0 + $0x4] sm:$0xf]
  %v31 = vlaneseq
  %v32 = vand.u32 %v31, 127
  %vm33 = vcmp.ge.s32.totalorder %v32, 1
  %34 = vrot.lane.b32.xlu0 %v29, 1
  %v35 = vpop.permute.xlu0 %34
  %36 = vrot.lane.b32.xlu0 %v30, 1
  %v37 = vpop.permute.xlu0 %36
  %v38 = vsel %vm33, %v35, -inf
  %v39 = vsel %vm33, %v37, -inf
  %vm40 = vcmp.lt.s32.totalorder %v32, 127
  %41 = vrot.lane.b32.xlu0 %v29, 127
  %v42 = vpop.permute.xlu0 %41
  %43 = vrot.lane.b32.xlu0 %v30, 127
  %v44 = vpop.permute.xlu0 %43
  %v45 = vsel %vm40, %v42, -inf
  %v46 = vsel %vm40, %v44, -inf
  %v47 = vmax.f32 %v38, %v29
  %v48 = vmax.f32 %v39, %v30
  %v49 = vmax.f32 %v47, %v45
  %v50 = vmax.f32 %v48, %v46
  %v51 = vld [vmem:[%s1] sm:$0xff]
  %v52 = vld [vmem:[%s1 + $0x8] sm:$0xff]
  %v53 = vld [vmem:[%s2] sm:$0xff]
  %vm54 = vcmask 31744
  %v56 = vsel %vm54, %v51, 0
  %v59 = vsel %vm54, %v52, 0
  %vm61 = vcmask 1043456
  %v63 = vsel %vm61, %v29, 0
  %65 = vmatprep.subr.mxu0 0.0
  %66 = vmatpush1.msra.mxu0 %v63
  %67 = vmatprep.subr.mxu0 0.0
  %68 = vmatpush1.msra.mxu0 0.0
  %69 = vmatprep.subr.mxu0 0.0
  %70 = vmatpush1.msra.mxu0 0.0
  %71 = vmatprep.subr.mxu0 0.0
  %72 = vmatpush1.msra.mxu0 0.0
  %73 = vmatprep.subr.mxu0 0.0
  %74 = vmatpush1.msra.mxu0 0.0
  %75 = vmatprep.subr.mxu0 0.0
  %76 = vmatpush1.msra.mxu0 0.0
  %77 = vmatprep.subr.mxu0 0.0
  %78 = vmatpush1.msra.mxu0 0.0
  %79 = vmatprep.subr.mxu0 0.0
  %80 = vmatpush1.msra.mxu0 0.0
  %81 = vmatprep.subr.mxu0 0.0
  %82 = vmatpush1.msra.mxu0 0.0
  %83 = vmatprep.subr.mxu0 0.0
  %84 = vmatpush1.msra.mxu0 0.0
  %85 = vmatprep.subr.mxu0 0.0
  %86 = vmatpush1.msra.mxu0 0.0
  %87 = vmatprep.subr.mxu0 0.0
  %88 = vmatpush1.msra.mxu0 0.0
  %89 = vmatprep.subr.mxu0 0.0
  %90 = vmatpush1.msra.mxu0 0.0
  %91 = vmatprep.subr.mxu0 0.0
  %92 = vmatpush1.msra.mxu0 0.0
  %93 = vmatprep.subr.mxu0 0.0
  %94 = vmatpush1.msra.mxu0 0.0
  %95 = vmatprep.subr.mxu0 0.0
  %96 = vmatpush1.msra.mxu0 0.0
  %97 = vmatprep.subr.mxu0 0.0
  %98 = vmatpush1.msra.mxu0 0.0
  %99 = vmatprep.subr.mxu0 0.0
  %100 = vmatpush1.msra.mxu0 0.0
  %101 = vmatprep.subr.mxu0 0.0
  %102 = vmatpush1.msra.mxu0 0.0
  %103 = vmatprep.subr.mxu0 0.0
  %104 = vmatpush1.msra.mxu0 0.0
  %105 = vmatprep.subr.mxu0 0.0
  %106 = vmatpush1.msra.mxu0 0.0
  %107 = vmatprep.subr.mxu0 0.0
  %108 = vmatpush1.msra.mxu0 0.0
  %109 = vmatprep.subr.mxu0 0.0
  %110 = vmatpush1.msra.mxu0 0.0
  %111 = vmatprep.subr.mxu0 0.0
  %112 = vmatpush1.msra.mxu0 0.0
  %113 = vmatprep.subr.mxu0 0.0
  %114 = vmatpush1.msra.mxu0 0.0
  %115 = vmatprep.subr.mxu0 0.0
  %116 = vmatpush1.msra.mxu0 0.0
  %117 = vmatprep.subr.mxu0 0.0
  %118 = vmatpush1.msra.mxu0 0.0
  %119 = vmatprep.subr.mxu0 0.0
  %120 = vmatpush1.msra.mxu0 0.0
  %121 = vmatprep.subr.mxu0 0.0
  %122 = vmatpush1.msra.mxu0 0.0
  %123 = vmatprep.subr.mxu0 0.0
  %124 = vmatpush1.msra.mxu0 0.0
  %125 = vmatprep.subr.mxu0 0.0
  %126 = vmatpush1.msra.mxu0 0.0
  %127 = vmatprep.subr.mxu0 0.0
  %128 = vmatpush1.msra.mxu0 0.0
  %129 = vmatprep.mubr.f32.mxu0 0.0
  %130 = vmatmul.mubr.f32.gmra.mrb[0].mxu0 %v56
  %v131 = vpop.f32.mrb[0].mxu0
  %v132 = vadd.f32 0.0, %v131
  %v133 = vpop.f32.mrb[0].mxu0
  %134 = vmatprep.mubr.f32.mxu0 0.0
  %135 = vmatmul.mubr.f32.gmra.mrb[0].mxu0 %v59
  %v136 = vpop.f32.mrb[0].mxu0
  %v137 = vadd.f32 0.0, %v136
  %v138 = vpop.f32.mrb[0].mxu0
  %139 = vdwg.mxu0
  %v141 = vsel %vm54, %v53, 0
  %v144 = vsel %vm61, %v49, 0
  %146 = vmatprep.subr.mxu0 0.0
  %147 = vmatpush1.msra.mxu0 %v144
  %148 = vmatprep.subr.mxu0 0.0
  %149 = vmatpush1.msra.mxu0 0.0
  %150 = vmatprep.subr.mxu0 0.0
  %151 = vmatpush1.msra.mxu0 0.0
  %152 = vmatprep.subr.mxu0 0.0
  %153 = vmatpush1.msra.mxu0 0.0
  %154 = vmatprep.subr.mxu0 0.0
  %155 = vmatpush1.msra.mxu0 0.0
  %156 = vmatprep.subr.mxu0 0.0
  %157 = vmatpush1.msra.mxu0 0.0
  %158 = vmatprep.subr.mxu0 0.0
  %159 = vmatpush1.msra.mxu0 0.0
  %160 = vmatprep.subr.mxu0 0.0
  %161 = vmatpush1.msra.mxu0 0.0
  %162 = vmatprep.subr.mxu0 0.0
  %163 = vmatpush1.msra.mxu0 0.0
  %164 = vmatprep.subr.mxu0 0.0
  %165 = vmatpush1.msra.mxu0 0.0
  %166 = vmatprep.subr.mxu0 0.0
  %167 = vmatpush1.msra.mxu0 0.0
  %168 = vmatprep.subr.mxu0 0.0
  %169 = vmatpush1.msra.mxu0 0.0
  %170 = vmatprep.subr.mxu0 0.0
  %171 = vmatpush1.msra.mxu0 0.0
  %172 = vmatprep.subr.mxu0 0.0
  %173 = vmatpush1.msra.mxu0 0.0
  %174 = vmatprep.subr.mxu0 0.0
  %175 = vmatpush1.msra.mxu0 0.0
  %176 = vmatprep.subr.mxu0 0.0
  %177 = vmatpush1.msra.mxu0 0.0
  %178 = vmatprep.subr.mxu0 0.0
  %179 = vmatpush1.msra.mxu0 0.0
  %180 = vmatprep.subr.mxu0 0.0
  %181 = vmatpush1.msra.mxu0 0.0
  %182 = vmatprep.subr.mxu0 0.0
  %183 = vmatpush1.msra.mxu0 0.0
  %184 = vmatprep.subr.mxu0 0.0
  %185 = vmatpush1.msra.mxu0 0.0
  %186 = vmatprep.subr.mxu0 0.0
  %187 = vmatpush1.msra.mxu0 0.0
  %188 = vmatprep.subr.mxu0 0.0
  %189 = vmatpush1.msra.mxu0 0.0
  %190 = vmatprep.subr.mxu0 0.0
  %191 = vmatpush1.msra.mxu0 0.0
  %192 = vmatprep.subr.mxu0 0.0
  %193 = vmatpush1.msra.mxu0 0.0
  %194 = vmatprep.subr.mxu0 0.0
  %195 = vmatpush1.msra.mxu0 0.0
  %196 = vmatprep.subr.mxu0 0.0
  %197 = vmatpush1.msra.mxu0 0.0
  %198 = vmatprep.subr.mxu0 0.0
  %199 = vmatpush1.msra.mxu0 0.0
  %200 = vmatprep.subr.mxu0 0.0
  %201 = vmatpush1.msra.mxu0 0.0
  %202 = vmatprep.subr.mxu0 0.0
  %203 = vmatpush1.msra.mxu0 0.0
  %204 = vmatprep.subr.mxu0 0.0
  %205 = vmatpush1.msra.mxu0 0.0
  %206 = vmatprep.subr.mxu0 0.0
  %207 = vmatpush1.msra.mxu0 0.0
  %208 = vmatprep.subr.mxu0 0.0
  %209 = vmatpush1.msra.mxu0 0.0
  %210 = vmatprep.mubr.f32.mxu0 0.0
  %211 = vmatmul.mubr.f32.gmra.mrb[0].mxu0 %v141
  %v212 = vpop.f32.mrb[0].mxu0
  %v213 = vadd.f32 0.0, %v212
  %v214 = vpop.f32.mrb[0].mxu0
  %215 = vdwg.mxu0
  %216 = vadd.xlane.f32.xlu0 %v132
  %v217 = vpop.xlane.xlu0 %216
  %218 = vadd.xlane.f32.xlu0 %v137
  %v219 = vpop.xlane.xlu0 %218
  %v220 = vadd.f32 %v217, 0.0
  %v221 = vadd.f32 %v219, 0.0
  %v222 = vmul.f32 %v132, %v132
  %v223 = vmul.f32 %v137, %v137
  %224 = vadd.xlane.f32.xlu0 %v222
  %v225 = vpop.xlane.xlu0 %224
  %226 = vadd.xlane.f32.xlu0 %v223
  %v227 = vpop.xlane.xlu0 %226
  %v228 = vadd.f32 %v225, 0.0
  %v229 = vadd.f32 %v227, 0.0
  %230 = vadd.xlane.f32.xlu0 %v213
  %v231 = vpop.xlane.xlu0 %230
  %v232 = vadd.f32 %v231, 0.0
  %v233 = vmul.f32 %v213, %v213
  %234 = vadd.xlane.f32.xlu0 %v233
  %v235 = vpop.xlane.xlu0 %234
  %v236 = vadd.f32 %v235, 0.0
  %v238 = vsel %vm61, %v30, 0
  %240 = vmatprep.subr.mxu0 0.0
  %241 = vmatpush1.msra.mxu0 %v238
  %242 = vmatprep.subr.mxu0 0.0
  %243 = vmatpush1.msra.mxu0 0.0
  %244 = vmatprep.subr.mxu0 0.0
  %245 = vmatpush1.msra.mxu0 0.0
  %246 = vmatprep.subr.mxu0 0.0
  %247 = vmatpush1.msra.mxu0 0.0
  %248 = vmatprep.subr.mxu0 0.0
  %249 = vmatpush1.msra.mxu0 0.0
  %250 = vmatprep.subr.mxu0 0.0
  %251 = vmatpush1.msra.mxu0 0.0
  %252 = vmatprep.subr.mxu0 0.0
  %253 = vmatpush1.msra.mxu0 0.0
  %254 = vmatprep.subr.mxu0 0.0
  %255 = vmatpush1.msra.mxu0 0.0
  %256 = vmatprep.subr.mxu0 0.0
  %257 = vmatpush1.msra.mxu0 0.0
  %258 = vmatprep.subr.mxu0 0.0
  %259 = vmatpush1.msra.mxu0 0.0
  %260 = vmatprep.subr.mxu0 0.0
  %261 = vmatpush1.msra.mxu0 0.0
  %262 = vmatprep.subr.mxu0 0.0
  %263 = vmatpush1.msra.mxu0 0.0
  %264 = vmatprep.subr.mxu0 0.0
  %265 = vmatpush1.msra.mxu0 0.0
  %266 = vmatprep.subr.mxu0 0.0
  %267 = vmatpush1.msra.mxu0 0.0
  %268 = vmatprep.subr.mxu0 0.0
  %269 = vmatpush1.msra.mxu0 0.0
  %270 = vmatprep.subr.mxu0 0.0
  %271 = vmatpush1.msra.mxu0 0.0
  %272 = vmatprep.subr.mxu0 0.0
  %273 = vmatpush1.msra.mxu0 0.0
  %274 = vmatprep.subr.mxu0 0.0
  %275 = vmatpush1.msra.mxu0 0.0
  %276 = vmatprep.subr.mxu0 0.0
  %277 = vmatpush1.msra.mxu0 0.0
  %278 = vmatprep.subr.mxu0 0.0
  %279 = vmatpush1.msra.mxu0 0.0
  %280 = vmatprep.subr.mxu0 0.0
  %281 = vmatpush1.msra.mxu0 0.0
  %282 = vmatprep.subr.mxu0 0.0
  %283 = vmatpush1.msra.mxu0 0.0
  %284 = vmatprep.subr.mxu0 0.0
  %285 = vmatpush1.msra.mxu0 0.0
  %286 = vmatprep.subr.mxu0 0.0
  %287 = vmatpush1.msra.mxu0 0.0
  %288 = vmatprep.subr.mxu0 0.0
  %289 = vmatpush1.msra.mxu0 0.0
  %290 = vmatprep.subr.mxu0 0.0
  %291 = vmatpush1.msra.mxu0 0.0
  %292 = vmatprep.subr.mxu0 0.0
  %293 = vmatpush1.msra.mxu0 0.0
  %294 = vmatprep.subr.mxu0 0.0
  %295 = vmatpush1.msra.mxu0 0.0
  %296 = vmatprep.subr.mxu0 0.0
  %297 = vmatpush1.msra.mxu0 0.0
  %298 = vmatprep.subr.mxu0 0.0
  %299 = vmatpush1.msra.mxu0 0.0
  %300 = vmatprep.subr.mxu0 0.0
  %301 = vmatpush1.msra.mxu0 0.0
  %302 = vmatprep.subr.mxu0 0.0
  %303 = vmatpush1.msra.mxu0 0.0
  %304 = vmatprep.mubr.f32.mxu0 0.0
  %305 = vmatmul.mubr.f32.gmra.mrb[0].mxu0 %v56
  %v306 = vpop.f32.mrb[0].mxu0
  %v307 = vadd.f32 0.0, %v306
  %v308 = vpop.f32.mrb[0].mxu0
  %309 = vmatprep.mubr.f32.mxu0 0.0
  %310 = vmatmul.mubr.f32.gmra.mrb[0].mxu0 %v59
  %v311 = vpop.f32.mrb[0].mxu0
  %v312 = vadd.f32 0.0, %v311
  %v313 = vpop.f32.mrb[0].mxu0
  %314 = vdwg.mxu0
  %v316 = vsel %vm61, %v50, 0
  %318 = vmatprep.subr.mxu0 0.0
  %319 = vmatpush1.msra.mxu0 %v316
  %320 = vmatprep.subr.mxu0 0.0
  %321 = vmatpush1.msra.mxu0 0.0
  %322 = vmatprep.subr.mxu0 0.0
  %323 = vmatpush1.msra.mxu0 0.0
  %324 = vmatprep.subr.mxu0 0.0
  %325 = vmatpush1.msra.mxu0 0.0
  %326 = vmatprep.subr.mxu0 0.0
  %327 = vmatpush1.msra.mxu0 0.0
  %328 = vmatprep.subr.mxu0 0.0
  %329 = vmatpush1.msra.mxu0 0.0
  %330 = vmatprep.subr.mxu0 0.0
  %331 = vmatpush1.msra.mxu0 0.0
  %332 = vmatprep.subr.mxu0 0.0
  %333 = vmatpush1.msra.mxu0 0.0
  %334 = vmatprep.subr.mxu0 0.0
  %335 = vmatpush1.msra.mxu0 0.0
  %336 = vmatprep.subr.mxu0 0.0
  %337 = vmatpush1.msra.mxu0 0.0
  %338 = vmatprep.subr.mxu0 0.0
  %339 = vmatpush1.msra.mxu0 0.0
  %340 = vmatprep.subr.mxu0 0.0
  %341 = vmatpush1.msra.mxu0 0.0
  %342 = vmatprep.subr.mxu0 0.0
  %343 = vmatpush1.msra.mxu0 0.0
  %344 = vmatprep.subr.mxu0 0.0
  %345 = vmatpush1.msra.mxu0 0.0
  %346 = vmatprep.subr.mxu0 0.0
  %347 = vmatpush1.msra.mxu0 0.0
  %348 = vmatprep.subr.mxu0 0.0
  %349 = vmatpush1.msra.mxu0 0.0
  %350 = vmatprep.subr.mxu0 0.0
  %351 = vmatpush1.msra.mxu0 0.0
  %352 = vmatprep.subr.mxu0 0.0
  %353 = vmatpush1.msra.mxu0 0.0
  %354 = vmatprep.subr.mxu0 0.0
  %355 = vmatpush1.msra.mxu0 0.0
  %356 = vmatprep.subr.mxu0 0.0
  %357 = vmatpush1.msra.mxu0 0.0
  %358 = vmatprep.subr.mxu0 0.0
  %359 = vmatpush1.msra.mxu0 0.0
  %360 = vmatprep.subr.mxu0 0.0
  %361 = vmatpush1.msra.mxu0 0.0
  %362 = vmatprep.subr.mxu0 0.0
  %363 = vmatpush1.msra.mxu0 0.0
  %364 = vmatprep.subr.mxu0 0.0
  %365 = vmatpush1.msra.mxu0 0.0
  %366 = vmatprep.subr.mxu0 0.0
  %367 = vmatpush1.msra.mxu0 0.0
  %368 = vmatprep.subr.mxu0 0.0
  %369 = vmatpush1.msra.mxu0 0.0
  %370 = vmatprep.subr.mxu0 0.0
  %371 = vmatpush1.msra.mxu0 0.0
  %372 = vmatprep.subr.mxu0 0.0
  %373 = vmatpush1.msra.mxu0 0.0
  %374 = vmatprep.subr.mxu0 0.0
  %375 = vmatpush1.msra.mxu0 0.0
  %376 = vmatprep.subr.mxu0 0.0
  %377 = vmatpush1.msra.mxu0 0.0
  %378 = vmatprep.subr.mxu0 0.0
  %379 = vmatpush1.msra.mxu0 0.0
  %380 = vmatprep.subr.mxu0 0.0
  %381 = vmatpush1.msra.mxu0 0.0
  %382 = vmatprep.mubr.f32.mxu0 0.0
  %383 = vmatmul.mubr.f32.gmra.mrb[0].mxu0 %v141
  %v384 = vpop.f32.mrb[0].mxu0
  %v385 = vadd.f32 0.0, %v384
  %v386 = vpop.f32.mrb[0].mxu0
  %387 = vdwg.mxu0
  %388 = vadd.xlane.f32.xlu0 %v307
  %v389 = vpop.xlane.xlu0 %388
  %390 = vadd.xlane.f32.xlu0 %v312
  %v391 = vpop.xlane.xlu0 %390
  %v392 = vadd.f32 %v220, %v389
  %v393 = vadd.f32 %v221, %v391
  %v394 = vmul.f32 %v307, %v307
  %v395 = vmul.f32 %v312, %v312
  %396 = vadd.xlane.f32.xlu0 %v394
  %v397 = vpop.xlane.xlu0 %396
  %398 = vadd.xlane.f32.xlu0 %v395
  %v399 = vpop.xlane.xlu0 %398
  %v400 = vadd.f32 %v228, %v397
  %v401 = vadd.f32 %v229, %v399
  %402 = vadd.xlane.f32.xlu0 %v385
  %v403 = vpop.xlane.xlu0 %402
  %v404 = vadd.f32 %v232, %v403
  %v405 = vmul.f32 %v385, %v385
  %406 = vadd.xlane.f32.xlu0 %v405
  %v407 = vpop.xlane.xlu0 %406
  %v408 = vadd.f32 %v236, %v407
  %v409 = vld [vmem:[%s3] sm:$0xff]
  %v410 = vld [vmem:[%s3 + $0x8] sm:$0xff]
  %v411 = vadd.f32 %v409, %v392
  %v412 = vadd.f32 %v410, %v393
  %vm413 = vcmask 7168
  %414 = vst.msk [vmem:[%s3] sm:$0xff] %vm413, %v411
  %415 = vst.msk [vmem:[%s3 + $0x8] sm:$0xff] %vm413, %v412
  %v416 = vld [vmem:[%s4] sm:$0xff]
  %v417 = vld [vmem:[%s4 + $0x8] sm:$0xff]
  %v418 = vadd.f32 %v416, %v400
  %v419 = vadd.f32 %v417, %v401
  %420 = vst.msk [vmem:[%s4] sm:$0xff] %vm413, %v418
  %421 = vst.msk [vmem:[%s4 + $0x8] sm:$0xff] %vm413, %v419
  %v422 = vld [vmem:[%s5] sm:$0xff]
  %v423 = vadd.f32 %v422, %v404
  %424 = vst.msk [vmem:[%s5] sm:$0xff] %vm413, %v423
  %v425 = vld [vmem:[%s6] sm:$0xff]
  %v426 = vadd.f32 %v425, %v408
  %427 = vst.msk [vmem:[%s6] sm:$0xff] %vm413, %v426
  // Predicated region
  $region18: #{inception1d_block_forward.3} parent=0 // pred_check
    _
  $region19: #{inception1d_block_forward.3} parent=0 // pred_check_branch
    %429 = sbr.rel (0) target = $region21
  $region20: #{inception1d_block_forward.3} parent=0 // pred_region
    _
  $region21: #{inception1d_block_forward.3} parent=0 // pred_fallthru
    _
  // Predicated region
  $region22: #{inception1d_block_forward.3} parent=0 // pred_check
    _
  $region23: #{inception1d_block_forward.3} parent=0 // pred_check_branch
    %431 = sbr.rel (0) target = $region25
  $region24: #{inception1d_block_forward.3} parent=0 // pred_region
    _
  $region25: #{inception1d_block_forward.3} parent=0 // pred_fallthru
    _
  // Predicated region
  $region26: #{inception1d_block_forward.3} parent=0 // pred_check
    _
  $region27: #{inception1d_block_forward.3} parent=0 // pred_check_branch
    %433 = sbr.rel (0) target = $region29
  $region28: #{inception1d_block_forward.3} parent=0 // pred_region
    _
  $region29: #{inception1d_block_forward.3} parent=0 // pred_fallthru
    _
  // Predicated region
  $region30: #{inception1d_block_forward.3} parent=0 // pred_check
    _
  $region31: #{inception1d_block_forward.3} parent=0 // pred_check_branch
    %435 = sbr.rel (0) target = $region33
  $region32: #{inception1d_block_forward.3} parent=0 // pred_region
    _
  $region33: #{inception1d_block_forward.3} parent=0 // pred_fallthru
    _
  // Predicated region
  $region34: #{inception1d_block_forward.3} parent=0 // pred_check
    _
  $region35: #{inception1d_block_forward.3} parent=0 // pred_check_branch
    %437 = sbr.rel (0) target = $region37
  $region36: #{inception1d_block_forward.3} parent=0 // pred_region
    _
  $region37: #{inception1d_block_forward.3} parent=0 // pred_fallthru
    _
  // Predicated region
  $region38: #{inception1d_block_forward.3} parent=0 // pred_check
    _
  $region39: #{inception1d_block_forward.3} parent=0 // pred_check_branch
    %439 = sbr.rel (0) target = $region41
  $region40: #{inception1d_block_forward.3} parent=0 // pred_region
    _
  $region41: #{inception1d_block_forward.3} parent=0 // pred_fallthru
    _
  // Predicated region
  $region42: #{inception1d_block_forward.3} parent=0 // pred_check
    _
  $region43: #{inception1d_block_forward.3} parent=0 // pred_check_branch
    %441 = sbr.rel (0) target = $region45
  $region44: #{inception1d_block_forward.3} parent=0 // pred_region
    _
  $region45: #{inception1d_block_forward.3} parent=0 // pred_fallthru
    _
  // Predicated region
  $region46: #{inception1d_block_forward.3} parent=0 // pred_check
    _
  $region47: #{inception1d_block_forward.3} parent=0 // pred_check_branch
    %443 = sbr.rel (0) target = $region49
  $region48: #{inception1d_block_forward.3} parent=0 // pred_region
    _
  $region49: #{inception1d_block_forward.3} parent=0 // pred_fallthru
    _

// kernel: inception1d_block_forward.4
$region0: #{inception1d_block_forward.4}
  #allocation0 [shape = 'u32[]', space=smem, size = 0x4, offset = 0x4, fixed_abs, tag = 'smem constant byte address 0x4 - core index']
  #allocation1 [shape = 'u32[144,128]{1,0:T(1,128)}', space=vmem, size = 0x12000, scoped, tag = 'internal scratch']
  %s0 = inlined_call_operand.vmem [shape: f32[2,4,128], index: 0, kind: input, shape index: {}]
  %s1 = inlined_call_operand.vmem [shape: f32[4,4], index: 1, kind: input, shape index: {}]
  %s2 = inlined_call_operand.vmem [shape: f32[4,4], index: 2, kind: input, shape index: {}]
  %s3 = inlined_call_operand.vmem [shape: f32[4,2], index: 3, kind: input, shape index: {}]
  %s4 = inlined_call_operand.vmem [shape: f32[4,2], index: 4, kind: input, shape index: {}]
  %s5 = inlined_call_operand.vmem [shape: f32[3,8,4], index: 5, kind: input, shape index: {}]
  %s6 = inlined_call_operand.vmem [shape: f32[5,8,4], index: 6, kind: input, shape index: {}]
  %s7 = inlined_call_operand.vmem [shape: f32[8,1], index: 7, kind: output, shape index: {0}]
  %s8 = inlined_call_operand.vmem [shape: f32[8,1], index: 8, kind: output, shape index: {1}]
  %s9 = inlined_call_operand.vmem [shape: f32[8,1], index: 9, kind: output, shape index: {2}]
  %s10 = inlined_call_operand.vmem [shape: f32[8,1], index: 10, kind: output, shape index: {3}]
  %11 = xla_tuple %s7, %s8, %s9, %s10
  %s12 = sld [smem:[#allocation0]]
  $region66: #{inception1d_block_forward.4} parent=0
    _
  %s14 = ssub.s32 1, %s12
  %s15 = scalar_select 0, %s14, %s12
  // Predicated region
  $region2: #{inception1d_block_forward.4} parent=0 // pred_check
    _
  $region3: #{inception1d_block_forward.4} parent=0 // pred_check_branch
    %17 = sbr.rel (0) target = $region5
  $region4: #{inception1d_block_forward.4} parent=0 // pred_region
    _
  $region5: #{inception1d_block_forward.4} parent=0 // pred_fallthru
    _
  // Predicated region
  $region6: #{inception1d_block_forward.4} parent=0 // pred_check
    _
  $region7: #{inception1d_block_forward.4} parent=0 // pred_check_branch
    %19 = sbr.rel (0) target = $region9
  $region8: #{inception1d_block_forward.4} parent=0 // pred_region
    _
  $region9: #{inception1d_block_forward.4} parent=0 // pred_fallthru
    _
  // Predicated region
  $region10: #{inception1d_block_forward.4} parent=0 // pred_check
    _
  $region11: #{inception1d_block_forward.4} parent=0 // pred_check_branch
    %21 = sbr.rel (0) target = $region13
  $region12: #{inception1d_block_forward.4} parent=0 // pred_region
    _
  $region13: #{inception1d_block_forward.4} parent=0 // pred_fallthru
    _
  // Predicated region
  $region14: #{inception1d_block_forward.4} parent=0 // pred_check
    _
  $region15: #{inception1d_block_forward.4} parent=0 // pred_check_branch
    %23 = sbr.rel (0) target = $region17
  $region16: #{inception1d_block_forward.4} parent=0 // pred_region
    _
  $region17: #{inception1d_block_forward.4} parent=0 // pred_fallthru
    _
  // Predicated region
  $region18: #{inception1d_block_forward.4} parent=0 // pred_check
    _
  $region19: #{inception1d_block_forward.4} parent=0 // pred_check_branch
    %25 = sbr.rel (0) target = $region21
  $region20: #{inception1d_block_forward.4} parent=0 // pred_region
    _
  $region21: #{inception1d_block_forward.4} parent=0 // pred_fallthru
    _
  // Predicated region
  $region22: #{inception1d_block_forward.4} parent=0 // pred_check
    _
  $region23: #{inception1d_block_forward.4} parent=0 // pred_check_branch
    %27 = sbr.rel (0) target = $region25
  $region24: #{inception1d_block_forward.4} parent=0 // pred_region
    _
  $region25: #{inception1d_block_forward.4} parent=0 // pred_fallthru
    _
  // Predicated region
  $region26: #{inception1d_block_forward.4} parent=0 // pred_check
    _
  $region27: #{inception1d_block_forward.4} parent=0 // pred_check_branch
    %29 = sbr.rel (0) target = $region29
  $region28: #{inception1d_block_forward.4} parent=0 // pred_region
    _
  $region29: #{inception1d_block_forward.4} parent=0 // pred_fallthru
    _
  %p30 = scmp.eq.s32.totalorder 0, 0
  // Predicated region
  $region30: #{inception1d_block_forward.4} parent=0 // pred_check
    %p31 = pneg %p30
  $region31: #{inception1d_block_forward.4} parent=0 // pred_check_branch
    %33 = sbr.rel (%p31) target = $region33
  $region32: #{inception1d_block_forward.4} parent=0 // pred_region
    %vm34 = vcmask 7168
    %35 = vst.msk [vmem:[%s7] sm:$0xff] %vm34, 0.0
    %36 = vst.msk [vmem:[%s8] sm:$0xff] %vm34, 0.0
    %37 = vst.msk [vmem:[%s9] sm:$0xff] %vm34, 0.0
    %38 = vst.msk [vmem:[%s10] sm:$0xff] %vm34, 0.0
  $region33: #{inception1d_block_forward.4} parent=0 // pred_fallthru
    _
  %v39 = vld [vmem:[%s0] sm:$0xf]
  %v40 = vld [vmem:[%s0 + $0x4] sm:$0xf]
  %v41 = vld [vmem:[%s1] sm:$0xf]
  %v42 = vld [vmem:[%s2] sm:$0xf]
  %v43 = vld [vmem:[%s5] sm:$0xff]
  %v44 = vld [vmem:[%s5 + $0x8] sm:$0xff]
  %v45 = vld [vmem:[%s5 + $0x10] sm:$0xff]
  %v46 = vld [vmem:[%s6] sm:$0xff]
  %v47 = vld [vmem:[%s6 + $0x8] sm:$0xff]
  %v48 = vld [vmem:[%s6 + $0x10] sm:$0xff]
  %v49 = vld [vmem:[%s6 + $0x18] sm:$0xff]
  %v50 = vld [vmem:[%s6 + $0x20] sm:$0xff]
  %v51 = vld [vmem:[%s3] sm:$0xf]
  %v52 = vld [vmem:[%s4] sm:$0xf]
  %vm53 = vcmask 31744
  %v55 = vsel %vm53, %v41, 0
  %vm57 = vcmask 1043456
  %v59 = vsel %vm57, %v39, 0
  %61 = vmatprep.subr.mxu0 0.0
  %62 = vmatpush1.msra.mxu0 %v59
  %63 = vmatprep.subr.mxu0 0.0
  %64 = vmatpush1.msra.mxu0 0.0
  %65 = vmatprep.subr.mxu0 0.0
  %66 = vmatpush1.msra.mxu0 0.0
  %67 = vmatprep.subr.mxu0 0.0
  %68 = vmatpush1.msra.mxu0 0.0
  %69 = vmatprep.subr.mxu0 0.0
  %70 = vmatpush1.msra.mxu0 0.0
  %71 = vmatprep.subr.mxu0 0.0
  %72 = vmatpush1.msra.mxu0 0.0
  %73 = vmatprep.subr.mxu0 0.0
  %74 = vmatpush1.msra.mxu0 0.0
  %75 = vmatprep.subr.mxu0 0.0
  %76 = vmatpush1.msra.mxu0 0.0
  %77 = vmatprep.subr.mxu0 0.0
  %78 = vmatpush1.msra.mxu0 0.0
  %79 = vmatprep.subr.mxu0 0.0
  %80 = vmatpush1.msra.mxu0 0.0
  %81 = vmatprep.subr.mxu0 0.0
  %82 = vmatpush1.msra.mxu0 0.0
  %83 = vmatprep.subr.mxu0 0.0
  %84 = vmatpush1.msra.mxu0 0.0
  %85 = vmatprep.subr.mxu0 0.0
  %86 = vmatpush1.msra.mxu0 0.0
  %87 = vmatprep.subr.mxu0 0.0
  %88 = vmatpush1.msra.mxu0 0.0
  %89 = vmatprep.subr.mxu0 0.0
  %90 = vmatpush1.msra.mxu0 0.0
  %91 = vmatprep.subr.mxu0 0.0
  %92 = vmatpush1.msra.mxu0 0.0
  %93 = vmatprep.subr.mxu0 0.0
  %94 = vmatpush1.msra.mxu0 0.0
  %95 = vmatprep.subr.mxu0 0.0
  %96 = vmatpush1.msra.mxu0 0.0
  %97 = vmatprep.subr.mxu0 0.0
  %98 = vmatpush1.msra.mxu0 0.0
  %99 = vmatprep.subr.mxu0 0.0
  %100 = vmatpush1.msra.mxu0 0.0
  %101 = vmatprep.subr.mxu0 0.0
  %102 = vmatpush1.msra.mxu0 0.0
  %103 = vmatprep.subr.mxu0 0.0
  %104 = vmatpush1.msra.mxu0 0.0
  %105 = vmatprep.subr.mxu0 0.0
  %106 = vmatpush1.msra.mxu0 0.0
  %107 = vmatprep.subr.mxu0 0.0
  %108 = vmatpush1.msra.mxu0 0.0
  %109 = vmatprep.subr.mxu0 0.0
  %110 = vmatpush1.msra.mxu0 0.0
  %111 = vmatprep.subr.mxu0 0.0
  %112 = vmatpush1.msra.mxu0 0.0
  %113 = vmatprep.subr.mxu0 0.0
  %114 = vmatpush1.msra.mxu0 0.0
  %115 = vmatprep.subr.mxu0 0.0
  %116 = vmatpush1.msra.mxu0 0.0
  %117 = vmatprep.subr.mxu0 0.0
  %118 = vmatpush1.msra.mxu0 0.0
  %119 = vmatprep.subr.mxu0 0.0
  %120 = vmatpush1.msra.mxu0 0.0
  %121 = vmatprep.subr.mxu0 0.0
  %122 = vmatpush1.msra.mxu0 0.0
  %123 = vmatprep.subr.mxu0 0.0
  %124 = vmatpush1.msra.mxu0 0.0
  %125 = vmatprep.mubr.f32.mxu0 0.0
  %126 = vmatmul.mubr.f32.gmra.mrb[0].mxu0 %v55
  %v127 = vpop.f32.mrb[0].mxu0
  %v128 = vadd.f32 0.0, %v127
  %v129 = vpop.f32.mrb[0].mxu0
  %130 = vdwg.mxu0
  %132 = vset.pattern.permute.xlu0 0
  %133 = vperm.xlu0 %132, %v51
  %v134 = vpop.permute.xlu0 %133
  %v136 = vmul.f32 %v128, %v134
  %137 = vset.pattern.permute.xlu0 1
  %138 = vperm.xlu0 %137, %v51
  %v139 = vpop.permute.xlu0 %138
  %v141 = vadd.f32 %v136, %v139
  %v142 = vmax.f32 %v141, 0.0
  %v143 = vlaneseq
  %v144 = vand.u32 %v143, 127
  %145 = vrot.lane.b32.xlu0 %v142, 1
  %v146 = vpop.permute.xlu0 %145
  %vm147 = vcmp.ge.s32.totalorder %v144, 1
  %v148 = vsel %vm147, %v146, 0.0
  %v150 = vsel %vm53, %v44, 0
  %v153 = vsel %vm57, %v142, 0
  %155 = vmatprep.subr.mxu0 0.0
  %156 = vmatpush1.msra.mxu0 %v153
  %157 = vmatprep.subr.mxu0 0.0
  %158 = vmatpush1.msra.mxu0 0.0
  %159 = vmatprep.subr.mxu0 0.0
  %160 = vmatpush1.msra.mxu0 0.0
  %161 = vmatprep.subr.mxu0 0.0
  %162 = vmatpush1.msra.mxu0 0.0
  %163 = vmatprep.subr.mxu0 0.0
  %164 = vmatpush1.msra.mxu0 0.0
  %165 = vmatprep.subr.mxu0 0.0
  %166 = vmatpush1.msra.mxu0 0.0
  %167 = vmatprep.subr.mxu0 0.0
  %168 = vmatpush1.msra.mxu0 0.0
  %169 = vmatprep.subr.mxu0 0.0
  %170 = vmatpush1.msra.mxu0 0.0
  %171 = vmatprep.subr.mxu0 0.0
  %172 = vmatpush1.msra.mxu0 0.0
  %173 = vmatprep.subr.mxu0 0.0
  %174 = vmatpush1.msra.mxu0 0.0
  %175 = vmatprep.subr.mxu0 0.0
  %176 = vmatpush1.msra.mxu0 0.0
  %177 = vmatprep.subr.mxu0 0.0
  %178 = vmatpush1.msra.mxu0 0.0
  %179 = vmatprep.subr.mxu0 0.0
  %180 = vmatpush1.msra.mxu0 0.0
  %181 = vmatprep.subr.mxu0 0.0
  %182 = vmatpush1.msra.mxu0 0.0
  %183 = vmatprep.subr.mxu0 0.0
  %184 = vmatpush1.msra.mxu0 0.0
  %185 = vmatprep.subr.mxu0 0.0
  %186 = vmatpush1.msra.mxu0 0.0
  %187 = vmatprep.subr.mxu0 0.0
  %188 = vmatpush1.msra.mxu0 0.0
  %189 = vmatprep.subr.mxu0 0.0
  %190 = vmatpush1.msra.mxu0 0.0
  %191 = vmatprep.subr.mxu0 0.0
  %192 = vmatpush1.msra.mxu0 0.0
  %193 = vmatprep.subr.mxu0 0.0
  %194 = vmatpush1.msra.mxu0 0.0
  %195 = vmatprep.subr.mxu0 0.0
  %196 = vmatpush1.msra.mxu0 0.0
  %197 = vmatprep.subr.mxu0 0.0
  %198 = vmatpush1.msra.mxu0 0.0
  %199 = vmatprep.subr.mxu0 0.0
  %200 = vmatpush1.msra.mxu0 0.0
  %201 = vmatprep.subr.mxu0 0.0
  %202 = vmatpush1.msra.mxu0 0.0
  %203 = vmatprep.subr.mxu0 0.0
  %204 = vmatpush1.msra.mxu0 0.0
  %205 = vmatprep.subr.mxu0 0.0
  %206 = vmatpush1.msra.mxu0 0.0
  %207 = vmatprep.subr.mxu0 0.0
  %208 = vmatpush1.msra.mxu0 0.0
  %209 = vmatprep.subr.mxu0 0.0
  %210 = vmatpush1.msra.mxu0 0.0
  %211 = vmatprep.subr.mxu0 0.0
  %212 = vmatpush1.msra.mxu0 0.0
  %213 = vmatprep.subr.mxu0 0.0
  %214 = vmatpush1.msra.mxu0 0.0
  %215 = vmatprep.subr.mxu0 0.0
  %216 = vmatpush1.msra.mxu0 0.0
  %217 = vmatprep.subr.mxu0 0.0
  %218 = vmatpush1.msra.mxu0 0.0
  %219 = vmatprep.mubr.f32.mxu0 0.0
  %220 = vmatmul.mubr.f32.gmra.mrb[0].mxu0 %v150
  %v221 = vpop.f32.mrb[0].mxu0
  %v222 = vadd.f32 0.0, %v221
  %v223 = vpop.f32.mrb[0].mxu0
  %224 = vdwg.mxu0
  %v226 = vsel %vm53, %v43, 0
  %v229 = vsel %vm57, %v148, 0
  %231 = vmatprep.subr.mxu0 0.0
  %232 = vmatpush1.msra.mxu0 %v229
  %233 = vmatprep.subr.mxu0 0.0
  %234 = vmatpush1.msra.mxu0 0.0
  %235 = vmatprep.subr.mxu0 0.0
  %236 = vmatpush1.msra.mxu0 0.0
  %237 = vmatprep.subr.mxu0 0.0
  %238 = vmatpush1.msra.mxu0 0.0
  %239 = vmatprep.subr.mxu0 0.0
  %240 = vmatpush1.msra.mxu0 0.0
  %241 = vmatprep.subr.mxu0 0.0
  %242 = vmatpush1.msra.mxu0 0.0
  %243 = vmatprep.subr.mxu0 0.0
  %244 = vmatpush1.msra.mxu0 0.0
  %245 = vmatprep.subr.mxu0 0.0
  %246 = vmatpush1.msra.mxu0 0.0
  %247 = vmatprep.subr.mxu0 0.0
  %248 = vmatpush1.msra.mxu0 0.0
  %249 = vmatprep.subr.mxu0 0.0
  %250 = vmatpush1.msra.mxu0 0.0
  %251 = vmatprep.subr.mxu0 0.0
  %252 = vmatpush1.msra.mxu0 0.0
  %253 = vmatprep.subr.mxu0 0.0
  %254 = vmatpush1.msra.mxu0 0.0
  %255 = vmatprep.subr.mxu0 0.0
  %256 = vmatpush1.msra.mxu0 0.0
  %257 = vmatprep.subr.mxu0 0.0
  %258 = vmatpush1.msra.mxu0 0.0
  %259 = vmatprep.subr.mxu0 0.0
  %260 = vmatpush1.msra.mxu0 0.0
  %261 = vmatprep.subr.mxu0 0.0
  %262 = vmatpush1.msra.mxu0 0.0
  %263 = vmatprep.subr.mxu0 0.0
  %264 = vmatpush1.msra.mxu0 0.0
  %265 = vmatprep.subr.mxu0 0.0
  %266 = vmatpush1.msra.mxu0 0.0
  %267 = vmatprep.subr.mxu0 0.0
  %268 = vmatpush1.msra.mxu0 0.0
  %269 = vmatprep.subr.mxu0 0.0
  %270 = vmatpush1.msra.mxu0 0.0
  %271 = vmatprep.subr.mxu0 0.0
  %272 = vmatpush1.msra.mxu0 0.0
  %273 = vmatprep.subr.mxu0 0.0
  %274 = vmatpush1.msra.mxu0 0.0
  %275 = vmatprep.subr.mxu0 0.0
  %276 = vmatpush1.msra.mxu0 0.0
  %277 = vmatprep.subr.mxu0 0.0
  %278 = vmatpush1.msra.mxu0 0.0
  %279 = vmatprep.subr.mxu0 0.0
  %280 = vmatpush1.msra.mxu0 0.0
  %281 = vmatprep.subr.mxu0 0.0
  %282 = vmatpush1.msra.mxu0 0.0
  %283 = vmatprep.subr.mxu0 0.0
  %284 = vmatpush1.msra.mxu0 0.0
  %285 = vmatprep.subr.mxu0 0.0
  %286 = vmatpush1.msra.mxu0 0.0
  %287 = vmatprep.subr.mxu0 0.0
  %288 = vmatpush1.msra.mxu0 0.0
  %289 = vmatprep.subr.mxu0 0.0
  %290 = vmatpush1.msra.mxu0 0.0
  %291 = vmatprep.subr.mxu0 0.0
  %292 = vmatpush1.msra.mxu0 0.0
  %293 = vmatprep.subr.mxu0 0.0
  %294 = vmatpush1.msra.mxu0 0.0
  %295 = vmatprep.mubr.f32.mxu0 0.0
  %296 = vmatmul.mubr.f32.gmra.mrb[0].mxu0 %v226
  %v297 = vpop.f32.mrb[0].mxu0
  %v298 = vadd.f32 %v222, %v297
  %v299 = vpop.f32.mrb[0].mxu0
  %300 = vdwg.mxu0
  %301 = vrot.lane.b32.xlu0 %v142, 127
  %v302 = vpop.permute.xlu0 %301
  %vm303 = vcmp.lt.s32.totalorder %v144, 127
  %v304 = vsel %vm303, %v302, 0.0
  %v306 = vsel %vm53, %v45, 0
  %v309 = vsel %vm57, %v304, 0
  %311 = vmatprep.subr.mxu0 0.0
  %312 = vmatpush1.msra.mxu0 %v309
  %313 = vmatprep.subr.mxu0 0.0
  %314 = vmatpush1.msra.mxu0 0.0
  %315 = vmatprep.subr.mxu0 0.0
  %316 = vmatpush1.msra.mxu0 0.0
  %317 = vmatprep.subr.mxu0 0.0
  %318 = vmatpush1.msra.mxu0 0.0
  %319 = vmatprep.subr.mxu0 0.0
  %320 = vmatpush1.msra.mxu0 0.0
  %321 = vmatprep.subr.mxu0 0.0
  %322 = vmatpush1.msra.mxu0 0.0
  %323 = vmatprep.subr.mxu0 0.0
  %324 = vmatpush1.msra.mxu0 0.0
  %325 = vmatprep.subr.mxu0 0.0
  %326 = vmatpush1.msra.mxu0 0.0
  %327 = vmatprep.subr.mxu0 0.0
  %328 = vmatpush1.msra.mxu0 0.0
  %329 = vmatprep.subr.mxu0 0.0
  %330 = vmatpush1.msra.mxu0 0.0
  %331 = vmatprep.subr.mxu0 0.0
  %332 = vmatpush1.msra.mxu0 0.0
  %333 = vmatprep.subr.mxu0 0.0
  %334 = vmatpush1.msra.mxu0 0.0
  %335 = vmatprep.subr.mxu0 0.0
  %336 = vmatpush1.msra.mxu0 0.0
  %337 = vmatprep.subr.mxu0 0.0
  %338 = vmatpush1.msra.mxu0 0.0
  %339 = vmatprep.subr.mxu0 0.0
  %340 = vmatpush1.msra.mxu0 0.0
  %341 = vmatprep.subr.mxu0 0.0
  %342 = vmatpush1.msra.mxu0 0.0
  %343 = vmatprep.subr.mxu0 0.0
  %344 = vmatpush1.msra.mxu0 0.0
  %345 = vmatprep.subr.mxu0 0.0
  %346 = vmatpush1.msra.mxu0 0.0
  %347 = vmatprep.subr.mxu0 0.0
  %348 = vmatpush1.msra.mxu0 0.0
  %349 = vmatprep.subr.mxu0 0.0
  %350 = vmatpush1.msra.mxu0 0.0
  %351 = vmatprep.subr.mxu0 0.0
  %352 = vmatpush1.msra.mxu0 0.0
  %353 = vmatprep.subr.mxu0 0.0
  %354 = vmatpush1.msra.mxu0 0.0
  %355 = vmatprep.subr.mxu0 0.0
  %356 = vmatpush1.msra.mxu0 0.0
  %357 = vmatprep.subr.mxu0 0.0
  %358 = vmatpush1.msra.mxu0 0.0
  %359 = vmatprep.subr.mxu0 0.0
  %360 = vmatpush1.msra.mxu0 0.0
  %361 = vmatprep.subr.mxu0 0.0
  %362 = vmatpush1.msra.mxu0 0.0
  %363 = vmatprep.subr.mxu0 0.0
  %364 = vmatpush1.msra.mxu0 0.0
  %365 = vmatprep.subr.mxu0 0.0
  %366 = vmatpush1.msra.mxu0 0.0
  %367 = vmatprep.subr.mxu0 0.0
  %368 = vmatpush1.msra.mxu0 0.0
  %369 = vmatprep.subr.mxu0 0.0
  %370 = vmatpush1.msra.mxu0 0.0
  %371 = vmatprep.subr.mxu0 0.0
  %372 = vmatpush1.msra.mxu0 0.0
  %373 = vmatprep.subr.mxu0 0.0
  %374 = vmatpush1.msra.mxu0 0.0
  %375 = vmatprep.mubr.f32.mxu0 0.0
  %376 = vmatmul.mubr.f32.gmra.mrb[0].mxu0 %v306
  %v377 = vpop.f32.mrb[0].mxu0
  %v378 = vadd.f32 0.0, %v377
  %v379 = vpop.f32.mrb[0].mxu0
  %380 = vdwg.mxu0
  %v381 = vadd.f32 %v298, %v378
  %382 = vadd.xlane.f32.xlu0 %v381
  %v383 = vpop.xlane.xlu0 %382
  %v384 = vadd.f32 %v383, 0.0
  %v385 = vmul.f32 %v381, %v381
  %386 = vadd.xlane.f32.xlu0 %v385
  %v387 = vpop.xlane.xlu0 %386
  %v388 = vadd.f32 %v387, 0.0
  %v390 = vsel %vm53, %v42, 0
  %392 = vmatprep.subr.mxu0 0.0
  %393 = vmatpush1.msra.mxu0 %v59
  %394 = vmatprep.subr.mxu0 0.0
  %395 = vmatpush1.msra.mxu0 0.0
  %396 = vmatprep.subr.mxu0 0.0
  %397 = vmatpush1.msra.mxu0 0.0
  %398 = vmatprep.subr.mxu0 0.0
  %399 = vmatpush1.msra.mxu0 0.0
  %400 = vmatprep.subr.mxu0 0.0
  %401 = vmatpush1.msra.mxu0 0.0
  %402 = vmatprep.subr.mxu0 0.0
  %403 = vmatpush1.msra.mxu0 0.0
  %404 = vmatprep.subr.mxu0 0.0
  %405 = vmatpush1.msra.mxu0 0.0
  %406 = vmatprep.subr.mxu0 0.0
  %407 = vmatpush1.msra.mxu0 0.0
  %408 = vmatprep.subr.mxu0 0.0
  %409 = vmatpush1.msra.mxu0 0.0
  %410 = vmatprep.subr.mxu0 0.0
  %411 = vmatpush1.msra.mxu0 0.0
  %412 = vmatprep.subr.mxu0 0.0
  %413 = vmatpush1.msra.mxu0 0.0
  %414 = vmatprep.subr.mxu0 0.0
  %415 = vmatpush1.msra.mxu0 0.0
  %416 = vmatprep.subr.mxu0 0.0
  %417 = vmatpush1.msra.mxu0 0.0
  %418 = vmatprep.subr.mxu0 0.0
  %419 = vmatpush1.msra.mxu0 0.0
  %420 = vmatprep.subr.mxu0 0.0
  %421 = vmatpush1.msra.mxu0 0.0
  %422 = vmatprep.subr.mxu0 0.0
  %423 = vmatpush1.msra.mxu0 0.0
  %424 = vmatprep.subr.mxu0 0.0
  %425 = vmatpush1.msra.mxu0 0.0
  %426 = vmatprep.subr.mxu0 0.0
  %427 = vmatpush1.msra.mxu0 0.0
  %428 = vmatprep.subr.mxu0 0.0
  %429 = vmatpush1.msra.mxu0 0.0
  %430 = vmatprep.subr.mxu0 0.0
  %431 = vmatpush1.msra.mxu0 0.0
  %432 = vmatprep.subr.mxu0 0.0
  %433 = vmatpush1.msra.mxu0 0.0
  %434 = vmatprep.subr.mxu0 0.0
  %435 = vmatpush1.msra.mxu0 0.0
  %436 = vmatprep.subr.mxu0 0.0
  %437 = vmatpush1.msra.mxu0 0.0
  %438 = vmatprep.subr.mxu0 0.0
  %439 = vmatpush1.msra.mxu0 0.0
  %440 = vmatprep.subr.mxu0 0.0
  %441 = vmatpush1.msra.mxu0 0.0
  %442 = vmatprep.subr.mxu0 0.0
  %443 = vmatpush1.msra.mxu0 0.0
  %444 = vmatprep.subr.mxu0 0.0
  %445 = vmatpush1.msra.mxu0 0.0
  %446 = vmatprep.subr.mxu0 0.0
  %447 = vmatpush1.msra.mxu0 0.0
  %448 = vmatprep.subr.mxu0 0.0
  %449 = vmatpush1.msra.mxu0 0.0
  %450 = vmatprep.subr.mxu0 0.0
  %451 = vmatpush1.msra.mxu0 0.0
  %452 = vmatprep.subr.mxu0 0.0
  %453 = vmatpush1.msra.mxu0 0.0
  %454 = vmatprep.subr.mxu0 0.0
  %455 = vmatpush1.msra.mxu0 0.0
  %456 = vmatprep.mubr.f32.mxu0 0.0
  %457 = vmatmul.mubr.f32.gmra.mrb[0].mxu0 %v390
  %v458 = vpop.f32.mrb[0].mxu0
  %v459 = vadd.f32 0.0, %v458
  %v460 = vpop.f32.mrb[0].mxu0
  %461 = vdwg.mxu0
  %463 = vset.pattern.permute.xlu0 0
  %464 = vperm.xlu0 %463, %v52
  %v465 = vpop.permute.xlu0 %464
  %v467 = vmul.f32 %v459, %v465
  %468 = vset.pattern.permute.xlu0 1
  %469 = vperm.xlu0 %468, %v52
  %v470 = vpop.permute.xlu0 %469
  %v472 = vadd.f32 %v467, %v470
  %v473 = vmax.f32 %v472, 0.0
  %474 = vrot.lane.b32.xlu0 %v473, 2
  %v475 = vpop.permute.xlu0 %474
  %vm476 = vcmp.ge.s32.totalorder %v144, 2
  %v477 = vsel %vm476, %v475, 0.0
  %478 = vrot.lane.b32.xlu0 %v473, 1
  %v479 = vpop.permute.xlu0 %478
  %v480 = vsel %vm147, %v479, 0.0
  %v482 = vsel %vm53, %v47, 0
  %v485 = vsel %vm57, %v480, 0
  %487 = vmatprep.subr.mxu0 0.0
  %488 = vmatpush1.msra.mxu0 %v485
  %489 = vmatprep.subr.mxu0 0.0
  %490 = vmatpush1.msra.mxu0 0.0
  %491 = vmatprep.subr.mxu0 0.0
  %492 = vmatpush1.msra.mxu0 0.0
  %493 = vmatprep.subr.mxu0 0.0
  %494 = vmatpush1.msra.mxu0 0.0
  %495 = vmatprep.subr.mxu0 0.0
  %496 = vmatpush1.msra.mxu0 0.0
  %497 = vmatprep.subr.mxu0 0.0
  %498 = vmatpush1.msra.mxu0 0.0
  %499 = vmatprep.subr.mxu0 0.0
  %500 = vmatpush1.msra.mxu0 0.0
  %501 = vmatprep.subr.mxu0 0.0
  %502 = vmatpush1.msra.mxu0 0.0
  %503 = vmatprep.subr.mxu0 0.0
  %504 = vmatpush1.msra.mxu0 0.0
  %505 = vmatprep.subr.mxu0 0.0
  %506 = vmatpush1.msra.mxu0 0.0
  %507 = vmatprep.subr.mxu0 0.0
  %508 = vmatpush1.msra.mxu0 0.0
  %509 = vmatprep.subr.mxu0 0.0
  %510 = vmatpush1.msra.mxu0 0.0
  %511 = vmatprep.subr.mxu0 0.0
  %512 = vmatpush1.msra.mxu0 0.0
  %513 = vmatprep.subr.mxu0 0.0
  %514 = vmatpush1.msra.mxu0 0.0
  %515 = vmatprep.subr.mxu0 0.0
  %516 = vmatpush1.msra.mxu0 0.0
  %517 = vmatprep.subr.mxu0 0.0
  %518 = vmatpush1.msra.mxu0 0.0
  %519 = vmatprep.subr.mxu0 0.0
  %520 = vmatpush1.msra.mxu0 0.0
  %521 = vmatprep.subr.mxu0 0.0
  %522 = vmatpush1.msra.mxu0 0.0
  %523 = vmatprep.subr.mxu0 0.0
  %524 = vmatpush1.msra.mxu0 0.0
  %525 = vmatprep.subr.mxu0 0.0
  %526 = vmatpush1.msra.mxu0 0.0
  %527 = vmatprep.subr.mxu0 0.0
  %528 = vmatpush1.msra.mxu0 0.0
  %529 = vmatprep.subr.mxu0 0.0
  %530 = vmatpush1.msra.mxu0 0.0
  %531 = vmatprep.subr.mxu0 0.0
  %532 = vmatpush1.msra.mxu0 0.0
  %533 = vmatprep.subr.mxu0 0.0
  %534 = vmatpush1.msra.mxu0 0.0
  %535 = vmatprep.subr.mxu0 0.0
  %536 = vmatpush1.msra.mxu0 0.0
  %537 = vmatprep.subr.mxu0 0.0
  %538 = vmatpush1.msra.mxu0 0.0
  %539 = vmatprep.subr.mxu0 0.0
  %540 = vmatpush1.msra.mxu0 0.0
  %541 = vmatprep.subr.mxu0 0.0
  %542 = vmatpush1.msra.mxu0 0.0
  %543 = vmatprep.subr.mxu0 0.0
  %544 = vmatpush1.msra.mxu0 0.0
  %545 = vmatprep.subr.mxu0 0.0
  %546 = vmatpush1.msra.mxu0 0.0
  %547 = vmatprep.subr.mxu0 0.0
  %548 = vmatpush1.msra.mxu0 0.0
  %549 = vmatprep.subr.mxu0 0.0
  %550 = vmatpush1.msra.mxu0 0.0
  %551 = vmatprep.mubr.f32.mxu0 0.0
  %552 = vmatmul.mubr.f32.gmra.mrb[0].mxu0 %v482
  %v553 = vpop.f32.mrb[0].mxu0
  %v554 = vadd.f32 0.0, %v553
  %v555 = vpop.f32.mrb[0].mxu0
  %556 = vdwg.mxu0
  %v558 = vsel %vm53, %v46, 0
  %v561 = vsel %vm57, %v477, 0
  %563 = vmatprep.subr.mxu0 0.0
  %564 = vmatpush1.msra.mxu0 %v561
  %565 = vmatprep.subr.mxu0 0.0
  %566 = vmatpush1.msra.mxu0 0.0
  %567 = vmatprep.subr.mxu0 0.0
  %568 = vmatpush1.msra.mxu0 0.0
  %569 = vmatprep.subr.mxu0 0.0
  %570 = vmatpush1.msra.mxu0 0.0
  %571 = vmatprep.subr.mxu0 0.0
  %572 = vmatpush1.msra.mxu0 0.0
  %573 = vmatprep.subr.mxu0 0.0
  %574 = vmatpush1.msra.mxu0 0.0
  %575 = vmatprep.subr.mxu0 0.0
  %576 = vmatpush1.msra.mxu0 0.0
  %577 = vmatprep.subr.mxu0 0.0
  %578 = vmatpush1.msra.mxu0 0.0
  %579 = vmatprep.subr.mxu0 0.0
  %580 = vmatpush1.msra.mxu0 0.0
  %581 = vmatprep.subr.mxu0 0.0
  %582 = vmatpush1.msra.mxu0 0.0
  %583 = vmatprep.subr.mxu0 0.0
  %584 = vmatpush1.msra.mxu0 0.0
  %585 = vmatprep.subr.mxu0 0.0
  %586 = vmatpush1.msra.mxu0 0.0
  %587 = vmatprep.subr.mxu0 0.0
  %588 = vmatpush1.msra.mxu0 0.0
  %589 = vmatprep.subr.mxu0 0.0
  %590 = vmatpush1.msra.mxu0 0.0
  %591 = vmatprep.subr.mxu0 0.0
  %592 = vmatpush1.msra.mxu0 0.0
  %593 = vmatprep.subr.mxu0 0.0
  %594 = vmatpush1.msra.mxu0 0.0
  %595 = vmatprep.subr.mxu0 0.0
  %596 = vmatpush1.msra.mxu0 0.0
  %597 = vmatprep.subr.mxu0 0.0
  %598 = vmatpush1.msra.mxu0 0.0
  %599 = vmatprep.subr.mxu0 0.0
  %600 = vmatpush1.msra.mxu0 0.0
  %601 = vmatprep.subr.mxu0 0.0
  %602 = vmatpush1.msra.mxu0 0.0
  %603 = vmatprep.subr.mxu0 0.0
  %604 = vmatpush1.msra.mxu0 0.0
  %605 = vmatprep.subr.mxu0 0.0
  %606 = vmatpush1.msra.mxu0 0.0
  %607 = vmatprep.subr.mxu0 0.0
  %608 = vmatpush1.msra.mxu0 0.0
  %609 = vmatprep.subr.mxu0 0.0
  %610 = vmatpush1.msra.mxu0 0.0
  %611 = vmatprep.subr.mxu0 0.0
  %612 = vmatpush1.msra.mxu0 0.0
  %613 = vmatprep.subr.mxu0 0.0
  %614 = vmatpush1.msra.mxu0 0.0
  %615 = vmatprep.subr.mxu0 0.0
  %616 = vmatpush1.msra.mxu0 0.0
  %617 = vmatprep.subr.mxu0 0.0
  %618 = vmatpush1.msra.mxu0 0.0
  %619 = vmatprep.subr.mxu0 0.0
  %620 = vmatpush1.msra.mxu0 0.0
  %621 = vmatprep.subr.mxu0 0.0
  %622 = vmatpush1.msra.mxu0 0.0
  %623 = vmatprep.subr.mxu0 0.0
  %624 = vmatpush1.msra.mxu0 0.0
  %625 = vmatprep.subr.mxu0 0.0
  %626 = vmatpush1.msra.mxu0 0.0
  %627 = vmatprep.mubr.f32.mxu0 0.0
  %628 = vmatmul.mubr.f32.gmra.mrb[0].mxu0 %v558
  %v629 = vpop.f32.mrb[0].mxu0
  %v630 = vadd.f32 %v554, %v629
  %v631 = vpop.f32.mrb[0].mxu0
  %632 = vdwg.mxu0
  %v634 = vsel %vm53, %v48, 0
  %v637 = vsel %vm57, %v473, 0
  %639 = vmatprep.subr.mxu0 0.0
  %640 = vmatpush1.msra.mxu0 %v637
  %641 = vmatprep.subr.mxu0 0.0
  %642 = vmatpush1.msra.mxu0 0.0
  %643 = vmatprep.subr.mxu0 0.0
  %644 = vmatpush1.msra.mxu0 0.0
  %645 = vmatprep.subr.mxu0 0.0
  %646 = vmatpush1.msra.mxu0 0.0
  %647 = vmatprep.subr.mxu0 0.0
  %648 = vmatpush1.msra.mxu0 0.0
  %649 = vmatprep.subr.mxu0 0.0
  %650 = vmatpush1.msra.mxu0 0.0
  %651 = vmatprep.subr.mxu0 0.0
  %652 = vmatpush1.msra.mxu0 0.0
  %653 = vmatprep.subr.mxu0 0.0
  %654 = vmatpush1.msra.mxu0 0.0
  %655 = vmatprep.subr.mxu0 0.0
  %656 = vmatpush1.msra.mxu0 0.0
  %657 = vmatprep.subr.mxu0 0.0
  %658 = vmatpush1.msra.mxu0 0.0
  %659 = vmatprep.subr.mxu0 0.0
  %660 = vmatpush1.msra.mxu0 0.0
  %661 = vmatprep.subr.mxu0 0.0
  %662 = vmatpush1.msra.mxu0 0.0
  %663 = vmatprep.subr.mxu0 0.0
  %664 = vmatpush1.msra.mxu0 0.0
  %665 = vmatprep.subr.mxu0 0.0
  %666 = vmatpush1.msra.mxu0 0.0
  %667 = vmatprep.subr.mxu0 0.0
  %668 = vmatpush1.msra.mxu0 0.0
  %669 = vmatprep.subr.mxu0 0.0
  %670 = vmatpush1.msra.mxu0 0.0
  %671 = vmatprep.subr.mxu0 0.0
  %672 = vmatpush1.msra.mxu0 0.0
  %673 = vmatprep.subr.mxu0 0.0
  %674 = vmatpush1.msra.mxu0 0.0
  %675 = vmatprep.subr.mxu0 0.0
  %676 = vmatpush1.msra.mxu0 0.0
  %677 = vmatprep.subr.mxu0 0.0
  %678 = vmatpush1.msra.mxu0 0.0
  %679 = vmatprep.subr.mxu0 0.0
  %680 = vmatpush1.msra.mxu0 0.0
  %681 = vmatprep.subr.mxu0 0.0
  %682 = vmatpush1.msra.mxu0 0.0
  %683 = vmatprep.subr.mxu0 0.0
  %684 = vmatpush1.msra.mxu0 0.0
  %685 = vmatprep.subr.mxu0 0.0
  %686 = vmatpush1.msra.mxu0 0.0
  %687 = vmatprep.subr.mxu0 0.0
  %688 = vmatpush1.msra.mxu0 0.0
  %689 = vmatprep.subr.mxu0 0.0
  %690 = vmatpush1.msra.mxu0 0.0
  %691 = vmatprep.subr.mxu0 0.0
  %692 = vmatpush1.msra.mxu0 0.0
  %693 = vmatprep.subr.mxu0 0.0
  %694 = vmatpush1.msra.mxu0 0.0
  %695 = vmatprep.subr.mxu0 0.0
  %696 = vmatpush1.msra.mxu0 0.0
  %697 = vmatprep.subr.mxu0 0.0
  %698 = vmatpush1.msra.mxu0 0.0
  %699 = vmatprep.subr.mxu0 0.0
  %700 = vmatpush1.msra.mxu0 0.0
  %701 = vmatprep.subr.mxu0 0.0
  %702 = vmatpush1.msra.mxu0 0.0
  %703 = vmatprep.mubr.f32.mxu0 0.0
  %704 = vmatmul.mubr.f32.gmra.mrb[0].mxu0 %v634
  %v705 = vpop.f32.mrb[0].mxu0
  %v706 = vadd.f32 0.0, %v705
  %v707 = vpop.f32.mrb[0].mxu0
  %708 = vdwg.mxu0
  %v709 = vadd.f32 %v630, %v706
  %710 = vrot.lane.b32.xlu0 %v473, 127
  %v711 = vpop.permute.xlu0 %710
  %v712 = vsel %vm303, %v711, 0.0
  %v714 = vsel %vm53, %v49, 0
  %v717 = vsel %vm57, %v712, 0
  %719 = vmatprep.subr.mxu0 0.0
  %720 = vmatpush1.msra.mxu0 %v717
  %721 = vmatprep.subr.mxu0 0.0
  %722 = vmatpush1.msra.mxu0 0.0
  %723 = vmatprep.subr.mxu0 0.0
  %724 = vmatpush1.msra.mxu0 0.0
  %725 = vmatprep.subr.mxu0 0.0
  %726 = vmatpush1.msra.mxu0 0.0
  %727 = vmatprep.subr.mxu0 0.0
  %728 = vmatpush1.msra.mxu0 0.0
  %729 = vmatprep.subr.mxu0 0.0
  %730 = vmatpush1.msra.mxu0 0.0
  %731 = vmatprep.subr.mxu0 0.0
  %732 = vmatpush1.msra.mxu0 0.0
  %733 = vmatprep.subr.mxu0 0.0
  %734 = vmatpush1.msra.mxu0 0.0
  %735 = vmatprep.subr.mxu0 0.0
  %736 = vmatpush1.msra.mxu0 0.0
  %737 = vmatprep.subr.mxu0 0.0
  %738 = vmatpush1.msra.mxu0 0.0
  %739 = vmatprep.subr.mxu0 0.0
  %740 = vmatpush1.msra.mxu0 0.0
  %741 = vmatprep.subr.mxu0 0.0
  %742 = vmatpush1.msra.mxu0 0.0
  %743 = vmatprep.subr.mxu0 0.0
  %744 = vmatpush1.msra.mxu0 0.0
  %745 = vmatprep.subr.mxu0 0.0
  %746 = vmatpush1.msra.mxu0 0.0
  %747 = vmatprep.subr.mxu0 0.0
  %748 = vmatpush1.msra.mxu0 0.0
  %749 = vmatprep.subr.mxu0 0.0
  %750 = vmatpush1.msra.mxu0 0.0
  %751 = vmatprep.subr.mxu0 0.0
  %752 = vmatpush1.msra.mxu0 0.0
  %753 = vmatprep.subr.mxu0 0.0
  %754 = vmatpush1.msra.mxu0 0.0
  %755 = vmatprep.subr.mxu0 0.0
  %756 = vmatpush1.msra.mxu0 0.0
  %757 = vmatprep.subr.mxu0 0.0
  %758 = vmatpush1.msra.mxu0 0.0
  %759 = vmatprep.subr.mxu0 0.0
  %760 = vmatpush1.msra.mxu0 0.0
  %761 = vmatprep.subr.mxu0 0.0
  %762 = vmatpush1.msra.mxu0 0.0
  %763 = vmatprep.subr.mxu0 0.0
  %764 = vmatpush1.msra.mxu0 0.0
  %765 = vmatprep.subr.mxu0 0.0
  %766 = vmatpush1.msra.mxu0 0.0
  %767 = vmatprep.subr.mxu0 0.0
  %768 = vmatpush1.msra.mxu0 0.0
  %769 = vmatprep.subr.mxu0 0.0
  %770 = vmatpush1.msra.mxu0 0.0
  %771 = vmatprep.subr.mxu0 0.0
  %772 = vmatpush1.msra.mxu0 0.0
  %773 = vmatprep.subr.mxu0 0.0
  %774 = vmatpush1.msra.mxu0 0.0
  %775 = vmatprep.subr.mxu0 0.0
  %776 = vmatpush1.msra.mxu0 0.0
  %777 = vmatprep.subr.mxu0 0.0
  %778 = vmatpush1.msra.mxu0 0.0
  %779 = vmatprep.subr.mxu0 0.0
  %780 = vmatpush1.msra.mxu0 0.0
  %781 = vmatprep.subr.mxu0 0.0
  %782 = vmatpush1.msra.mxu0 0.0
  %783 = vmatprep.mubr.f32.mxu0 0.0
  %784 = vmatmul.mubr.f32.gmra.mrb[0].mxu0 %v714
  %v785 = vpop.f32.mrb[0].mxu0
  %v786 = vadd.f32 0.0, %v785
  %v787 = vpop.f32.mrb[0].mxu0
  %788 = vdwg.mxu0
  %v789 = vadd.f32 %v709, %v786
  %790 = vrot.lane.b32.xlu0 %v473, 126
  %v791 = vpop.permute.xlu0 %790
  %vm792 = vcmp.lt.s32.totalorder %v144, 126
  %v793 = vsel %vm792, %v791, 0.0
  %v795 = vsel %vm53, %v50, 0
  %v798 = vsel %vm57, %v793, 0
  %800 = vmatprep.subr.mxu0 0.0
  %801 = vmatpush1.msra.mxu0 %v798
  %802 = vmatprep.subr.mxu0 0.0
  %803 = vmatpush1.msra.mxu0 0.0
  %804 = vmatprep.subr.mxu0 0.0
  %805 = vmatpush1.msra.mxu0 0.0
  %806 = vmatprep.subr.mxu0 0.0
  %807 = vmatpush1.msra.mxu0 0.0
  %808 = vmatprep.subr.mxu0 0.0
  %809 = vmatpush1.msra.mxu0 0.0
  %810 = vmatprep.subr.mxu0 0.0
  %811 = vmatpush1.msra.mxu0 0.0
  %812 = vmatprep.subr.mxu0 0.0
  %813 = vmatpush1.msra.mxu0 0.0
  %814 = vmatprep.subr.mxu0 0.0
  %815 = vmatpush1.msra.mxu0 0.0
  %816 = vmatprep.subr.mxu0 0.0
  %817 = vmatpush1.msra.mxu0 0.0
  %818 = vmatprep.subr.mxu0 0.0
  %819 = vmatpush1.msra.mxu0 0.0
  %820 = vmatprep.subr.mxu0 0.0
  %821 = vmatpush1.msra.mxu0 0.0
  %822 = vmatprep.subr.mxu0 0.0
  %823 = vmatpush1.msra.mxu0 0.0
  %824 = vmatprep.subr.mxu0 0.0
  %825 = vmatpush1.msra.mxu0 0.0
  %826 = vmatprep.subr.mxu0 0.0
  %827 = vmatpush1.msra.mxu0 0.0
  %828 = vmatprep.subr.mxu0 0.0
  %829 = vmatpush1.msra.mxu0 0.0
  %830 = vmatprep.subr.mxu0 0.0
  %831 = vmatpush1.msra.mxu0 0.0
  %832 = vmatprep.subr.mxu0 0.0
  %833 = vmatpush1.msra.mxu0 0.0
  %834 = vmatprep.subr.mxu0 0.0
  %835 = vmatpush1.msra.mxu0 0.0
  %836 = vmatprep.subr.mxu0 0.0
  %837 = vmatpush1.msra.mxu0 0.0
  %838 = vmatprep.subr.mxu0 0.0
  %839 = vmatpush1.msra.mxu0 0.0
  %840 = vmatprep.subr.mxu0 0.0
  %841 = vmatpush1.msra.mxu0 0.0
  %842 = vmatprep.subr.mxu0 0.0
  %843 = vmatpush1.msra.mxu0 0.0
  %844 = vmatprep.subr.mxu0 0.0
  %845 = vmatpush1.msra.mxu0 0.0
  %846 = vmatprep.subr.mxu0 0.0
  %847 = vmatpush1.msra.mxu0 0.0
  %848 = vmatprep.subr.mxu0 0.0
  %849 = vmatpush1.msra.mxu0 0.0
  %850 = vmatprep.subr.mxu0 0.0
  %851 = vmatpush1.msra.mxu0 0.0
  %852 = vmatprep.subr.mxu0 0.0
  %853 = vmatpush1.msra.mxu0 0.0
  %854 = vmatprep.subr.mxu0 0.0
  %855 = vmatpush1.msra.mxu0 0.0
  %856 = vmatprep.subr.mxu0 0.0
  %857 = vmatpush1.msra.mxu0 0.0
  %858 = vmatprep.subr.mxu0 0.0
  %859 = vmatpush1.msra.mxu0 0.0
  %860 = vmatprep.subr.mxu0 0.0
  %861 = vmatpush1.msra.mxu0 0.0
  %862 = vmatprep.subr.mxu0 0.0
  %863 = vmatpush1.msra.mxu0 0.0
  %864 = vmatprep.mubr.f32.mxu0 0.0
  %865 = vmatmul.mubr.f32.gmra.mrb[0].mxu0 %v795
  %v866 = vpop.f32.mrb[0].mxu0
  %v867 = vadd.f32 0.0, %v866
  %v868 = vpop.f32.mrb[0].mxu0
  %869 = vdwg.mxu0
  %v870 = vadd.f32 %v789, %v867
  %871 = vadd.xlane.f32.xlu0 %v870
  %v872 = vpop.xlane.xlu0 %871
  %v873 = vadd.f32 %v872, 0.0
  %v874 = vmul.f32 %v870, %v870
  %875 = vadd.xlane.f32.xlu0 %v874
  %v876 = vpop.xlane.xlu0 %875
  %v877 = vadd.f32 %v876, 0.0
  %v879 = vsel %vm57, %v40, 0
  %881 = vmatprep.subr.mxu0 0.0
  %882 = vmatpush1.msra.mxu0 %v879
  %883 = vmatprep.subr.mxu0 0.0
  %884 = vmatpush1.msra.mxu0 0.0
  %885 = vmatprep.subr.mxu0 0.0
  %886 = vmatpush1.msra.mxu0 0.0
  %887 = vmatprep.subr.mxu0 0.0
  %888 = vmatpush1.msra.mxu0 0.0
  %889 = vmatprep.subr.mxu0 0.0
  %890 = vmatpush1.msra.mxu0 0.0
  %891 = vmatprep.subr.mxu0 0.0
  %892 = vmatpush1.msra.mxu0 0.0
  %893 = vmatprep.subr.mxu0 0.0
  %894 = vmatpush1.msra.mxu0 0.0
  %895 = vmatprep.subr.mxu0 0.0
  %896 = vmatpush1.msra.mxu0 0.0
  %897 = vmatprep.subr.mxu0 0.0
  %898 = vmatpush1.msra.mxu0 0.0
  %899 = vmatprep.subr.mxu0 0.0
  %900 = vmatpush1.msra.mxu0 0.0
  %901 = vmatprep.subr.mxu0 0.0
  %902 = vmatpush1.msra.mxu0 0.0
  %903 = vmatprep.subr.mxu0 0.0
  %904 = vmatpush1.msra.mxu0 0.0
  %905 = vmatprep.subr.mxu0 0.0
  %906 = vmatpush1.msra.mxu0 0.0
  %907 = vmatprep.subr.mxu0 0.0
  %908 = vmatpush1.msra.mxu0 0.0
  %909 = vmatprep.subr.mxu0 0.0
  %910 = vmatpush1.msra.mxu0 0.0
  %911 = vmatprep.subr.mxu0 0.0
  %912 = vmatpush1.msra.mxu0 0.0
  %913 = vmatprep.subr.mxu0 0.0
  %914 = vmatpush1.msra.mxu0 0.0
  %915 = vmatprep.subr.mxu0 0.0
  %916 = vmatpush1.msra.mxu0 0.0
  %917 = vmatprep.subr.mxu0 0.0
  %918 = vmatpush1.msra.mxu0 0.0
  %919 = vmatprep.subr.mxu0 0.0
  %920 = vmatpush1.msra.mxu0 0.0
  %921 = vmatprep.subr.mxu0 0.0
  %922 = vmatpush1.msra.mxu0 0.0
  %923 = vmatprep.subr.mxu0 0.0
  %924 = vmatpush1.msra.mxu0 0.0
  %925 = vmatprep.subr.mxu0 0.0
  %926 = vmatpush1.msra.mxu0 0.0
  %927 = vmatprep.subr.mxu0 0.0
  %928 = vmatpush1.msra.mxu0 0.0
  %929 = vmatprep.subr.mxu0 0.0
  %930 = vmatpush1.msra.mxu0 0.0
  %931 = vmatprep.subr.mxu0 0.0
  %932 = vmatpush1.msra.mxu0 0.0
  %933 = vmatprep.subr.mxu0 0.0
  %934 = vmatpush1.msra.mxu0 0.0
  %935 = vmatprep.subr.mxu0 0.0
  %936 = vmatpush1.msra.mxu0 0.0
  %937 = vmatprep.subr.mxu0 0.0
  %938 = vmatpush1.msra.mxu0 0.0
  %939 = vmatprep.subr.mxu0 0.0
  %940 = vmatpush1.msra.mxu0 0.0
  %941 = vmatprep.subr.mxu0 0.0
  %942 = vmatpush1.msra.mxu0 0.0
  %943 = vmatprep.subr.mxu0 0.0
  %944 = vmatpush1.msra.mxu0 0.0
  %945 = vmatprep.mubr.f32.mxu0 0.0
  %946 = vmatmul.mubr.f32.gmra.mrb[0].mxu0 %v55
  %v947 = vpop.f32.mrb[0].mxu0
  %v948 = vadd.f32 0.0, %v947
  %v949 = vpop.f32.mrb[0].mxu0
  %950 = vdwg.mxu0
  %v951 = vmul.f32 %v948, %v134
  %v952 = vadd.f32 %v951, %v139
  %v953 = vmax.f32 %v952, 0.0
  %954 = vrot.lane.b32.xlu0 %v953, 1
  %v955 = vpop.permute.xlu0 %954
  %v956 = vsel %vm147, %v955, 0.0
  %v958 = vsel %vm57, %v953, 0
  %960 = vmatprep.subr.mxu0 0.0
  %961 = vmatpush1.msra.mxu0 %v958
  %962 = vmatprep.subr.mxu0 0.0
  %963 = vmatpush1.msra.mxu0 0.0
  %964 = vmatprep.subr.mxu0 0.0
  %965 = vmatpush1.msra.mxu0 0.0
  %966 = vmatprep.subr.mxu0 0.0
  %967 = vmatpush1.msra.mxu0 0.0
  %968 = vmatprep.subr.mxu0 0.0
  %969 = vmatpush1.msra.mxu0 0.0
  %970 = vmatprep.subr.mxu0 0.0
  %971 = vmatpush1.msra.mxu0 0.0
  %972 = vmatprep.subr.mxu0 0.0
  %973 = vmatpush1.msra.mxu0 0.0
  %974 = vmatprep.subr.mxu0 0.0
  %975 = vmatpush1.msra.mxu0 0.0
  %976 = vmatprep.subr.mxu0 0.0
  %977 = vmatpush1.msra.mxu0 0.0
  %978 = vmatprep.subr.mxu0 0.0
  %979 = vmatpush1.msra.mxu0 0.0
  %980 = vmatprep.subr.mxu0 0.0
  %981 = vmatpush1.msra.mxu0 0.0
  %982 = vmatprep.subr.mxu0 0.0
  %983 = vmatpush1.msra.mxu0 0.0
  %984 = vmatprep.subr.mxu0 0.0
  %985 = vmatpush1.msra.mxu0 0.0
  %986 = vmatprep.subr.mxu0 0.0
  %987 = vmatpush1.msra.mxu0 0.0
  %988 = vmatprep.subr.mxu0 0.0
  %989 = vmatpush1.msra.mxu0 0.0
  %990 = vmatprep.subr.mxu0 0.0
  %991 = vmatpush1.msra.mxu0 0.0
  %992 = vmatprep.subr.mxu0 0.0
  %993 = vmatpush1.msra.mxu0 0.0
  %994 = vmatprep.subr.mxu0 0.0
  %995 = vmatpush1.msra.mxu0 0.0
  %996 = vmatprep.subr.mxu0 0.0
  %997 = vmatpush1.msra.mxu0 0.0
  %998 = vmatprep.subr.mxu0 0.0
  %999 = vmatpush1.msra.mxu0 0.0
  %1000 = vmatprep.subr.mxu0 0.0
  %1001 = vmatpush1.msra.mxu0 0.0
  %1002 = vmatprep.subr.mxu0 0.0
  %1003 = vmatpush1.msra.mxu0 0.0
  %1004 = vmatprep.subr.mxu0 0.0
  %1005 = vmatpush1.msra.mxu0 0.0
  %1006 = vmatprep.subr.mxu0 0.0
  %1007 = vmatpush1.msra.mxu0 0.0
  %1008 = vmatprep.subr.mxu0 0.0
  %1009 = vmatpush1.msra.mxu0 0.0
  %1010 = vmatprep.subr.mxu0 0.0
  %1011 = vmatpush1.msra.mxu0 0.0
  %1012 = vmatprep.subr.mxu0 0.0
  %1013 = vmatpush1.msra.mxu0 0.0
  %1014 = vmatprep.subr.mxu0 0.0
  %1015 = vmatpush1.msra.mxu0 0.0
  %1016 = vmatprep.subr.mxu0 0.0
  %1017 = vmatpush1.msra.mxu0 0.0
  %1018 = vmatprep.subr.mxu0 0.0
  %1019 = vmatpush1.msra.mxu0 0.0
  %1020 = vmatprep.subr.mxu0 0.0
  %1021 = vmatpush1.msra.mxu0 0.0
  %1022 = vmatprep.subr.mxu0 0.0
  %1023 = vmatpush1.msra.mxu0 0.0
  %1024 = vmatprep.mubr.f32.mxu0 0.0
  %1025 = vmatmul.mubr.f32.gmra.mrb[0].mxu0 %v150
  %v1026 = vpop.f32.mrb[0].mxu0
  %v1027 = vadd.f32 0.0, %v1026
  %v1028 = vpop.f32.mrb[0].mxu0
  %1029 = vdwg.mxu0
  %v1031 = vsel %vm57, %v956, 0
  %1033 = vmatprep.subr.mxu0 0.0
  %1034 = vmatpush1.msra.mxu0 %v1031
  %1035 = vmatprep.subr.mxu0 0.0
  %1036 = vmatpush1.msra.mxu0 0.0
  %1037 = vmatprep.subr.mxu0 0.0
  %1038 = vmatpush1.msra.mxu0 0.0
  %1039 = vmatprep.subr.mxu0 0.0
  %1040 = vmatpush1.msra.mxu0 0.0
  %1041 = vmatprep.subr.mxu0 0.0
  %1042 = vmatpush1.msra.mxu0 0.0
  %1043 = vmatprep.subr.mxu0 0.0
  %1044 = vmatpush1.msra.mxu0 0.0
  %1045 = vmatprep.subr.mxu0 0.0
  %1046 = vmatpush1.msra.mxu0 0.0
  %1047 = vmatprep.subr.mxu0 0.0
  %1048 = vmatpush1.msra.mxu0 0.0
  %1049 = vmatprep.subr.mxu0 0.0
  %1050 = vmatpush1.msra.mxu0 0.0
  %1051 = vmatprep.subr.mxu0 0.0
  %1052 = vmatpush1.msra.mxu0 0.0
  %1053 = vmatprep.subr.mxu0 0.0
  %1054 = vmatpush1.msra.mxu0 0.0
  %1055 = vmatprep.subr.mxu0 0.0
  %1056 = vmatpush1.msra.mxu0 0.0
  %1057 = vmatprep.subr.mxu0 0.0
  %1058 = vmatpush1.msra.mxu0 0.0
  %1059 = vmatprep.subr.mxu0 0.0
  %1060 = vmatpush1.msra.mxu0 0.0
  %1061 = vmatprep.subr.mxu0 0.0
  %1062 = vmatpush1.msra.mxu0 0.0
  %1063 = vmatprep.subr.mxu0 0.0
  %1064 = vmatpush1.msra.mxu0 0.0
  %1065 = vmatprep.subr.mxu0 0.0
  %1066 = vmatpush1.msra.mxu0 0.0
  %1067 = vmatprep.subr.mxu0 0.0
  %1068 = vmatpush1.msra.mxu0 0.0
  %1069 = vmatprep.subr.mxu0 0.0
  %1070 = vmatpush1.msra.mxu0 0.0
  %1071 = vmatprep.subr.mxu0 0.0
  %1072 = vmatpush1.msra.mxu0 0.0
  %1073 = vmatprep.subr.mxu0 0.0
  %1074 = vmatpush1.msra.mxu0 0.0
  %1075 = vmatprep.subr.mxu0 0.0
  %1076 = vmatpush1.msra.mxu0 0.0
  %1077 = vmatprep.subr.mxu0 0.0
  %1078 = vmatpush1.msra.mxu0 0.0
  %1079 = vmatprep.subr.mxu0 0.0
  %1080 = vmatpush1.msra.mxu0 0.0
  %1081 = vmatprep.subr.mxu0 0.0
  %1082 = vmatpush1.msra.mxu0 0.0
  %1083 = vmatprep.subr.mxu0 0.0
  %1084 = vmatpush1.msra.mxu0 0.0
  %1085 = vmatprep.subr.mxu0 0.0
  %1086 = vmatpush1.msra.mxu0 0.0
  %1087 = vmatprep.subr.mxu0 0.0
  %1088 = vmatpush1.msra.mxu0 0.0
  %1089 = vmatprep.subr.mxu0 0.0
  %1090 = vmatpush1.msra.mxu0 0.0
  %1091 = vmatprep.subr.mxu0 0.0
  %1092 = vmatpush1.msra.mxu0 0.0
  %1093 = vmatprep.subr.mxu0 0.0
  %1094 = vmatpush1.msra.mxu0 0.0
  %1095 = vmatprep.subr.mxu0 0.0
  %1096 = vmatpush1.msra.mxu0 0.0
  %1097 = vmatprep.mubr.f32.mxu0 0.0
  %1098 = vmatmul.mubr.f32.gmra.mrb[0].mxu0 %v226
  %v1099 = vpop.f32.mrb[0].mxu0
  %v1100 = vadd.f32 %v1027, %v1099
  %v1101 = vpop.f32.mrb[0].mxu0
  %1102 = vdwg.mxu0
  %1103 = vrot.lane.b32.xlu0 %v953, 127
  %v1104 = vpop.permute.xlu0 %1103
  %v1105 = vsel %vm303, %v1104, 0.0
  %v1107 = vsel %vm57, %v1105, 0
  %1109 = vmatprep.subr.mxu0 0.0
  %1110 = vmatpush1.msra.mxu0 %v1107
  %1111 = vmatprep.subr.mxu0 0.0
  %1112 = vmatpush1.msra.mxu0 0.0
  %1113 = vmatprep.subr.mxu0 0.0
  %1114 = vmatpush1.msra.mxu0 0.0
  %1115 = vmatprep.subr.mxu0 0.0
  %1116 = vmatpush1.msra.mxu0 0.0
  %1117 = vmatprep.subr.mxu0 0.0
  %1118 = vmatpush1.msra.mxu0 0.0
  %1119 = vmatprep.subr.mxu0 0.0
  %1120 = vmatpush1.msra.mxu0 0.0
  %1121 = vmatprep.subr.mxu0 0.0
  %1122 = vmatpush1.msra.mxu0 0.0
  %1123 = vmatprep.subr.mxu0 0.0
  %1124 = vmatpush1.msra.mxu0 0.0
  %1125 = vmatprep.subr.mxu0 0.0
  %1126 = vmatpush1.msra.mxu0 0.0
  %1127 = vmatprep.subr.mxu0 0.0
  %1128 = vmatpush1.msra.mxu0 0.0
  %1129 = vmatprep.subr.mxu0 0.0
  %1130 = vmatpush1.msra.mxu0 0.0
  %1131 = vmatprep.subr.mxu0 0.0
  %1132 = vmatpush1.msra.mxu0 0.0
  %1133 = vmatprep.subr.mxu0 0.0
  %1134 = vmatpush1.msra.mxu0 0.0
  %1135 = vmatprep.subr.mxu0 0.0
  %1136 = vmatpush1.msra.mxu0 0.0
  %1137 = vmatprep.subr.mxu0 0.0
  %1138 = vmatpush1.msra.mxu0 0.0
  %1139 = vmatprep.subr.mxu0 0.0
  %1140 = vmatpush1.msra.mxu0 0.0
  %1141 = vmatprep.subr.mxu0 0.0
  %1142 = vmatpush1.msra.mxu0 0.0
  %1143 = vmatprep.subr.mxu0 0.0
  %1144 = vmatpush1.msra.mxu0 0.0
  %1145 = vmatprep.subr.mxu0 0.0
  %1146 = vmatpush1.msra.mxu0 0.0
  %1147 = vmatprep.subr.mxu0 0.0
  %1148 = vmatpush1.msra.mxu0 0.0
  %1149 = vmatprep.subr.mxu0 0.0
  %1150 = vmatpush1.msra.mxu0 0.0
  %1151 = vmatprep.subr.mxu0 0.0
  %1152 = vmatpush1.msra.mxu0 0.0
  %1153 = vmatprep.subr.mxu0 0.0
  %1154 = vmatpush1.msra.mxu0 0.0
  %1155 = vmatprep.subr.mxu0 0.0
  %1156 = vmatpush1.msra.mxu0 0.0
  %1157 = vmatprep.subr.mxu0 0.0
  %1158 = vmatpush1.msra.mxu0 0.0
  %1159 = vmatprep.subr.mxu0 0.0
  %1160 = vmatpush1.msra.mxu0 0.0
  %1161 = vmatprep.subr.mxu0 0.0
  %1162 = vmatpush1.msra.mxu0 0.0
  %1163 = vmatprep.subr.mxu0 0.0
  %1164 = vmatpush1.msra.mxu0 0.0
  %1165 = vmatprep.subr.mxu0 0.0
  %1166 = vmatpush1.msra.mxu0 0.0
  %1167 = vmatprep.subr.mxu0 0.0
  %1168 = vmatpush1.msra.mxu0 0.0
  %1169 = vmatprep.subr.mxu0 0.0
  %1170 = vmatpush1.msra.mxu0 0.0
  %1171 = vmatprep.subr.mxu0 0.0
  %1172 = vmatpush1.msra.mxu0 0.0
  %1173 = vmatprep.mubr.f32.mxu0 0.0
  %1174 = vmatmul.mubr.f32.gmra.mrb[0].mxu0 %v306
  %v1175 = vpop.f32.mrb[0].mxu0
  %v1176 = vadd.f32 0.0, %v1175
  %v1177 = vpop.f32.mrb[0].mxu0
  %1178 = vdwg.mxu0
  %v1179 = vadd.f32 %v1100, %v1176
  %1180 = vadd.xlane.f32.xlu0 %v1179
  %v1181 = vpop.xlane.xlu0 %1180
  %v1182 = vadd.f32 %v384, %v1181
  %v1183 = vmul.f32 %v1179, %v1179
  %1184 = vadd.xlane.f32.xlu0 %v1183
  %v1185 = vpop.xlane.xlu0 %1184
  %v1186 = vadd.f32 %v388, %v1185
  %1187 = vmatprep.subr.mxu0 0.0
  %1188 = vmatpush1.msra.mxu0 %v879
  %1189 = vmatprep.subr.mxu0 0.0
  %1190 = vmatpush1.msra.mxu0 0.0
  %1191 = vmatprep.subr.mxu0 0.0
  %1192 = vmatpush1.msra.mxu0 0.0
  %1193 = vmatprep.subr.mxu0 0.0
  %1194 = vmatpush1.msra.mxu0 0.0
  %1195 = vmatprep.subr.mxu0 0.0
  %1196 = vmatpush1.msra.mxu0 0.0
  %1197 = vmatprep.subr.mxu0 0.0
  %1198 = vmatpush1.msra.mxu0 0.0
  %1199 = vmatprep.subr.mxu0 0.0
  %1200 = vmatpush1.msra.mxu0 0.0
  %1201 = vmatprep.subr.mxu0 0.0
  %1202 = vmatpush1.msra.mxu0 0.0
  %1203 = vmatprep.subr.mxu0 0.0
  %1204 = vmatpush1.msra.mxu0 0.0
  %1205 = vmatprep.subr.mxu0 0.0
  %1206 = vmatpush1.msra.mxu0 0.0
  %1207 = vmatprep.subr.mxu0 0.0
  %1208 = vmatpush1.msra.mxu0 0.0
  %1209 = vmatprep.subr.mxu0 0.0
  %1210 = vmatpush1.msra.mxu0 0.0
  %1211 = vmatprep.subr.mxu0 0.0
  %1212 = vmatpush1.msra.mxu0 0.0
  %1213 = vmatprep.subr.mxu0 0.0
  %1214 = vmatpush1.msra.mxu0 0.0
  %1215 = vmatprep.subr.mxu0 0.0
  %1216 = vmatpush1.msra.mxu0 0.0
  %1217 = vmatprep.subr.mxu0 0.0
  %1218 = vmatpush1.msra.mxu0 0.0
  %1219 = vmatprep.subr.mxu0 0.0
  %1220 = vmatpush1.msra.mxu0 0.0
  %1221 = vmatprep.subr.mxu0 0.0
  %1222 = vmatpush1.msra.mxu0 0.0
  %1223 = vmatprep.subr.mxu0 0.0
  %1224 = vmatpush1.msra.mxu0 0.0
  %1225 = vmatprep.subr.mxu0 0.0
  %1226 = vmatpush1.msra.mxu0 0.0
  %1227 = vmatprep.subr.mxu0 0.0
  %1228 = vmatpush1.msra.mxu0 0.0
  %1229 = vmatprep.subr.mxu0 0.0
  %1230 = vmatpush1.msra.mxu0 0.0
  %1231 = vmatprep.subr.mxu0 0.0
  %1232 = vmatpush1.msra.mxu0 0.0
  %1233 = vmatprep.subr.mxu0 0.0
  %1234 = vmatpush1.msra.mxu0 0.0
  %1235 = vmatprep.subr.mxu0 0.0
  %1236 = vmatpush1.msra.mxu0 0.0
  %1237 = vmatprep.subr.mxu0 0.0
  %1238 = vmatpush1.msra.mxu0 0.0
  %1239 = vmatprep.subr.mxu0 0.0
  %1240 = vmatpush1.msra.mxu0 0.0
  %1241 = vmatprep.subr.mxu0 0.0
  %1242 = vmatpush1.msra.mxu0 0.0
  %1243 = vmatprep.subr.mxu0 0.0
  %1244 = vmatpush1.msra.mxu0 0.0
  %1245 = vmatprep.subr.mxu0 0.0
  %1246 = vmatpush1.msra.mxu0 0.0
  %1247 = vmatprep.subr.mxu0 0.0
  %1248 = vmatpush1.msra.mxu0 0.0
  %1249 = vmatprep.subr.mxu0 0.0
  %1250 = vmatpush1.msra.mxu0 0.0
  %1251 = vmatprep.mubr.f32.mxu0 0.0
  %1252 = vmatmul.mubr.f32.gmra.mrb[0].mxu0 %v390
  %v1253 = vpop.f32.mrb[0].mxu0
  %v1254 = vadd.f32 0.0, %v1253
  %v1255 = vpop.f32.mrb[0].mxu0
  %1256 = vdwg.mxu0
  %v1257 = vmul.f32 %v1254, %v465
  %v1258 = vadd.f32 %v1257, %v470
  %v1259 = vmax.f32 %v1258, 0.0
  %1260 = vrot.lane.b32.xlu0 %v1259, 2
  %v1261 = vpop.permute.xlu0 %1260
  %v1262 = vsel %vm476, %v1261, 0.0
  %1263 = vrot.lane.b32.xlu0 %v1259, 1
  %v1264 = vpop.permute.xlu0 %1263
  %v1265 = vsel %vm147, %v1264, 0.0
  %v1267 = vsel %vm57, %v1265, 0
  %1269 = vmatprep.subr.mxu0 0.0
  %1270 = vmatpush1.msra.mxu0 %v1267
  %1271 = vmatprep.subr.mxu0 0.0
  %1272 = vmatpush1.msra.mxu0 0.0
  %1273 = vmatprep.subr.mxu0 0.0
  %1274 = vmatpush1.msra.mxu0 0.0
  %1275 = vmatprep.subr.mxu0 0.0
  %1276 = vmatpush1.msra.mxu0 0.0
  %1277 = vmatprep.subr.mxu0 0.0
  %1278 = vmatpush1.msra.mxu0 0.0
  %1279 = vmatprep.subr.mxu0 0.0
  %1280 = vmatpush1.msra.mxu0 0.0
  %1281 = vmatprep.subr.mxu0 0.0
  %1282 = vmatpush1.msra.mxu0 0.0
  %1283 = vmatprep.subr.mxu0 0.0
  %1284 = vmatpush1.msra.mxu0 0.0
  %1285 = vmatprep.subr.mxu0 0.0
  %1286 = vmatpush1.msra.mxu0 0.0
  %1287 = vmatprep.subr.mxu0 0.0
  %1288 = vmatpush1.msra.mxu0 0.0
  %1289 = vmatprep.subr.mxu0 0.0
  %1290 = vmatpush1.msra.mxu0 0.0
  %1291 = vmatprep.subr.mxu0 0.0
  %1292 = vmatpush1.msra.mxu0 0.0
  %1293 = vmatprep.subr.mxu0 0.0
  %1294 = vmatpush1.msra.mxu0 0.0
  %1295 = vmatprep.subr.mxu0 0.0
  %1296 = vmatpush1.msra.mxu0 0.0
  %1297 = vmatprep.subr.mxu0 0.0
  %1298 = vmatpush1.msra.mxu0 0.0
  %1299 = vmatprep.subr.mxu0 0.0
  %1300 = vmatpush1.msra.mxu0 0.0
  %1301 = vmatprep.subr.mxu0 0.0
  %1302 = vmatpush1.msra.mxu0 0.0
  %1303 = vmatprep.subr.mxu0 0.0
  %1304 = vmatpush1.msra.mxu0 0.0
  %1305 = vmatprep.subr.mxu0 0.0
  %1306 = vmatpush1.msra.mxu0 0.0
  %1307 = vmatprep.subr.mxu0 0.0
  %1308 = vmatpush1.msra.mxu0 0.0
  %1309 = vmatprep.subr.mxu0 0.0
  %1310 = vmatpush1.msra.mxu0 0.0
  %1311 = vmatprep.subr.mxu0 0.0
  %1312 = vmatpush1.msra.mxu0 0.0
  %1313 = vmatprep.subr.mxu0 0.0
  %1314 = vmatpush1.msra.mxu0 0.0
  %1315 = vmatprep.subr.mxu0 0.0
  %1316 = vmatpush1.msra.mxu0 0.0
  %1317 = vmatprep.subr.mxu0 0.0
  %1318 = vmatpush1.msra.mxu0 0.0
  %1319 = vmatprep.subr.mxu0 0.0
  %1320 = vmatpush1.msra.mxu0 0.0
  %1321 = vmatprep.subr.mxu0 0.0
  %1322 = vmatpush1.msra.mxu0 0.0
  %1323 = vmatprep.subr.mxu0 0.0
  %1324 = vmatpush1.msra.mxu0 0.0
  %1325 = vmatprep.subr.mxu0 0.0
  %1326 = vmatpush1.msra.mxu0 0.0
  %1327 = vmatprep.subr.mxu0 0.0
  %1328 = vmatpush1.msra.mxu0 0.0
  %1329 = vmatprep.subr.mxu0 0.0
  %1330 = vmatpush1.msra.mxu0 0.0
  %1331 = vmatprep.subr.mxu0 0.0
  %1332 = vmatpush1.msra.mxu0 0.0
  %1333 = vmatprep.mubr.f32.mxu0 0.0
  %1334 = vmatmul.mubr.f32.gmra.mrb[0].mxu0 %v482
  %v1335 = vpop.f32.mrb[0].mxu0
  %v1336 = vadd.f32 0.0, %v1335
  %v1337 = vpop.f32.mrb[0].mxu0
  %1338 = vdwg.mxu0
  %v1340 = vsel %vm57, %v1262, 0
  %1342 = vmatprep.subr.mxu0 0.0
  %1343 = vmatpush1.msra.mxu0 %v1340
  %1344 = vmatprep.subr.mxu0 0.0
  %1345 = vmatpush1.msra.mxu0 0.0
  %1346 = vmatprep.subr.mxu0 0.0
  %1347 = vmatpush1.msra.mxu0 0.0
  %1348 = vmatprep.subr.mxu0 0.0
  %1349 = vmatpush1.msra.mxu0 0.0
  %1350 = vmatprep.subr.mxu0 0.0
  %1351 = vmatpush1.msra.mxu0 0.0
  %1352 = vmatprep.subr.mxu0 0.0
  %1353 = vmatpush1.msra.mxu0 0.0
  %1354 = vmatprep.subr.mxu0 0.0
  %1355 = vmatpush1.msra.mxu0 0.0
  %1356 = vmatprep.subr.mxu0 0.0
  %1357 = vmatpush1.msra.mxu0 0.0
  %1358 = vmatprep.subr.mxu0 0.0
  %1359 = vmatpush1.msra.mxu0 0.0
  %1360 = vmatprep.subr.mxu0 0.0
  %1361 = vmatpush1.msra.mxu0 0.0
  %1362 = vmatprep.subr.mxu0 0.0
  %1363 = vmatpush1.msra.mxu0 0.0
  %1364 = vmatprep.subr.mxu0 0.0
  %1365 = vmatpush1.msra.mxu0 0.0
  %1366 = vmatprep.subr.mxu0 0.0
  %1367 = vmatpush1.msra.mxu0 0.0
  %1368 = vmatprep.subr.mxu0 0.0
  %1369 = vmatpush1.msra.mxu0 0.0
  %1370 = vmatprep.subr.mxu0 0.0
  %1371 = vmatpush1.msra.mxu0 0.0
  %1372 = vmatprep.subr.mxu0 0.0
  %1373 = vmatpush1.msra.mxu0 0.0
  %1374 = vmatprep.subr.mxu0 0.0
  %1375 = vmatpush1.msra.mxu0 0.0
  %1376 = vmatprep.subr.mxu0 0.0
  %1377 = vmatpush1.msra.mxu0 0.0
  %1378 = vmatprep.subr.mxu0 0.0
  %1379 = vmatpush1.msra.mxu0 0.0
  %1380 = vmatprep.subr.mxu0 0.0
  %1381 = vmatpush1.msra.mxu0 0.0
  %1382 = vmatprep.subr.mxu0 0.0
  %1383 = vmatpush1.msra.mxu0 0.0
  %1384 = vmatprep.subr.mxu0 0.0
  %1385 = vmatpush1.msra.mxu0 0.0
  %1386 = vmatprep.subr.mxu0 0.0
  %1387 = vmatpush1.msra.mxu0 0.0
  %1388 = vmatprep.subr.mxu0 0.0
  %1389 = vmatpush1.msra.mxu0 0.0
  %1390 = vmatprep.subr.mxu0 0.0
  %1391 = vmatpush1.msra.mxu0 0.0
  %1392 = vmatprep.subr.mxu0 0.0
  %1393 = vmatpush1.msra.mxu0 0.0
  %1394 = vmatprep.subr.mxu0 0.0
  %1395 = vmatpush1.msra.mxu0 0.0
  %1396 = vmatprep.subr.mxu0 0.0
  %1397 = vmatpush1.msra.mxu0 0.0
  %1398 = vmatprep.subr.mxu0 0.0
  %1399 = vmatpush1.msra.mxu0 0.0
  %1400 = vmatprep.subr.mxu0 0.0
  %1401 = vmatpush1.msra.mxu0 0.0
  %1402 = vmatprep.subr.mxu0 0.0
  %1403 = vmatpush1.msra.mxu0 0.0
  %1404 = vmatprep.subr.mxu0 0.0
  %1405 = vmatpush1.msra.mxu0 0.0
  %1406 = vmatprep.mubr.f32.mxu0 0.0
  %1407 = vmatmul.mubr.f32.gmra.mrb[0].mxu0 %v558
  %v1408 = vpop.f32.mrb[0].mxu0
  %v1409 = vadd.f32 %v1336, %v1408
  %v1410 = vpop.f32.mrb[0].mxu0
  %1411 = vdwg.mxu0
  %v1413 = vsel %vm57, %v1259, 0
  %1415 = vmatprep.subr.mxu0 0.0
  %1416 = vmatpush1.msra.mxu0 %v1413
  %1417 = vmatprep.subr.mxu0 0.0
  %1418 = vmatpush1.msra.mxu0 0.0
  %1419 = vmatprep.subr.mxu0 0.0
  %1420 = vmatpush1.msra.mxu0 0.0
  %1421 = vmatprep.subr.mxu0 0.0
  %1422 = vmatpush1.msra.mxu0 0.0
  %1423 = vmatprep.subr.mxu0 0.0
  %1424 = vmatpush1.msra.mxu0 0.0
  %1425 = vmatprep.subr.mxu0 0.0
  %1426 = vmatpush1.msra.mxu0 0.0
  %1427 = vmatprep.subr.mxu0 0.0
  %1428 = vmatpush1.msra.mxu0 0.0
  %1429 = vmatprep.subr.mxu0 0.0
  %1430 = vmatpush1.msra.mxu0 0.0
  %1431 = vmatprep.subr.mxu0 0.0
  %1432 = vmatpush1.msra.mxu0 0.0
  %1433 = vmatprep.subr.mxu0 0.0
  %1434 = vmatpush1.msra.mxu0 0.0
  %1435 = vmatprep.subr.mxu0 0.0
  %1436 = vmatpush1.msra.mxu0 0.0
  %1437 = vmatprep.subr.mxu0 0.0
  %1438 = vmatpush1.msra.mxu0 0.0
  %1439 = vmatprep.subr.mxu0 0.0
  %1440 = vmatpush1.msra.mxu0 0.0
  %1441 = vmatprep.subr.mxu0 0.0
  %1442 = vmatpush1.msra.mxu0 0.0
  %1443 = vmatprep.subr.mxu0 0.0
  %1444 = vmatpush1.msra.mxu0 0.0
  %1445 = vmatprep.subr.mxu0 0.0
  %1446 = vmatpush1.msra.mxu0 0.0
  %1447 = vmatprep.subr.mxu0 0.0
  %1448 = vmatpush1.msra.mxu0 0.0
  %1449 = vmatprep.subr.mxu0 0.0
  %1450 = vmatpush1.msra.mxu0 0.0
  %1451 = vmatprep.subr.mxu0 0.0
  %1452 = vmatpush1.msra.mxu0 0.0
  %1453 = vmatprep.subr.mxu0 0.0
  %1454 = vmatpush1.msra.mxu0 0.0
  %1455 = vmatprep.subr.mxu0 0.0
  %1456 = vmatpush1.msra.mxu0 0.0
  %1457 = vmatprep.subr.mxu0 0.0
  %1458 = vmatpush1.msra.mxu0 0.0
  %1459 = vmatprep.subr.mxu0 0.0
  %1460 = vmatpush1.msra.mxu0 0.0
  %1461 = vmatprep.subr.mxu0 0.0
  %1462 = vmatpush1.msra.mxu0 0.0
  %1463 = vmatprep.subr.mxu0 0.0
  %1464 = vmatpush1.msra.mxu0 0.0
  %1465 = vmatprep.subr.mxu0 0.0
  %1466 = vmatpush1.msra.mxu0 0.0
  %1467 = vmatprep.subr.mxu0 0.0
  %1468 = vmatpush1.msra.mxu0 0.0
  %1469 = vmatprep.subr.mxu0 0.0
  %1470 = vmatpush1.msra.mxu0 0.0
  %1471 = vmatprep.subr.mxu0 0.0
  %1472 = vmatpush1.msra.mxu0 0.0
  %1473 = vmatprep.subr.mxu0 0.0
  %1474 = vmatpush1.msra.mxu0 0.0
  %1475 = vmatprep.subr.mxu0 0.0
  %1476 = vmatpush1.msra.mxu0 0.0
  %1477 = vmatprep.subr.mxu0 0.0
  %1478 = vmatpush1.msra.mxu0 0.0
  %1479 = vmatprep.mubr.f32.mxu0 0.0
  %1480 = vmatmul.mubr.f32.gmra.mrb[0].mxu0 %v634
  %v1481 = vpop.f32.mrb[0].mxu0
  %v1482 = vadd.f32 0.0, %v1481
  %v1483 = vpop.f32.mrb[0].mxu0
  %1484 = vdwg.mxu0
  %v1485 = vadd.f32 %v1409, %v1482
  %1486 = vrot.lane.b32.xlu0 %v1259, 127
  %v1487 = vpop.permute.xlu0 %1486
  %v1488 = vsel %vm303, %v1487, 0.0
  %v1490 = vsel %vm57, %v1488, 0
  %1492 = vmatprep.subr.mxu0 0.0
  %1493 = vmatpush1.msra.mxu0 %v1490
  %1494 = vmatprep.subr.mxu0 0.0
  %1495 = vmatpush1.msra.mxu0 0.0
  %1496 = vmatprep.subr.mxu0 0.0
  %1497 = vmatpush1.msra.mxu0 0.0
  %1498 = vmatprep.subr.mxu0 0.0
  %1499 = vmatpush1.msra.mxu0 0.0
  %1500 = vmatprep.subr.mxu0 0.0
  %1501 = vmatpush1.msra.mxu0 0.0
  %1502 = vmatprep.subr.mxu0 0.0
  %1503 = vmatpush1.msra.mxu0 0.0
  %1504 = vmatprep.subr.mxu0 0.0
  %1505 = vmatpush1.msra.mxu0 0.0
  %1506 = vmatprep.subr.mxu0 0.0
  %1507 = vmatpush1.msra.mxu0 0.0
  %1508 = vmatprep.subr.mxu0 0.0
  %1509 = vmatpush1.msra.mxu0 0.0
  %1510 = vmatprep.subr.mxu0 0.0
  %1511 = vmatpush1.msra.mxu0 0.0
  %1512 = vmatprep.subr.mxu0 0.0
  %1513 = vmatpush1.msra.mxu0 0.0
  %1514 = vmatprep.subr.mxu0 0.0
  %1515 = vmatpush1.msra.mxu0 0.0
  %1516 = vmatprep.subr.mxu0 0.0
  %1517 = vmatpush1.msra.mxu0 0.0
  %1518 = vmatprep.subr.mxu0 0.0
  %1519 = vmatpush1.msra.mxu0 0.0
  %1520 = vmatprep.subr.mxu0 0.0
  %1521 = vmatpush1.msra.mxu0 0.0
  %1522 = vmatprep.subr.mxu0 0.0
  %1523 = vmatpush1.msra.mxu0 0.0
  %1524 = vmatprep.subr.mxu0 0.0
  %1525 = vmatpush1.msra.mxu0 0.0
  %1526 = vmatprep.subr.mxu0 0.0
  %1527 = vmatpush1.msra.mxu0 0.0
  %1528 = vmatprep.subr.mxu0 0.0
  %1529 = vmatpush1.msra.mxu0 0.0
  %1530 = vmatprep.subr.mxu0 0.0
  %1531 = vmatpush1.msra.mxu0 0.0
  %1532 = vmatprep.subr.mxu0 0.0
  %1533 = vmatpush1.msra.mxu0 0.0
  %1534 = vmatprep.subr.mxu0 0.0
  %1535 = vmatpush1.msra.mxu0 0.0
  %1536 = vmatprep.subr.mxu0 0.0
  %1537 = vmatpush1.msra.mxu0 0.0
  %1538 = vmatprep.subr.mxu0 0.0
  %1539 = vmatpush1.msra.mxu0 0.0
  %1540 = vmatprep.subr.mxu0 0.0
  %1541 = vmatpush1.msra.mxu0 0.0
  %1542 = vmatprep.subr.mxu0 0.0
  %1543 = vmatpush1.msra.mxu0 0.0
  %1544 = vmatprep.subr.mxu0 0.0
  %1545 = vmatpush1.msra.mxu0 0.0
  %1546 = vmatprep.subr.mxu0 0.0
  %1547 = vmatpush1.msra.mxu0 0.0
  %1548 = vmatprep.subr.mxu0 0.0
  %1549 = vmatpush1.msra.mxu0 0.0
  %1550 = vmatprep.subr.mxu0 0.0
  %1551 = vmatpush1.msra.mxu0 0.0
  %1552 = vmatprep.subr.mxu0 0.0
  %1553 = vmatpush1.msra.mxu0 0.0
  %1554 = vmatprep.subr.mxu0 0.0
  %1555 = vmatpush1.msra.mxu0 0.0
  %1556 = vmatprep.mubr.f32.mxu0 0.0
  %1557 = vmatmul.mubr.f32.gmra.mrb[0].mxu0 %v714
  %v1558 = vpop.f32.mrb[0].mxu0
  %v1559 = vadd.f32 0.0, %v1558
  %v1560 = vpop.f32.mrb[0].mxu0
  %1561 = vdwg.mxu0
  %v1562 = vadd.f32 %v1485, %v1559
  %1563 = vrot.lane.b32.xlu0 %v1259, 126
  %v1564 = vpop.permute.xlu0 %1563
  %v1565 = vsel %vm792, %v1564, 0.0
  %v1567 = vsel %vm57, %v1565, 0
  %1569 = vmatprep.subr.mxu0 0.0
  %1570 = vmatpush1.msra.mxu0 %v1567
  %1571 = vmatprep.subr.mxu0 0.0
  %1572 = vmatpush1.msra.mxu0 0.0
  %1573 = vmatprep.subr.mxu0 0.0
  %1574 = vmatpush1.msra.mxu0 0.0
  %1575 = vmatprep.subr.mxu0 0.0
  %1576 = vmatpush1.msra.mxu0 0.0
  %1577 = vmatprep.subr.mxu0 0.0
  %1578 = vmatpush1.msra.mxu0 0.0
  %1579 = vmatprep.subr.mxu0 0.0
  %1580 = vmatpush1.msra.mxu0 0.0
  %1581 = vmatprep.subr.mxu0 0.0
  %1582 = vmatpush1.msra.mxu0 0.0
  %1583 = vmatprep.subr.mxu0 0.0
  %1584 = vmatpush1.msra.mxu0 0.0
  %1585 = vmatprep.subr.mxu0 0.0
  %1586 = vmatpush1.msra.mxu0 0.0
  %1587 = vmatprep.subr.mxu0 0.0
  %1588 = vmatpush1.msra.mxu0 0.0
  %1589 = vmatprep.subr.mxu0 0.0
  %1590 = vmatpush1.msra.mxu0 0.0
  %1591 = vmatprep.subr.mxu0 0.0
  %1592 = vmatpush1.msra.mxu0 0.0
  %1593 = vmatprep.subr.mxu0 0.0
  %1594 = vmatpush1.msra.mxu0 0.0
  %1595 = vmatprep.subr.mxu0 0.0
  %1596 = vmatpush1.msra.mxu0 0.0
  %1597 = vmatprep.subr.mxu0 0.0
  %1598 = vmatpush1.msra.mxu0 0.0
  %1599 = vmatprep.subr.mxu0 0.0
  %1600 = vmatpush1.msra.mxu0 0.0
  %1601 = vmatprep.subr.mxu0 0.0
  %1602 = vmatpush1.msra.mxu0 0.0
  %1603 = vmatprep.subr.mxu0 0.0
  %1604 = vmatpush1.msra.mxu0 0.0
  %1605 = vmatprep.subr.mxu0 0.0
  %1606 = vmatpush1.msra.mxu0 0.0
  %1607 = vmatprep.subr.mxu0 0.0
  %1608 = vmatpush1.msra.mxu0 0.0
  %1609 = vmatprep.subr.mxu0 0.0
  %1610 = vmatpush1.msra.mxu0 0.0
  %1611 = vmatprep.subr.mxu0 0.0
  %1612 = vmatpush1.msra.mxu0 0.0
  %1613 = vmatprep.subr.mxu0 0.0
  %1614 = vmatpush1.msra.mxu0 0.0
  %1615 = vmatprep.subr.mxu0 0.0
  %1616 = vmatpush1.msra.mxu0 0.0
  %1617 = vmatprep.subr.mxu0 0.0
  %1618 = vmatpush1.msra.mxu0 0.0
  %1619 = vmatprep.subr.mxu0 0.0
  %1620 = vmatpush1.msra.mxu0 0.0
  %1621 = vmatprep.subr.mxu0 0.0
  %1622 = vmatpush1.msra.mxu0 0.0
  %1623 = vmatprep.subr.mxu0 0.0
  %1624 = vmatpush1.msra.mxu0 0.0
  %1625 = vmatprep.subr.mxu0 0.0
  %1626 = vmatpush1.msra.mxu0 0.0
  %1627 = vmatprep.subr.mxu0 0.0
  %1628 = vmatpush1.msra.mxu0 0.0
  %1629 = vmatprep.subr.mxu0 0.0
  %1630 = vmatpush1.msra.mxu0 0.0
  %1631 = vmatprep.subr.mxu0 0.0
  %1632 = vmatpush1.msra.mxu0 0.0
  %1633 = vmatprep.mubr.f32.mxu0 0.0
  %1634 = vmatmul.mubr.f32.gmra.mrb[0].mxu0 %v795
  %v1635 = vpop.f32.mrb[0].mxu0
  %v1636 = vadd.f32 0.0, %v1635
  %v1637 = vpop.f32.mrb[0].mxu0
  %1638 = vdwg.mxu0
  %v1639 = vadd.f32 %v1562, %v1636
  %1640 = vadd.xlane.f32.xlu0 %v1639
  %v1641 = vpop.xlane.xlu0 %1640
  %v1642 = vadd.f32 %v873, %v1641
  %v1643 = vmul.f32 %v1639, %v1639
  %1644 = vadd.xlane.f32.xlu0 %v1643
  %v1645 = vpop.xlane.xlu0 %1644
  %v1646 = vadd.f32 %v877, %v1645
  %v1647 = vld [vmem:[%s7] sm:$0xff]
  %v1648 = vadd.f32 %v1647, %v1182
  %vm1649 = vcmask 7168
  %1650 = vst.msk [vmem:[%s7] sm:$0xff] %vm1649, %v1648
  %v1651 = vld [vmem:[%s8] sm:$0xff]
  %v1652 = vadd.f32 %v1651, %v1186
  %1653 = vst.msk [vmem:[%s8] sm:$0xff] %vm1649, %v1652
  %v1654 = vld [vmem:[%s9] sm:$0xff]
  %v1655 = vadd.f32 %v1654, %v1642
  %1656 = vst.msk [vmem:[%s9] sm:$0xff] %vm1649, %v1655
  %v1657 = vld [vmem:[%s10] sm:$0xff]
  %v1658 = vadd.f32 %v1657, %v1646
  %1659 = vst.msk [vmem:[%s10] sm:$0xff] %vm1649, %v1658
  // Predicated region
  $region34: #{inception1d_block_forward.4} parent=0 // pred_check
    _
  $region35: #{inception1d_block_forward.4} parent=0 // pred_check_branch
    %1661 = sbr.rel (0) target = $region37
  $region36: #{inception1d_block_forward.4} parent=0 // pred_region
    _
  $region37: #{inception1d_block_forward.4} parent=0 // pred_fallthru
    _
  // Predicated region
  $region38: #{inception1d_block_forward.4} parent=0 // pred_check
    _
  $region39: #{inception1d_block_forward.4} parent=0 // pred_check_branch
    %1663 = sbr.rel (0) target = $region41
  $region40: #{inception1d_block_forward.4} parent=0 // pred_region
    _
  $region41: #{inception1d_block_forward.4} parent=0 // pred_fallthru
    _
  // Predicated region
  $region42: #{inception1d_block_forward.4} parent=0 // pred_check
    _
  $region43: #{inception1d_block_forward.4} parent=0 // pred_check_branch
    %1665 = sbr.rel (0) target = $region45
  $region44: #{inception1d_block_forward.4} parent=0 // pred_region
    _
  $region45: #{inception1d_block_forward.4} parent=0 // pred_fallthru
    _
  // Predicated region
  $region46: #{inception1d_block_forward.4} parent=0 // pred_check
    _
  $region47: #{inception1d_block_forward.4} parent=0 // pred_check_branch
    %1667 = sbr.rel (0) target = $region49
  $region48: #{inception1d_block_forward.4} parent=0 // pred_region
    _
  $region49: #{inception1d_block_forward.4} parent=0 // pred_fallthru
    _
  // Predicated region
  $region50: #{inception1d_block_forward.4} parent=0 // pred_check
    _
  $region51: #{inception1d_block_forward.4} parent=0 // pred_check_branch
    %1669 = sbr.rel (0) target = $region53
  $region52: #{inception1d_block_forward.4} parent=0 // pred_region
    _
  $region53: #{inception1d_block_forward.4} parent=0 // pred_fallthru
    _
  // Predicated region
  $region54: #{inception1d_block_forward.4} parent=0 // pred_check
    _
  $region55: #{inception1d_block_forward.4} parent=0 // pred_check_branch
    %1671 = sbr.rel (0) target = $region57
  $region56: #{inception1d_block_forward.4} parent=0 // pred_region
    _
  $region57: #{inception1d_block_forward.4} parent=0 // pred_fallthru
    _
  // Predicated region
  $region58: #{inception1d_block_forward.4} parent=0 // pred_check
    _
  $region59: #{inception1d_block_forward.4} parent=0 // pred_check_branch
    %1673 = sbr.rel (0) target = $region61
  $region60: #{inception1d_block_forward.4} parent=0 // pred_region
    _
  $region61: #{inception1d_block_forward.4} parent=0 // pred_fallthru
    _
  // Predicated region
  $region62: #{inception1d_block_forward.4} parent=0 // pred_check
    _
  $region63: #{inception1d_block_forward.4} parent=0 // pred_check_branch
    %1675 = sbr.rel (0) target = $region65
  $region64: #{inception1d_block_forward.4} parent=0 // pred_region
    _
  $region65: #{inception1d_block_forward.4} parent=0 // pred_fallthru
    _

// kernel: inception1d_block_forward.5
$region0: #{inception1d_block_forward.5}
  #allocation0 [shape = 'u32[]', space=smem, size = 0x4, offset = 0x4, fixed_abs, tag = 'smem constant byte address 0x4 - core index']
  #allocation1 [shape = 'u32[144,128]{1,0:T(1,128)}', space=vmem, size = 0x12000, scoped, tag = 'internal scratch']
  %s0 = inlined_call_operand.vmem [shape: f32[2,4,128], index: 0, kind: input, shape index: {}]
  %s1 = inlined_call_operand.vmem [shape: f32[8,4], index: 1, kind: input, shape index: {}]
  %s2 = inlined_call_operand.vmem [shape: f32[4,4], index: 2, kind: input, shape index: {}]
  %s3 = inlined_call_operand.vmem [shape: f32[4,4], index: 3, kind: input, shape index: {}]
  %s4 = inlined_call_operand.vmem [shape: f32[8,4], index: 4, kind: input, shape index: {}]
  %s5 = inlined_call_operand.vmem [shape: f32[3,8,4], index: 5, kind: input, shape index: {}]
  %s6 = inlined_call_operand.vmem [shape: f32[5,8,4], index: 6, kind: input, shape index: {}]
  %s7 = inlined_call_operand.vmem [shape: f32[8,2], index: 7, kind: input, shape index: {}]
  %s8 = inlined_call_operand.vmem [shape: f32[4,2], index: 8, kind: input, shape index: {}]
  %s9 = inlined_call_operand.vmem [shape: f32[4,2], index: 9, kind: input, shape index: {}]
  %s10 = inlined_call_operand.vmem [shape: f32[8,2], index: 10, kind: input, shape index: {}]
  %s11 = inlined_call_operand.vmem [shape: f32[8,2], index: 11, kind: input, shape index: {}]
  %s12 = inlined_call_operand.vmem [shape: f32[8,2], index: 12, kind: input, shape index: {}]
  %s13 = inlined_call_operand.hbm [shape: f32[2,32,128], index: 13, kind: output, shape index: {}]
  %s14 = sld [smem:[#allocation0]]
  $region62: #{inception1d_block_forward.5} parent=0
    _
  %s16 = ssub.s32 1, %s14
  %s17 = scalar_select 0, %s16, %s14
  $region1: #{inception1d_block_forward.5} parent=0
    #allocation2 [shape = 'u8[32768]{0}', space=vmem, size = 0x8000, scoped, tag = 'output window, operand 0, single buffered']
    #allocation3 [shape = 's32[1]{0}', space=sflag, size = 0x4, scoped, tag = 'scoped memory for inception1d_block_forward.5']
    %18 = vsyncpa [#allocation3], 0
    // Predicated region
    $region2: #{inception1d_block_forward.5} parent=1 // pred_check
      _
    $region3: #{inception1d_block_forward.5} parent=1 // pred_check_branch
      %20 = sbr.rel (0) target = $region5
    $region4: #{inception1d_block_forward.5} parent=1 // pred_region
      _
    $region5: #{inception1d_block_forward.5} parent=1 // pred_fallthru
      _
    // Predicated region
    $region6: #{inception1d_block_forward.5} parent=1 // pred_check
      _
    $region7: #{inception1d_block_forward.5} parent=1 // pred_check_branch
      %22 = sbr.rel (0) target = $region9
    $region8: #{inception1d_block_forward.5} parent=1 // pred_region
      _
    $region9: #{inception1d_block_forward.5} parent=1 // pred_fallthru
      _
    // Predicated region
    $region10: #{inception1d_block_forward.5} parent=1 // pred_check
      _
    $region11: #{inception1d_block_forward.5} parent=1 // pred_check_branch
      %24 = sbr.rel (0) target = $region13
    $region12: #{inception1d_block_forward.5} parent=1 // pred_region
      _
    $region13: #{inception1d_block_forward.5} parent=1 // pred_fallthru
      _
    // Predicated region
    $region14: #{inception1d_block_forward.5} parent=1 // pred_check
      _
    $region15: #{inception1d_block_forward.5} parent=1 // pred_check_branch
      %26 = sbr.rel (0) target = $region17
    $region16: #{inception1d_block_forward.5} parent=1 // pred_region
      _
    $region17: #{inception1d_block_forward.5} parent=1 // pred_fallthru
      _
    // Predicated region
    $region18: #{inception1d_block_forward.5} parent=1 // pred_check
      _
    $region19: #{inception1d_block_forward.5} parent=1 // pred_check_branch
      %28 = sbr.rel (0) target = $region21
    $region20: #{inception1d_block_forward.5} parent=1 // pred_region
      _
    $region21: #{inception1d_block_forward.5} parent=1 // pred_fallthru
      _
    // Predicated region
    $region22: #{inception1d_block_forward.5} parent=1 // pred_check
      _
    $region23: #{inception1d_block_forward.5} parent=1 // pred_check_branch
      %30 = sbr.rel (0) target = $region25
    $region24: #{inception1d_block_forward.5} parent=1 // pred_region
      _
    $region25: #{inception1d_block_forward.5} parent=1 // pred_fallthru
      _
    // Predicated region
    $region26: #{inception1d_block_forward.5} parent=1 // pred_check
      _
    $region27: #{inception1d_block_forward.5} parent=1 // pred_check_branch
      %32 = sbr.rel (0) target = $region29
    $region28: #{inception1d_block_forward.5} parent=1 // pred_region
      _
    $region29: #{inception1d_block_forward.5} parent=1 // pred_fallthru
      _
    // Predicated region
    $region30: #{inception1d_block_forward.5} parent=1 // pred_check
      _
    $region31: #{inception1d_block_forward.5} parent=1 // pred_check_branch
      %34 = sbr.rel (0) target = $region33
    $region32: #{inception1d_block_forward.5} parent=1 // pred_region
      _
    $region33: #{inception1d_block_forward.5} parent=1 // pred_fallthru
      _
    // Predicated region
    $region34: #{inception1d_block_forward.5} parent=1 // pred_check
      _
    $region35: #{inception1d_block_forward.5} parent=1 // pred_check_branch
      %36 = sbr.rel (0) target = $region37
    $region36: #{inception1d_block_forward.5} parent=1 // pred_region
      _
    $region37: #{inception1d_block_forward.5} parent=1 // pred_fallthru
      _
    // Predicated region
    $region38: #{inception1d_block_forward.5} parent=1 // pred_check
      _
    $region39: #{inception1d_block_forward.5} parent=1 // pred_check_branch
      %38 = sbr.rel (0) target = $region41
    $region40: #{inception1d_block_forward.5} parent=1 // pred_region
      _
    $region41: #{inception1d_block_forward.5} parent=1 // pred_fallthru
      _
    // Predicated region
    $region42: #{inception1d_block_forward.5} parent=1 // pred_check
      _
    $region43: #{inception1d_block_forward.5} parent=1 // pred_check_branch
      %40 = sbr.rel (0) target = $region45
    $region44: #{inception1d_block_forward.5} parent=1 // pred_region
      _
    $region45: #{inception1d_block_forward.5} parent=1 // pred_fallthru
      _
    // Predicated region
    $region46: #{inception1d_block_forward.5} parent=1 // pred_check
      _
    $region47: #{inception1d_block_forward.5} parent=1 // pred_check_branch
      %42 = sbr.rel (0) target = $region49
    $region48: #{inception1d_block_forward.5} parent=1 // pred_region
      _
    $region49: #{inception1d_block_forward.5} parent=1 // pred_fallthru
      _
    // Predicated region
    $region50: #{inception1d_block_forward.5} parent=1 // pred_check
      _
    $region51: #{inception1d_block_forward.5} parent=1 // pred_check_branch
      %44 = sbr.rel (0) target = $region53
    $region52: #{inception1d_block_forward.5} parent=1 // pred_region
      _
    $region53: #{inception1d_block_forward.5} parent=1 // pred_fallthru
      _
    %v45 = vld [vmem:[%s0] sm:$0xf]
    %v46 = vld [vmem:[%s0 + $0x4] sm:$0xf]
    %v47 = vlaneseq
    %v48 = vand.u32 %v47, 127
    %vm49 = vcmp.ge.s32.totalorder %v48, 1
    %50 = vrot.lane.b32.xlu0 %v45, 1
    %v51 = vpop.permute.xlu0 %50
    %52 = vrot.lane.b32.xlu0 %v46, 1
    %v53 = vpop.permute.xlu0 %52
    %v54 = vsel %vm49, %v51, -inf
    %v55 = vsel %vm49, %v53, -inf
    %vm56 = vcmp.lt.s32.totalorder %v48, 127
    %57 = vrot.lane.b32.xlu0 %v45, 127
    %v58 = vpop.permute.xlu0 %57
    %59 = vrot.lane.b32.xlu0 %v46, 127
    %v60 = vpop.permute.xlu0 %59
    %v61 = vsel %vm56, %v58, -inf
    %v62 = vsel %vm56, %v60, -inf
    %v63 = vmax.f32 %v54, %v45
    %v64 = vmax.f32 %v55, %v46
    %v65 = vmax.f32 %v63, %v61
    %v66 = vmax.f32 %v64, %v62
    %v67 = vld [vmem:[%s1] sm:$0xff]
    %v68 = vld [vmem:[%s2] sm:$0xf]
    %v69 = vld [vmem:[%s3] sm:$0xf]
    %v70 = vld [vmem:[%s4] sm:$0xff]
    %v71 = vld [vmem:[%s5] sm:$0xff]
    %v72 = vld [vmem:[%s5 + $0x8] sm:$0xff]
    %v73 = vld [vmem:[%s5 + $0x10] sm:$0xff]
    %v74 = vld [vmem:[%s6] sm:$0xff]
    %v75 = vld [vmem:[%s6 + $0x8] sm:$0xff]
    %v76 = vld [vmem:[%s6 + $0x10] sm:$0xff]
    %v77 = vld [vmem:[%s6 + $0x18] sm:$0xff]
    %v78 = vld [vmem:[%s6 + $0x20] sm:$0xff]
    %v79 = vld [vmem:[%s7] sm:$0xff]
    %v80 = vld [vmem:[%s8] sm:$0xf]
    %v81 = vld [vmem:[%s9] sm:$0xf]
    %v82 = vld [vmem:[%s10] sm:$0xff]
    %v83 = vld [vmem:[%s11] sm:$0xff]
    %v84 = vld [vmem:[%s12] sm:$0xff]
    %vm85 = vcmask 31744
    %v87 = vsel %vm85, %v67, 0
    %vm89 = vcmask 1043456
    %v91 = vsel %vm89, %v45, 0
    %93 = vmatprep.subr.mxu0 0.0
    %94 = vmatpush1.msra.mxu0 %v91
    %95 = vmatprep.subr.mxu0 0.0
    %96 = vmatpush1.msra.mxu0 0.0
    %97 = vmatprep.subr.mxu0 0.0
    %98 = vmatpush1.msra.mxu0 0.0
    %99 = vmatprep.subr.mxu0 0.0
    %100 = vmatpush1.msra.mxu0 0.0
    %101 = vmatprep.subr.mxu0 0.0
    %102 = vmatpush1.msra.mxu0 0.0
    %103 = vmatprep.subr.mxu0 0.0
    %104 = vmatpush1.msra.mxu0 0.0
    %105 = vmatprep.subr.mxu0 0.0
    %106 = vmatpush1.msra.mxu0 0.0
    %107 = vmatprep.subr.mxu0 0.0
    %108 = vmatpush1.msra.mxu0 0.0
    %109 = vmatprep.subr.mxu0 0.0
    %110 = vmatpush1.msra.mxu0 0.0
    %111 = vmatprep.subr.mxu0 0.0
    %112 = vmatpush1.msra.mxu0 0.0
    %113 = vmatprep.subr.mxu0 0.0
    %114 = vmatpush1.msra.mxu0 0.0
    %115 = vmatprep.subr.mxu0 0.0
    %116 = vmatpush1.msra.mxu0 0.0
    %117 = vmatprep.subr.mxu0 0.0
    %118 = vmatpush1.msra.mxu0 0.0
    %119 = vmatprep.subr.mxu0 0.0
    %120 = vmatpush1.msra.mxu0 0.0
    %121 = vmatprep.subr.mxu0 0.0
    %122 = vmatpush1.msra.mxu0 0.0
    %123 = vmatprep.subr.mxu0 0.0
    %124 = vmatpush1.msra.mxu0 0.0
    %125 = vmatprep.subr.mxu0 0.0
    %126 = vmatpush1.msra.mxu0 0.0
    %127 = vmatprep.subr.mxu0 0.0
    %128 = vmatpush1.msra.mxu0 0.0
    %129 = vmatprep.subr.mxu0 0.0
    %130 = vmatpush1.msra.mxu0 0.0
    %131 = vmatprep.subr.mxu0 0.0
    %132 = vmatpush1.msra.mxu0 0.0
    %133 = vmatprep.subr.mxu0 0.0
    %134 = vmatpush1.msra.mxu0 0.0
    %135 = vmatprep.subr.mxu0 0.0
    %136 = vmatpush1.msra.mxu0 0.0
    %137 = vmatprep.subr.mxu0 0.0
    %138 = vmatpush1.msra.mxu0 0.0
    %139 = vmatprep.subr.mxu0 0.0
    %140 = vmatpush1.msra.mxu0 0.0
    %141 = vmatprep.subr.mxu0 0.0
    %142 = vmatpush1.msra.mxu0 0.0
    %143 = vmatprep.subr.mxu0 0.0
    %144 = vmatpush1.msra.mxu0 0.0
    %145 = vmatprep.subr.mxu0 0.0
    %146 = vmatpush1.msra.mxu0 0.0
    %147 = vmatprep.subr.mxu0 0.0
    %148 = vmatpush1.msra.mxu0 0.0
    %149 = vmatprep.subr.mxu0 0.0
    %150 = vmatpush1.msra.mxu0 0.0
    %151 = vmatprep.subr.mxu0 0.0
    %152 = vmatpush1.msra.mxu0 0.0
    %153 = vmatprep.subr.mxu0 0.0
    %154 = vmatpush1.msra.mxu0 0.0
    %155 = vmatprep.subr.mxu0 0.0
    %156 = vmatpush1.msra.mxu0 0.0
    %157 = vmatprep.mubr.f32.mxu0 0.0
    %158 = vmatmul.mubr.f32.gmra.mrb[0].mxu0 %v87
    %v159 = vpop.f32.mrb[0].mxu0
    %v160 = vadd.f32 0.0, %v159
    %v161 = vpop.f32.mrb[0].mxu0
    %162 = vdwg.mxu0
    %164 = vset.pattern.permute.xlu0 0
    %165 = vperm.xlu0 %164, %v79
    %v166 = vpop.permute.xlu0 %165
    %v168 = vmul.f32 %v160, %v166
    %169 = vset.pattern.permute.xlu0 1
    %170 = vperm.xlu0 %169, %v79
    %v171 = vpop.permute.xlu0 %170
    %v173 = vadd.f32 %v168, %v171
    %v174 = vmax.f32 %v173, 0.0
    %175 = vst [vmem:[#allocation2] sm:$0xff] %v174
    %v177 = vsel %vm85, %v68, 0
    %179 = vmatprep.subr.mxu0 0.0
    %180 = vmatpush1.msra.mxu0 %v91
    %181 = vmatprep.subr.mxu0 0.0
    %182 = vmatpush1.msra.mxu0 0.0
    %183 = vmatprep.subr.mxu0 0.0
    %184 = vmatpush1.msra.mxu0 0.0
    %185 = vmatprep.subr.mxu0 0.0
    %186 = vmatpush1.msra.mxu0 0.0
    %187 = vmatprep.subr.mxu0 0.0
    %188 = vmatpush1.msra.mxu0 0.0
    %189 = vmatprep.subr.mxu0 0.0
    %190 = vmatpush1.msra.mxu0 0.0
    %191 = vmatprep.subr.mxu0 0.0
    %192 = vmatpush1.msra.mxu0 0.0
    %193 = vmatprep.subr.mxu0 0.0
    %194 = vmatpush1.msra.mxu0 0.0
    %195 = vmatprep.subr.mxu0 0.0
    %196 = vmatpush1.msra.mxu0 0.0
    %197 = vmatprep.subr.mxu0 0.0
    %198 = vmatpush1.msra.mxu0 0.0
    %199 = vmatprep.subr.mxu0 0.0
    %200 = vmatpush1.msra.mxu0 0.0
    %201 = vmatprep.subr.mxu0 0.0
    %202 = vmatpush1.msra.mxu0 0.0
    %203 = vmatprep.subr.mxu0 0.0
    %204 = vmatpush1.msra.mxu0 0.0
    %205 = vmatprep.subr.mxu0 0.0
    %206 = vmatpush1.msra.mxu0 0.0
    %207 = vmatprep.subr.mxu0 0.0
    %208 = vmatpush1.msra.mxu0 0.0
    %209 = vmatprep.subr.mxu0 0.0
    %210 = vmatpush1.msra.mxu0 0.0
    %211 = vmatprep.subr.mxu0 0.0
    %212 = vmatpush1.msra.mxu0 0.0
    %213 = vmatprep.subr.mxu0 0.0
    %214 = vmatpush1.msra.mxu0 0.0
    %215 = vmatprep.subr.mxu0 0.0
    %216 = vmatpush1.msra.mxu0 0.0
    %217 = vmatprep.subr.mxu0 0.0
    %218 = vmatpush1.msra.mxu0 0.0
    %219 = vmatprep.subr.mxu0 0.0
    %220 = vmatpush1.msra.mxu0 0.0
    %221 = vmatprep.subr.mxu0 0.0
    %222 = vmatpush1.msra.mxu0 0.0
    %223 = vmatprep.subr.mxu0 0.0
    %224 = vmatpush1.msra.mxu0 0.0
    %225 = vmatprep.subr.mxu0 0.0
    %226 = vmatpush1.msra.mxu0 0.0
    %227 = vmatprep.subr.mxu0 0.0
    %228 = vmatpush1.msra.mxu0 0.0
    %229 = vmatprep.subr.mxu0 0.0
    %230 = vmatpush1.msra.mxu0 0.0
    %231 = vmatprep.subr.mxu0 0.0
    %232 = vmatpush1.msra.mxu0 0.0
    %233 = vmatprep.subr.mxu0 0.0
    %234 = vmatpush1.msra.mxu0 0.0
    %235 = vmatprep.subr.mxu0 0.0
    %236 = vmatpush1.msra.mxu0 0.0
    %237 = vmatprep.subr.mxu0 0.0
    %238 = vmatpush1.msra.mxu0 0.0
    %239 = vmatprep.subr.mxu0 0.0
    %240 = vmatpush1.msra.mxu0 0.0
    %241 = vmatprep.subr.mxu0 0.0
    %242 = vmatpush1.msra.mxu0 0.0
    %243 = vmatprep.mubr.f32.mxu0 0.0
    %244 = vmatmul.mubr.f32.gmra.mrb[0].mxu0 %v177
    %v245 = vpop.f32.mrb[0].mxu0
    %v246 = vadd.f32 0.0, %v245
    %v247 = vpop.f32.mrb[0].mxu0
    %248 = vdwg.mxu0
    %250 = vset.pattern.permute.xlu0 0
    %251 = vperm.xlu0 %250, %v80
    %v252 = vpop.permute.xlu0 %251
    %v254 = vmul.f32 %v246, %v252
    %255 = vset.pattern.permute.xlu0 1
    %256 = vperm.xlu0 %255, %v80
    %v257 = vpop.permute.xlu0 %256
    %v259 = vadd.f32 %v254, %v257
    %v260 = vmax.f32 %v259, 0.0
    %261 = vrot.lane.b32.xlu0 %v260, 1
    %v262 = vpop.permute.xlu0 %261
    %v263 = vsel %vm49, %v262, 0.0
    %v265 = vsel %vm85, %v72, 0
    %v268 = vsel %vm89, %v260, 0
    %270 = vmatprep.subr.mxu0 0.0
    %271 = vmatpush1.msra.mxu0 %v268
    %272 = vmatprep.subr.mxu0 0.0
    %273 = vmatpush1.msra.mxu0 0.0
    %274 = vmatprep.subr.mxu0 0.0
    %275 = vmatpush1.msra.mxu0 0.0
    %276 = vmatprep.subr.mxu0 0.0
    %277 = vmatpush1.msra.mxu0 0.0
    %278 = vmatprep.subr.mxu0 0.0
    %279 = vmatpush1.msra.mxu0 0.0
    %280 = vmatprep.subr.mxu0 0.0
    %281 = vmatpush1.msra.mxu0 0.0
    %282 = vmatprep.subr.mxu0 0.0
    %283 = vmatpush1.msra.mxu0 0.0
    %284 = vmatprep.subr.mxu0 0.0
    %285 = vmatpush1.msra.mxu0 0.0
    %286 = vmatprep.subr.mxu0 0.0
    %287 = vmatpush1.msra.mxu0 0.0
    %288 = vmatprep.subr.mxu0 0.0
    %289 = vmatpush1.msra.mxu0 0.0
    %290 = vmatprep.subr.mxu0 0.0
    %291 = vmatpush1.msra.mxu0 0.0
    %292 = vmatprep.subr.mxu0 0.0
    %293 = vmatpush1.msra.mxu0 0.0
    %294 = vmatprep.subr.mxu0 0.0
    %295 = vmatpush1.msra.mxu0 0.0
    %296 = vmatprep.subr.mxu0 0.0
    %297 = vmatpush1.msra.mxu0 0.0
    %298 = vmatprep.subr.mxu0 0.0
    %299 = vmatpush1.msra.mxu0 0.0
    %300 = vmatprep.subr.mxu0 0.0
    %301 = vmatpush1.msra.mxu0 0.0
    %302 = vmatprep.subr.mxu0 0.0
    %303 = vmatpush1.msra.mxu0 0.0
    %304 = vmatprep.subr.mxu0 0.0
    %305 = vmatpush1.msra.mxu0 0.0
    %306 = vmatprep.subr.mxu0 0.0
    %307 = vmatpush1.msra.mxu0 0.0
    %308 = vmatprep.subr.mxu0 0.0
    %309 = vmatpush1.msra.mxu0 0.0
    %310 = vmatprep.subr.mxu0 0.0
    %311 = vmatpush1.msra.mxu0 0.0
    %312 = vmatprep.subr.mxu0 0.0
    %313 = vmatpush1.msra.mxu0 0.0
    %314 = vmatprep.subr.mxu0 0.0
    %315 = vmatpush1.msra.mxu0 0.0
    %316 = vmatprep.subr.mxu0 0.0
    %317 = vmatpush1.msra.mxu0 0.0
    %318 = vmatprep.subr.mxu0 0.0
    %319 = vmatpush1.msra.mxu0 0.0
    %320 = vmatprep.subr.mxu0 0.0
    %321 = vmatpush1.msra.mxu0 0.0
    %322 = vmatprep.subr.mxu0 0.0
    %323 = vmatpush1.msra.mxu0 0.0
    %324 = vmatprep.subr.mxu0 0.0
    %325 = vmatpush1.msra.mxu0 0.0
    %326 = vmatprep.subr.mxu0 0.0
    %327 = vmatpush1.msra.mxu0 0.0
    %328 = vmatprep.subr.mxu0 0.0
    %329 = vmatpush1.msra.mxu0 0.0
    %330 = vmatprep.subr.mxu0 0.0
    %331 = vmatpush1.msra.mxu0 0.0
    %332 = vmatprep.subr.mxu0 0.0
    %333 = vmatpush1.msra.mxu0 0.0
    %334 = vmatprep.mubr.f32.mxu0 0.0
    %335 = vmatmul.mubr.f32.gmra.mrb[0].mxu0 %v265
    %v336 = vpop.f32.mrb[0].mxu0
    %v337 = vadd.f32 0.0, %v336
    %v338 = vpop.f32.mrb[0].mxu0
    %339 = vdwg.mxu0
    %v341 = vsel %vm85, %v71, 0
    %v344 = vsel %vm89, %v263, 0
    %346 = vmatprep.subr.mxu0 0.0
    %347 = vmatpush1.msra.mxu0 %v344
    %348 = vmatprep.subr.mxu0 0.0
    %349 = vmatpush1.msra.mxu0 0.0
    %350 = vmatprep.subr.mxu0 0.0
    %351 = vmatpush1.msra.mxu0 0.0
    %352 = vmatprep.subr.mxu0 0.0
    %353 = vmatpush1.msra.mxu0 0.0
    %354 = vmatprep.subr.mxu0 0.0
    %355 = vmatpush1.msra.mxu0 0.0
    %356 = vmatprep.subr.mxu0 0.0
    %357 = vmatpush1.msra.mxu0 0.0
    %358 = vmatprep.subr.mxu0 0.0
    %359 = vmatpush1.msra.mxu0 0.0
    %360 = vmatprep.subr.mxu0 0.0
    %361 = vmatpush1.msra.mxu0 0.0
    %362 = vmatprep.subr.mxu0 0.0
    %363 = vmatpush1.msra.mxu0 0.0
    %364 = vmatprep.subr.mxu0 0.0
    %365 = vmatpush1.msra.mxu0 0.0
    %366 = vmatprep.subr.mxu0 0.0
    %367 = vmatpush1.msra.mxu0 0.0
    %368 = vmatprep.subr.mxu0 0.0
    %369 = vmatpush1.msra.mxu0 0.0
    %370 = vmatprep.subr.mxu0 0.0
    %371 = vmatpush1.msra.mxu0 0.0
    %372 = vmatprep.subr.mxu0 0.0
    %373 = vmatpush1.msra.mxu0 0.0
    %374 = vmatprep.subr.mxu0 0.0
    %375 = vmatpush1.msra.mxu0 0.0
    %376 = vmatprep.subr.mxu0 0.0
    %377 = vmatpush1.msra.mxu0 0.0
    %378 = vmatprep.subr.mxu0 0.0
    %379 = vmatpush1.msra.mxu0 0.0
    %380 = vmatprep.subr.mxu0 0.0
    %381 = vmatpush1.msra.mxu0 0.0
    %382 = vmatprep.subr.mxu0 0.0
    %383 = vmatpush1.msra.mxu0 0.0
    %384 = vmatprep.subr.mxu0 0.0
    %385 = vmatpush1.msra.mxu0 0.0
    %386 = vmatprep.subr.mxu0 0.0
    %387 = vmatpush1.msra.mxu0 0.0
    %388 = vmatprep.subr.mxu0 0.0
    %389 = vmatpush1.msra.mxu0 0.0
    %390 = vmatprep.subr.mxu0 0.0
    %391 = vmatpush1.msra.mxu0 0.0
    %392 = vmatprep.subr.mxu0 0.0
    %393 = vmatpush1.msra.mxu0 0.0
    %394 = vmatprep.subr.mxu0 0.0
    %395 = vmatpush1.msra.mxu0 0.0
    %396 = vmatprep.subr.mxu0 0.0
    %397 = vmatpush1.msra.mxu0 0.0
    %398 = vmatprep.subr.mxu0 0.0
    %399 = vmatpush1.msra.mxu0 0.0
    %400 = vmatprep.subr.mxu0 0.0
    %401 = vmatpush1.msra.mxu0 0.0
    %402 = vmatprep.subr.mxu0 0.0
    %403 = vmatpush1.msra.mxu0 0.0
    %404 = vmatprep.subr.mxu0 0.0
    %405 = vmatpush1.msra.mxu0 0.0
    %406 = vmatprep.subr.mxu0 0.0
    %407 = vmatpush1.msra.mxu0 0.0
    %408 = vmatprep.subr.mxu0 0.0
    %409 = vmatpush1.msra.mxu0 0.0
    %410 = vmatprep.mubr.f32.mxu0 0.0
    %411 = vmatmul.mubr.f32.gmra.mrb[0].mxu0 %v341
    %v412 = vpop.f32.mrb[0].mxu0
    %v413 = vadd.f32 %v337, %v412
    %v414 = vpop.f32.mrb[0].mxu0
    %415 = vdwg.mxu0
    %416 = vrot.lane.b32.xlu0 %v260, 127
    %v417 = vpop.permute.xlu0 %416
    %v418 = vsel %vm56, %v417, 0.0
    %v420 = vsel %vm85, %v73, 0
    %v423 = vsel %vm89, %v418, 0
    %425 = vmatprep.subr.mxu0 0.0
    %426 = vmatpush1.msra.mxu0 %v423
    %427 = vmatprep.subr.mxu0 0.0
    %428 = vmatpush1.msra.mxu0 0.0
    %429 = vmatprep.subr.mxu0 0.0
    %430 = vmatpush1.msra.mxu0 0.0
    %431 = vmatprep.subr.mxu0 0.0
    %432 = vmatpush1.msra.mxu0 0.0
    %433 = vmatprep.subr.mxu0 0.0
    %434 = vmatpush1.msra.mxu0 0.0
    %435 = vmatprep.subr.mxu0 0.0
    %436 = vmatpush1.msra.mxu0 0.0
    %437 = vmatprep.subr.mxu0 0.0
    %438 = vmatpush1.msra.mxu0 0.0
    %439 = vmatprep.subr.mxu0 0.0
    %440 = vmatpush1.msra.mxu0 0.0
    %441 = vmatprep.subr.mxu0 0.0
    %442 = vmatpush1.msra.mxu0 0.0
    %443 = vmatprep.subr.mxu0 0.0
    %444 = vmatpush1.msra.mxu0 0.0
    %445 = vmatprep.subr.mxu0 0.0
    %446 = vmatpush1.msra.mxu0 0.0
    %447 = vmatprep.subr.mxu0 0.0
    %448 = vmatpush1.msra.mxu0 0.0
    %449 = vmatprep.subr.mxu0 0.0
    %450 = vmatpush1.msra.mxu0 0.0
    %451 = vmatprep.subr.mxu0 0.0
    %452 = vmatpush1.msra.mxu0 0.0
    %453 = vmatprep.subr.mxu0 0.0
    %454 = vmatpush1.msra.mxu0 0.0
    %455 = vmatprep.subr.mxu0 0.0
    %456 = vmatpush1.msra.mxu0 0.0
    %457 = vmatprep.subr.mxu0 0.0
    %458 = vmatpush1.msra.mxu0 0.0
    %459 = vmatprep.subr.mxu0 0.0
    %460 = vmatpush1.msra.mxu0 0.0
    %461 = vmatprep.subr.mxu0 0.0
    %462 = vmatpush1.msra.mxu0 0.0
    %463 = vmatprep.subr.mxu0 0.0
    %464 = vmatpush1.msra.mxu0 0.0
    %465 = vmatprep.subr.mxu0 0.0
    %466 = vmatpush1.msra.mxu0 0.0
    %467 = vmatprep.subr.mxu0 0.0
    %468 = vmatpush1.msra.mxu0 0.0
    %469 = vmatprep.subr.mxu0 0.0
    %470 = vmatpush1.msra.mxu0 0.0
    %471 = vmatprep.subr.mxu0 0.0
    %472 = vmatpush1.msra.mxu0 0.0
    %473 = vmatprep.subr.mxu0 0.0
    %474 = vmatpush1.msra.mxu0 0.0
    %475 = vmatprep.subr.mxu0 0.0
    %476 = vmatpush1.msra.mxu0 0.0
    %477 = vmatprep.subr.mxu0 0.0
    %478 = vmatpush1.msra.mxu0 0.0
    %479 = vmatprep.subr.mxu0 0.0
    %480 = vmatpush1.msra.mxu0 0.0
    %481 = vmatprep.subr.mxu0 0.0
    %482 = vmatpush1.msra.mxu0 0.0
    %483 = vmatprep.subr.mxu0 0.0
    %484 = vmatpush1.msra.mxu0 0.0
    %485 = vmatprep.subr.mxu0 0.0
    %486 = vmatpush1.msra.mxu0 0.0
    %487 = vmatprep.subr.mxu0 0.0
    %488 = vmatpush1.msra.mxu0 0.0
    %489 = vmatprep.mubr.f32.mxu0 0.0
    %490 = vmatmul.mubr.f32.gmra.mrb[0].mxu0 %v420
    %v491 = vpop.f32.mrb[0].mxu0
    %v492 = vadd.f32 0.0, %v491
    %v493 = vpop.f32.mrb[0].mxu0
    %494 = vdwg.mxu0
    %v495 = vadd.f32 %v413, %v492
    %497 = vset.pattern.permute.xlu0 0
    %498 = vperm.xlu0 %497, %v83
    %v499 = vpop.permute.xlu0 %498
    %v501 = vmul.f32 %v495, %v499
    %502 = vset.pattern.permute.xlu0 1
    %503 = vperm.xlu0 %502, %v83
    %v504 = vpop.permute.xlu0 %503
    %v506 = vadd.f32 %v501, %v504
    %v507 = vmax.f32 %v506, 0.0
    %508 = vst [vmem:[#allocation2 + $0x8] sm:$0xff] %v507
    %v510 = vsel %vm85, %v69, 0
    %512 = vmatprep.subr.mxu0 0.0
    %513 = vmatpush1.msra.mxu0 %v91
    %514 = vmatprep.subr.mxu0 0.0
    %515 = vmatpush1.msra.mxu0 0.0
    %516 = vmatprep.subr.mxu0 0.0
    %517 = vmatpush1.msra.mxu0 0.0
    %518 = vmatprep.subr.mxu0 0.0
    %519 = vmatpush1.msra.mxu0 0.0
    %520 = vmatprep.subr.mxu0 0.0
    %521 = vmatpush1.msra.mxu0 0.0
    %522 = vmatprep.subr.mxu0 0.0
    %523 = vmatpush1.msra.mxu0 0.0
    %524 = vmatprep.subr.mxu0 0.0
    %525 = vmatpush1.msra.mxu0 0.0
    %526 = vmatprep.subr.mxu0 0.0
    %527 = vmatpush1.msra.mxu0 0.0
    %528 = vmatprep.subr.mxu0 0.0
    %529 = vmatpush1.msra.mxu0 0.0
    %530 = vmatprep.subr.mxu0 0.0
    %531 = vmatpush1.msra.mxu0 0.0
    %532 = vmatprep.subr.mxu0 0.0
    %533 = vmatpush1.msra.mxu0 0.0
    %534 = vmatprep.subr.mxu0 0.0
    %535 = vmatpush1.msra.mxu0 0.0
    %536 = vmatprep.subr.mxu0 0.0
    %537 = vmatpush1.msra.mxu0 0.0
    %538 = vmatprep.subr.mxu0 0.0
    %539 = vmatpush1.msra.mxu0 0.0
    %540 = vmatprep.subr.mxu0 0.0
    %541 = vmatpush1.msra.mxu0 0.0
    %542 = vmatprep.subr.mxu0 0.0
    %543 = vmatpush1.msra.mxu0 0.0
    %544 = vmatprep.subr.mxu0 0.0
    %545 = vmatpush1.msra.mxu0 0.0
    %546 = vmatprep.subr.mxu0 0.0
    %547 = vmatpush1.msra.mxu0 0.0
    %548 = vmatprep.subr.mxu0 0.0
    %549 = vmatpush1.msra.mxu0 0.0
    %550 = vmatprep.subr.mxu0 0.0
    %551 = vmatpush1.msra.mxu0 0.0
    %552 = vmatprep.subr.mxu0 0.0
    %553 = vmatpush1.msra.mxu0 0.0
    %554 = vmatprep.subr.mxu0 0.0
    %555 = vmatpush1.msra.mxu0 0.0
    %556 = vmatprep.subr.mxu0 0.0
    %557 = vmatpush1.msra.mxu0 0.0
    %558 = vmatprep.subr.mxu0 0.0
    %559 = vmatpush1.msra.mxu0 0.0
    %560 = vmatprep.subr.mxu0 0.0
    %561 = vmatpush1.msra.mxu0 0.0
    %562 = vmatprep.subr.mxu0 0.0
    %563 = vmatpush1.msra.mxu0 0.0
    %564 = vmatprep.subr.mxu0 0.0
    %565 = vmatpush1.msra.mxu0 0.0
    %566 = vmatprep.subr.mxu0 0.0
    %567 = vmatpush1.msra.mxu0 0.0
    %568 = vmatprep.subr.mxu0 0.0
    %569 = vmatpush1.msra.mxu0 0.0
    %570 = vmatprep.subr.mxu0 0.0
    %571 = vmatpush1.msra.mxu0 0.0
    %572 = vmatprep.subr.mxu0 0.0
    %573 = vmatpush1.msra.mxu0 0.0
    %574 = vmatprep.subr.mxu0 0.0
    %575 = vmatpush1.msra.mxu0 0.0
    %576 = vmatprep.mubr.f32.mxu0 0.0
    %577 = vmatmul.mubr.f32.gmra.mrb[0].mxu0 %v510
    %v578 = vpop.f32.mrb[0].mxu0
    %v579 = vadd.f32 0.0, %v578
    %v580 = vpop.f32.mrb[0].mxu0
    %581 = vdwg.mxu0
    %583 = vset.pattern.permute.xlu0 0
    %584 = vperm.xlu0 %583, %v81
    %v585 = vpop.permute.xlu0 %584
    %v587 = vmul.f32 %v579, %v585
    %588 = vset.pattern.permute.xlu0 1
    %589 = vperm.xlu0 %588, %v81
    %v590 = vpop.permute.xlu0 %589
    %v592 = vadd.f32 %v587, %v590
    %v593 = vmax.f32 %v592, 0.0
    %594 = vrot.lane.b32.xlu0 %v593, 2
    %v595 = vpop.permute.xlu0 %594
    %vm596 = vcmp.ge.s32.totalorder %v48, 2
    %v597 = vsel %vm596, %v595, 0.0
    %598 = vrot.lane.b32.xlu0 %v593, 1
    %v599 = vpop.permute.xlu0 %598
    %v600 = vsel %vm49, %v599, 0.0
    %v602 = vsel %vm85, %v75, 0
    %v605 = vsel %vm89, %v600, 0
    %607 = vmatprep.subr.mxu0 0.0
    %608 = vmatpush1.msra.mxu0 %v605
    %609 = vmatprep.subr.mxu0 0.0
    %610 = vmatpush1.msra.mxu0 0.0
    %611 = vmatprep.subr.mxu0 0.0
    %612 = vmatpush1.msra.mxu0 0.0
    %613 = vmatprep.subr.mxu0 0.0
    %614 = vmatpush1.msra.mxu0 0.0
    %615 = vmatprep.subr.mxu0 0.0
    %616 = vmatpush1.msra.mxu0 0.0
    %617 = vmatprep.subr.mxu0 0.0
    %618 = vmatpush1.msra.mxu0 0.0
    %619 = vmatprep.subr.mxu0 0.0
    %620 = vmatpush1.msra.mxu0 0.0
    %621 = vmatprep.subr.mxu0 0.0
    %622 = vmatpush1.msra.mxu0 0.0
    %623 = vmatprep.subr.mxu0 0.0
    %624 = vmatpush1.msra.mxu0 0.0
    %625 = vmatprep.subr.mxu0 0.0
    %626 = vmatpush1.msra.mxu0 0.0
    %627 = vmatprep.subr.mxu0 0.0
    %628 = vmatpush1.msra.mxu0 0.0
    %629 = vmatprep.subr.mxu0 0.0
    %630 = vmatpush1.msra.mxu0 0.0
    %631 = vmatprep.subr.mxu0 0.0
    %632 = vmatpush1.msra.mxu0 0.0
    %633 = vmatprep.subr.mxu0 0.0
    %634 = vmatpush1.msra.mxu0 0.0
    %635 = vmatprep.subr.mxu0 0.0
    %636 = vmatpush1.msra.mxu0 0.0
    %637 = vmatprep.subr.mxu0 0.0
    %638 = vmatpush1.msra.mxu0 0.0
    %639 = vmatprep.subr.mxu0 0.0
    %640 = vmatpush1.msra.mxu0 0.0
    %641 = vmatprep.subr.mxu0 0.0
    %642 = vmatpush1.msra.mxu0 0.0
    %643 = vmatprep.subr.mxu0 0.0
    %644 = vmatpush1.msra.mxu0 0.0
    %645 = vmatprep.subr.mxu0 0.0
    %646 = vmatpush1.msra.mxu0 0.0
    %647 = vmatprep.subr.mxu0 0.0
    %648 = vmatpush1.msra.mxu0 0.0
    %649 = vmatprep.subr.mxu0 0.0
    %650 = vmatpush1.msra.mxu0 0.0
    %651 = vmatprep.subr.mxu0 0.0
    %652 = vmatpush1.msra.mxu0 0.0
    %653 = vmatprep.subr.mxu0 0.0
    %654 = vmatpush1.msra.mxu0 0.0
    %655 = vmatprep.subr.mxu0 0.0
    %656 = vmatpush1.msra.mxu0 0.0
    %657 = vmatprep.subr.mxu0 0.0
    %658 = vmatpush1.msra.mxu0 0.0
    %659 = vmatprep.subr.mxu0 0.0
    %660 = vmatpush1.msra.mxu0 0.0
    %661 = vmatprep.subr.mxu0 0.0
    %662 = vmatpush1.msra.mxu0 0.0
    %663 = vmatprep.subr.mxu0 0.0
    %664 = vmatpush1.msra.mxu0 0.0
    %665 = vmatprep.subr.mxu0 0.0
    %666 = vmatpush1.msra.mxu0 0.0
    %667 = vmatprep.subr.mxu0 0.0
    %668 = vmatpush1.msra.mxu0 0.0
    %669 = vmatprep.subr.mxu0 0.0
    %670 = vmatpush1.msra.mxu0 0.0
    %671 = vmatprep.mubr.f32.mxu0 0.0
    %672 = vmatmul.mubr.f32.gmra.mrb[0].mxu0 %v602
    %v673 = vpop.f32.mrb[0].mxu0
    %v674 = vadd.f32 0.0, %v673
    %v675 = vpop.f32.mrb[0].mxu0
    %676 = vdwg.mxu0
    %v678 = vsel %vm85, %v74, 0
    %v681 = vsel %vm89, %v597, 0
    %683 = vmatprep.subr.mxu0 0.0
    %684 = vmatpush1.msra.mxu0 %v681
    %685 = vmatprep.subr.mxu0 0.0
    %686 = vmatpush1.msra.mxu0 0.0
    %687 = vmatprep.subr.mxu0 0.0
    %688 = vmatpush1.msra.mxu0 0.0
    %689 = vmatprep.subr.mxu0 0.0
    %690 = vmatpush1.msra.mxu0 0.0
    %691 = vmatprep.subr.mxu0 0.0
    %692 = vmatpush1.msra.mxu0 0.0
    %693 = vmatprep.subr.mxu0 0.0
    %694 = vmatpush1.msra.mxu0 0.0
    %695 = vmatprep.subr.mxu0 0.0
    %696 = vmatpush1.msra.mxu0 0.0
    %697 = vmatprep.subr.mxu0 0.0
    %698 = vmatpush1.msra.mxu0 0.0
    %699 = vmatprep.subr.mxu0 0.0
    %700 = vmatpush1.msra.mxu0 0.0
    %701 = vmatprep.subr.mxu0 0.0
    %702 = vmatpush1.msra.mxu0 0.0
    %703 = vmatprep.subr.mxu0 0.0
    %704 = vmatpush1.msra.mxu0 0.0
    %705 = vmatprep.subr.mxu0 0.0
    %706 = vmatpush1.msra.mxu0 0.0
    %707 = vmatprep.subr.mxu0 0.0
    %708 = vmatpush1.msra.mxu0 0.0
    %709 = vmatprep.subr.mxu0 0.0
    %710 = vmatpush1.msra.mxu0 0.0
    %711 = vmatprep.subr.mxu0 0.0
    %712 = vmatpush1.msra.mxu0 0.0
    %713 = vmatprep.subr.mxu0 0.0
    %714 = vmatpush1.msra.mxu0 0.0
    %715 = vmatprep.subr.mxu0 0.0
    %716 = vmatpush1.msra.mxu0 0.0
    %717 = vmatprep.subr.mxu0 0.0
    %718 = vmatpush1.msra.mxu0 0.0
    %719 = vmatprep.subr.mxu0 0.0
    %720 = vmatpush1.msra.mxu0 0.0
    %721 = vmatprep.subr.mxu0 0.0
    %722 = vmatpush1.msra.mxu0 0.0
    %723 = vmatprep.subr.mxu0 0.0
    %724 = vmatpush1.msra.mxu0 0.0
    %725 = vmatprep.subr.mxu0 0.0
    %726 = vmatpush1.msra.mxu0 0.0
    %727 = vmatprep.subr.mxu0 0.0
    %728 = vmatpush1.msra.mxu0 0.0
    %729 = vmatprep.subr.mxu0 0.0
    %730 = vmatpush1.msra.mxu0 0.0
    %731 = vmatprep.subr.mxu0 0.0
    %732 = vmatpush1.msra.mxu0 0.0
    %733 = vmatprep.subr.mxu0 0.0
    %734 = vmatpush1.msra.mxu0 0.0
    %735 = vmatprep.subr.mxu0 0.0
    %736 = vmatpush1.msra.mxu0 0.0
    %737 = vmatprep.subr.mxu0 0.0
    %738 = vmatpush1.msra.mxu0 0.0
    %739 = vmatprep.subr.mxu0 0.0
    %740 = vmatpush1.msra.mxu0 0.0
    %741 = vmatprep.subr.mxu0 0.0
    %742 = vmatpush1.msra.mxu0 0.0
    %743 = vmatprep.subr.mxu0 0.0
    %744 = vmatpush1.msra.mxu0 0.0
    %745 = vmatprep.subr.mxu0 0.0
    %746 = vmatpush1.msra.mxu0 0.0
    %747 = vmatprep.mubr.f32.mxu0 0.0
    %748 = vmatmul.mubr.f32.gmra.mrb[0].mxu0 %v678
    %v749 = vpop.f32.mrb[0].mxu0
    %v750 = vadd.f32 %v674, %v749
    %v751 = vpop.f32.mrb[0].mxu0
    %752 = vdwg.mxu0
    %v754 = vsel %vm85, %v76, 0
    %v757 = vsel %vm89, %v593, 0
    %759 = vmatprep.subr.mxu0 0.0
    %760 = vmatpush1.msra.mxu0 %v757
    %761 = vmatprep.subr.mxu0 0.0
    %762 = vmatpush1.msra.mxu0 0.0
    %763 = vmatprep.subr.mxu0 0.0
    %764 = vmatpush1.msra.mxu0 0.0
    %765 = vmatprep.subr.mxu0 0.0
    %766 = vmatpush1.msra.mxu0 0.0
    %767 = vmatprep.subr.mxu0 0.0
    %768 = vmatpush1.msra.mxu0 0.0
    %769 = vmatprep.subr.mxu0 0.0
    %770 = vmatpush1.msra.mxu0 0.0
    %771 = vmatprep.subr.mxu0 0.0
    %772 = vmatpush1.msra.mxu0 0.0
    %773 = vmatprep.subr.mxu0 0.0
    %774 = vmatpush1.msra.mxu0 0.0
    %775 = vmatprep.subr.mxu0 0.0
    %776 = vmatpush1.msra.mxu0 0.0
    %777 = vmatprep.subr.mxu0 0.0
    %778 = vmatpush1.msra.mxu0 0.0
    %779 = vmatprep.subr.mxu0 0.0
    %780 = vmatpush1.msra.mxu0 0.0
    %781 = vmatprep.subr.mxu0 0.0
    %782 = vmatpush1.msra.mxu0 0.0
    %783 = vmatprep.subr.mxu0 0.0
    %784 = vmatpush1.msra.mxu0 0.0
    %785 = vmatprep.subr.mxu0 0.0
    %786 = vmatpush1.msra.mxu0 0.0
    %787 = vmatprep.subr.mxu0 0.0
    %788 = vmatpush1.msra.mxu0 0.0
    %789 = vmatprep.subr.mxu0 0.0
    %790 = vmatpush1.msra.mxu0 0.0
    %791 = vmatprep.subr.mxu0 0.0
    %792 = vmatpush1.msra.mxu0 0.0
    %793 = vmatprep.subr.mxu0 0.0
    %794 = vmatpush1.msra.mxu0 0.0
    %795 = vmatprep.subr.mxu0 0.0
    %796 = vmatpush1.msra.mxu0 0.0
    %797 = vmatprep.subr.mxu0 0.0
    %798 = vmatpush1.msra.mxu0 0.0
    %799 = vmatprep.subr.mxu0 0.0
    %800 = vmatpush1.msra.mxu0 0.0
    %801 = vmatprep.subr.mxu0 0.0
    %802 = vmatpush1.msra.mxu0 0.0
    %803 = vmatprep.subr.mxu0 0.0
    %804 = vmatpush1.msra.mxu0 0.0
    %805 = vmatprep.subr.mxu0 0.0
    %806 = vmatpush1.msra.mxu0 0.0
    %807 = vmatprep.subr.mxu0 0.0
    %808 = vmatpush1.msra.mxu0 0.0
    %809 = vmatprep.subr.mxu0 0.0
    %810 = vmatpush1.msra.mxu0 0.0
    %811 = vmatprep.subr.mxu0 0.0
    %812 = vmatpush1.msra.mxu0 0.0
    %813 = vmatprep.subr.mxu0 0.0
    %814 = vmatpush1.msra.mxu0 0.0
    %815 = vmatprep.subr.mxu0 0.0
    %816 = vmatpush1.msra.mxu0 0.0
    %817 = vmatprep.subr.mxu0 0.0
    %818 = vmatpush1.msra.mxu0 0.0
    %819 = vmatprep.subr.mxu0 0.0
    %820 = vmatpush1.msra.mxu0 0.0
    %821 = vmatprep.subr.mxu0 0.0
    %822 = vmatpush1.msra.mxu0 0.0
    %823 = vmatprep.mubr.f32.mxu0 0.0
    %824 = vmatmul.mubr.f32.gmra.mrb[0].mxu0 %v754
    %v825 = vpop.f32.mrb[0].mxu0
    %v826 = vadd.f32 0.0, %v825
    %v827 = vpop.f32.mrb[0].mxu0
    %828 = vdwg.mxu0
    %v829 = vadd.f32 %v750, %v826
    %830 = vrot.lane.b32.xlu0 %v593, 127
    %v831 = vpop.permute.xlu0 %830
    %v832 = vsel %vm56, %v831, 0.0
    %v834 = vsel %vm85, %v77, 0
    %v837 = vsel %vm89, %v832, 0
    %839 = vmatprep.subr.mxu0 0.0
    %840 = vmatpush1.msra.mxu0 %v837
    %841 = vmatprep.subr.mxu0 0.0
    %842 = vmatpush1.msra.mxu0 0.0
    %843 = vmatprep.subr.mxu0 0.0
    %844 = vmatpush1.msra.mxu0 0.0
    %845 = vmatprep.subr.mxu0 0.0
    %846 = vmatpush1.msra.mxu0 0.0
    %847 = vmatprep.subr.mxu0 0.0
    %848 = vmatpush1.msra.mxu0 0.0
    %849 = vmatprep.subr.mxu0 0.0
    %850 = vmatpush1.msra.mxu0 0.0
    %851 = vmatprep.subr.mxu0 0.0
    %852 = vmatpush1.msra.mxu0 0.0
    %853 = vmatprep.subr.mxu0 0.0
    %854 = vmatpush1.msra.mxu0 0.0
    %855 = vmatprep.subr.mxu0 0.0
    %856 = vmatpush1.msra.mxu0 0.0
    %857 = vmatprep.subr.mxu0 0.0
    %858 = vmatpush1.msra.mxu0 0.0
    %859 = vmatprep.subr.mxu0 0.0
    %860 = vmatpush1.msra.mxu0 0.0
    %861 = vmatprep.subr.mxu0 0.0
    %862 = vmatpush1.msra.mxu0 0.0
    %863 = vmatprep.subr.mxu0 0.0
    %864 = vmatpush1.msra.mxu0 0.0
    %865 = vmatprep.subr.mxu0 0.0
    %866 = vmatpush1.msra.mxu0 0.0
    %867 = vmatprep.subr.mxu0 0.0
    %868 = vmatpush1.msra.mxu0 0.0
    %869 = vmatprep.subr.mxu0 0.0
    %870 = vmatpush1.msra.mxu0 0.0
    %871 = vmatprep.subr.mxu0 0.0
    %872 = vmatpush1.msra.mxu0 0.0
    %873 = vmatprep.subr.mxu0 0.0
    %874 = vmatpush1.msra.mxu0 0.0
    %875 = vmatprep.subr.mxu0 0.0
    %876 = vmatpush1.msra.mxu0 0.0
    %877 = vmatprep.subr.mxu0 0.0
    %878 = vmatpush1.msra.mxu0 0.0
    %879 = vmatprep.subr.mxu0 0.0
    %880 = vmatpush1.msra.mxu0 0.0
    %881 = vmatprep.subr.mxu0 0.0
    %882 = vmatpush1.msra.mxu0 0.0
    %883 = vmatprep.subr.mxu0 0.0
    %884 = vmatpush1.msra.mxu0 0.0
    %885 = vmatprep.subr.mxu0 0.0
    %886 = vmatpush1.msra.mxu0 0.0
    %887 = vmatprep.subr.mxu0 0.0
    %888 = vmatpush1.msra.mxu0 0.0
    %889 = vmatprep.subr.mxu0 0.0
    %890 = vmatpush1.msra.mxu0 0.0
    %891 = vmatprep.subr.mxu0 0.0
    %892 = vmatpush1.msra.mxu0 0.0
    %893 = vmatprep.subr.mxu0 0.0
    %894 = vmatpush1.msra.mxu0 0.0
    %895 = vmatprep.subr.mxu0 0.0
    %896 = vmatpush1.msra.mxu0 0.0
    %897 = vmatprep.subr.mxu0 0.0
    %898 = vmatpush1.msra.mxu0 0.0
    %899 = vmatprep.subr.mxu0 0.0
    %900 = vmatpush1.msra.mxu0 0.0
    %901 = vmatprep.subr.mxu0 0.0
    %902 = vmatpush1.msra.mxu0 0.0
    %903 = vmatprep.mubr.f32.mxu0 0.0
    %904 = vmatmul.mubr.f32.gmra.mrb[0].mxu0 %v834
    %v905 = vpop.f32.mrb[0].mxu0
    %v906 = vadd.f32 0.0, %v905
    %v907 = vpop.f32.mrb[0].mxu0
    %908 = vdwg.mxu0
    %v909 = vadd.f32 %v829, %v906
    %910 = vrot.lane.b32.xlu0 %v593, 126
    %v911 = vpop.permute.xlu0 %910
    %vm912 = vcmp.lt.s32.totalorder %v48, 126
    %v913 = vsel %vm912, %v911, 0.0
    %v915 = vsel %vm85, %v78, 0
    %v918 = vsel %vm89, %v913, 0
    %920 = vmatprep.subr.mxu0 0.0
    %921 = vmatpush1.msra.mxu0 %v918
    %922 = vmatprep.subr.mxu0 0.0
    %923 = vmatpush1.msra.mxu0 0.0
    %924 = vmatprep.subr.mxu0 0.0
    %925 = vmatpush1.msra.mxu0 0.0
    %926 = vmatprep.subr.mxu0 0.0
    %927 = vmatpush1.msra.mxu0 0.0
    %928 = vmatprep.subr.mxu0 0.0
    %929 = vmatpush1.msra.mxu0 0.0
    %930 = vmatprep.subr.mxu0 0.0
    %931 = vmatpush1.msra.mxu0 0.0
    %932 = vmatprep.subr.mxu0 0.0
    %933 = vmatpush1.msra.mxu0 0.0
    %934 = vmatprep.subr.mxu0 0.0
    %935 = vmatpush1.msra.mxu0 0.0
    %936 = vmatprep.subr.mxu0 0.0
    %937 = vmatpush1.msra.mxu0 0.0
    %938 = vmatprep.subr.mxu0 0.0
    %939 = vmatpush1.msra.mxu0 0.0
    %940 = vmatprep.subr.mxu0 0.0
    %941 = vmatpush1.msra.mxu0 0.0
    %942 = vmatprep.subr.mxu0 0.0
    %943 = vmatpush1.msra.mxu0 0.0
    %944 = vmatprep.subr.mxu0 0.0
    %945 = vmatpush1.msra.mxu0 0.0
    %946 = vmatprep.subr.mxu0 0.0
    %947 = vmatpush1.msra.mxu0 0.0
    %948 = vmatprep.subr.mxu0 0.0
    %949 = vmatpush1.msra.mxu0 0.0
    %950 = vmatprep.subr.mxu0 0.0
    %951 = vmatpush1.msra.mxu0 0.0
    %952 = vmatprep.subr.mxu0 0.0
    %953 = vmatpush1.msra.mxu0 0.0
    %954 = vmatprep.subr.mxu0 0.0
    %955 = vmatpush1.msra.mxu0 0.0
    %956 = vmatprep.subr.mxu0 0.0
    %957 = vmatpush1.msra.mxu0 0.0
    %958 = vmatprep.subr.mxu0 0.0
    %959 = vmatpush1.msra.mxu0 0.0
    %960 = vmatprep.subr.mxu0 0.0
    %961 = vmatpush1.msra.mxu0 0.0
    %962 = vmatprep.subr.mxu0 0.0
    %963 = vmatpush1.msra.mxu0 0.0
    %964 = vmatprep.subr.mxu0 0.0
    %965 = vmatpush1.msra.mxu0 0.0
    %966 = vmatprep.subr.mxu0 0.0
    %967 = vmatpush1.msra.mxu0 0.0
    %968 = vmatprep.subr.mxu0 0.0
    %969 = vmatpush1.msra.mxu0 0.0
    %970 = vmatprep.subr.mxu0 0.0
    %971 = vmatpush1.msra.mxu0 0.0
    %972 = vmatprep.subr.mxu0 0.0
    %973 = vmatpush1.msra.mxu0 0.0
    %974 = vmatprep.subr.mxu0 0.0
    %975 = vmatpush1.msra.mxu0 0.0
    %976 = vmatprep.subr.mxu0 0.0
    %977 = vmatpush1.msra.mxu0 0.0
    %978 = vmatprep.subr.mxu0 0.0
    %979 = vmatpush1.msra.mxu0 0.0
    %980 = vmatprep.subr.mxu0 0.0
    %981 = vmatpush1.msra.mxu0 0.0
    %982 = vmatprep.subr.mxu0 0.0
    %983 = vmatpush1.msra.mxu0 0.0
    %984 = vmatprep.mubr.f32.mxu0 0.0
    %985 = vmatmul.mubr.f32.gmra.mrb[0].mxu0 %v915
    %v986 = vpop.f32.mrb[0].mxu0
    %v987 = vadd.f32 0.0, %v986
    %v988 = vpop.f32.mrb[0].mxu0
    %989 = vdwg.mxu0
    %v990 = vadd.f32 %v909, %v987
    %992 = vset.pattern.permute.xlu0 0
    %993 = vperm.xlu0 %992, %v84
    %v994 = vpop.permute.xlu0 %993
    %v996 = vmul.f32 %v990, %v994
    %997 = vset.pattern.permute.xlu0 1
    %998 = vperm.xlu0 %997, %v84
    %v999 = vpop.permute.xlu0 %998
    %v1001 = vadd.f32 %v996, %v999
    %v1002 = vmax.f32 %v1001, 0.0
    %1003 = vst [vmem:[#allocation2 + $0x10] sm:$0xff] %v1002
    %v1005 = vsel %vm85, %v70, 0
    %v1008 = vsel %vm89, %v65, 0
    %1010 = vmatprep.subr.mxu0 0.0
    %1011 = vmatpush1.msra.mxu0 %v1008
    %1012 = vmatprep.subr.mxu0 0.0
    %1013 = vmatpush1.msra.mxu0 0.0
    %1014 = vmatprep.subr.mxu0 0.0
    %1015 = vmatpush1.msra.mxu0 0.0
    %1016 = vmatprep.subr.mxu0 0.0
    %1017 = vmatpush1.msra.mxu0 0.0
    %1018 = vmatprep.subr.mxu0 0.0
    %1019 = vmatpush1.msra.mxu0 0.0
    %1020 = vmatprep.subr.mxu0 0.0
    %1021 = vmatpush1.msra.mxu0 0.0
    %1022 = vmatprep.subr.mxu0 0.0
    %1023 = vmatpush1.msra.mxu0 0.0
    %1024 = vmatprep.subr.mxu0 0.0
    %1025 = vmatpush1.msra.mxu0 0.0
    %1026 = vmatprep.subr.mxu0 0.0
    %1027 = vmatpush1.msra.mxu0 0.0
    %1028 = vmatprep.subr.mxu0 0.0
    %1029 = vmatpush1.msra.mxu0 0.0
    %1030 = vmatprep.subr.mxu0 0.0
    %1031 = vmatpush1.msra.mxu0 0.0
    %1032 = vmatprep.subr.mxu0 0.0
    %1033 = vmatpush1.msra.mxu0 0.0
    %1034 = vmatprep.subr.mxu0 0.0
    %1035 = vmatpush1.msra.mxu0 0.0
    %1036 = vmatprep.subr.mxu0 0.0
    %1037 = vmatpush1.msra.mxu0 0.0
    %1038 = vmatprep.subr.mxu0 0.0
    %1039 = vmatpush1.msra.mxu0 0.0
    %1040 = vmatprep.subr.mxu0 0.0
    %1041 = vmatpush1.msra.mxu0 0.0
    %1042 = vmatprep.subr.mxu0 0.0
    %1043 = vmatpush1.msra.mxu0 0.0
    %1044 = vmatprep.subr.mxu0 0.0
    %1045 = vmatpush1.msra.mxu0 0.0
    %1046 = vmatprep.subr.mxu0 0.0
    %1047 = vmatpush1.msra.mxu0 0.0
    %1048 = vmatprep.subr.mxu0 0.0
    %1049 = vmatpush1.msra.mxu0 0.0
    %1050 = vmatprep.subr.mxu0 0.0
    %1051 = vmatpush1.msra.mxu0 0.0
    %1052 = vmatprep.subr.mxu0 0.0
    %1053 = vmatpush1.msra.mxu0 0.0
    %1054 = vmatprep.subr.mxu0 0.0
    %1055 = vmatpush1.msra.mxu0 0.0
    %1056 = vmatprep.subr.mxu0 0.0
    %1057 = vmatpush1.msra.mxu0 0.0
    %1058 = vmatprep.subr.mxu0 0.0
    %1059 = vmatpush1.msra.mxu0 0.0
    %1060 = vmatprep.subr.mxu0 0.0
    %1061 = vmatpush1.msra.mxu0 0.0
    %1062 = vmatprep.subr.mxu0 0.0
    %1063 = vmatpush1.msra.mxu0 0.0
    %1064 = vmatprep.subr.mxu0 0.0
    %1065 = vmatpush1.msra.mxu0 0.0
    %1066 = vmatprep.subr.mxu0 0.0
    %1067 = vmatpush1.msra.mxu0 0.0
    %1068 = vmatprep.subr.mxu0 0.0
    %1069 = vmatpush1.msra.mxu0 0.0
    %1070 = vmatprep.subr.mxu0 0.0
    %1071 = vmatpush1.msra.mxu0 0.0
    %1072 = vmatprep.subr.mxu0 0.0
    %1073 = vmatpush1.msra.mxu0 0.0
    %1074 = vmatprep.mubr.f32.mxu0 0.0
    %1075 = vmatmul.mubr.f32.gmra.mrb[0].mxu0 %v1005
    %v1076 = vpop.f32.mrb[0].mxu0
    %v1077 = vadd.f32 0.0, %v1076
    %v1078 = vpop.f32.mrb[0].mxu0
    %1079 = vdwg.mxu0
    %1081 = vset.pattern.permute.xlu0 0
    %1082 = vperm.xlu0 %1081, %v82
    %v1083 = vpop.permute.xlu0 %1082
    %v1085 = vmul.f32 %v1077, %v1083
    %1086 = vset.pattern.permute.xlu0 1
    %1087 = vperm.xlu0 %1086, %v82
    %v1088 = vpop.permute.xlu0 %1087
    %v1090 = vadd.f32 %v1085, %v1088
    %v1091 = vmax.f32 %v1090, 0.0
    %1092 = vst [vmem:[#allocation2 + $0x18] sm:$0xff] %v1091
    %v1094 = vsel %vm89, %v46, 0
    %1096 = vmatprep.subr.mxu0 0.0
    %1097 = vmatpush1.msra.mxu0 %v1094
    %1098 = vmatprep.subr.mxu0 0.0
    %1099 = vmatpush1.msra.mxu0 0.0
    %1100 = vmatprep.subr.mxu0 0.0
    %1101 = vmatpush1.msra.mxu0 0.0
    %1102 = vmatprep.subr.mxu0 0.0
    %1103 = vmatpush1.msra.mxu0 0.0
    %1104 = vmatprep.subr.mxu0 0.0
    %1105 = vmatpush1.msra.mxu0 0.0
    %1106 = vmatprep.subr.mxu0 0.0
    %1107 = vmatpush1.msra.mxu0 0.0
    %1108 = vmatprep.subr.mxu0 0.0
    %1109 = vmatpush1.msra.mxu0 0.0
    %1110 = vmatprep.subr.mxu0 0.0
    %1111 = vmatpush1.msra.mxu0 0.0
    %1112 = vmatprep.subr.mxu0 0.0
    %1113 = vmatpush1.msra.mxu0 0.0
    %1114 = vmatprep.subr.mxu0 0.0
    %1115 = vmatpush1.msra.mxu0 0.0
    %1116 = vmatprep.subr.mxu0 0.0
    %1117 = vmatpush1.msra.mxu0 0.0
    %1118 = vmatprep.subr.mxu0 0.0
    %1119 = vmatpush1.msra.mxu0 0.0
    %1120 = vmatprep.subr.mxu0 0.0
    %1121 = vmatpush1.msra.mxu0 0.0
    %1122 = vmatprep.subr.mxu0 0.0
    %1123 = vmatpush1.msra.mxu0 0.0
    %1124 = vmatprep.subr.mxu0 0.0
    %1125 = vmatpush1.msra.mxu0 0.0
    %1126 = vmatprep.subr.mxu0 0.0
    %1127 = vmatpush1.msra.mxu0 0.0
    %1128 = vmatprep.subr.mxu0 0.0
    %1129 = vmatpush1.msra.mxu0 0.0
    %1130 = vmatprep.subr.mxu0 0.0
    %1131 = vmatpush1.msra.mxu0 0.0
    %1132 = vmatprep.subr.mxu0 0.0
    %1133 = vmatpush1.msra.mxu0 0.0
    %1134 = vmatprep.subr.mxu0 0.0
    %1135 = vmatpush1.msra.mxu0 0.0
    %1136 = vmatprep.subr.mxu0 0.0
    %1137 = vmatpush1.msra.mxu0 0.0
    %1138 = vmatprep.subr.mxu0 0.0
    %1139 = vmatpush1.msra.mxu0 0.0
    %1140 = vmatprep.subr.mxu0 0.0
    %1141 = vmatpush1.msra.mxu0 0.0
    %1142 = vmatprep.subr.mxu0 0.0
    %1143 = vmatpush1.msra.mxu0 0.0
    %1144 = vmatprep.subr.mxu0 0.0
    %1145 = vmatpush1.msra.mxu0 0.0
    %1146 = vmatprep.subr.mxu0 0.0
    %1147 = vmatpush1.msra.mxu0 0.0
    %1148 = vmatprep.subr.mxu0 0.0
    %1149 = vmatpush1.msra.mxu0 0.0
    %1150 = vmatprep.subr.mxu0 0.0
    %1151 = vmatpush1.msra.mxu0 0.0
    %1152 = vmatprep.subr.mxu0 0.0
    %1153 = vmatpush1.msra.mxu0 0.0
    %1154 = vmatprep.subr.mxu0 0.0
    %1155 = vmatpush1.msra.mxu0 0.0
    %1156 = vmatprep.subr.mxu0 0.0
    %1157 = vmatpush1.msra.mxu0 0.0
    %1158 = vmatprep.subr.mxu0 0.0
    %1159 = vmatpush1.msra.mxu0 0.0
    %1160 = vmatprep.mubr.f32.mxu0 0.0
    %1161 = vmatmul.mubr.f32.gmra.mrb[0].mxu0 %v87
    %v1162 = vpop.f32.mrb[0].mxu0
    %v1163 = vadd.f32 0.0, %v1162
    %v1164 = vpop.f32.mrb[0].mxu0
    %1165 = vdwg.mxu0
    %v1166 = vmul.f32 %v1163, %v166
    %v1167 = vadd.f32 %v1166, %v171
    %v1168 = vmax.f32 %v1167, 0.0
    %s1169 = scalar_lea.vmem [#allocation2], 32
    %1170 = vst [vmem:[%s1169] sm:$0xff] %v1168
    %1171 = vmatprep.subr.mxu0 0.0
    %1172 = vmatpush1.msra.mxu0 %v1094
    %1173 = vmatprep.subr.mxu0 0.0
    %1174 = vmatpush1.msra.mxu0 0.0
    %1175 = vmatprep.subr.mxu0 0.0
    %1176 = vmatpush1.msra.mxu0 0.0
    %1177 = vmatprep.subr.mxu0 0.0
    %1178 = vmatpush1.msra.mxu0 0.0
    %1179 = vmatprep.subr.mxu0 0.0
    %1180 = vmatpush1.msra.mxu0 0.0
    %1181 = vmatprep.subr.mxu0 0.0
    %1182 = vmatpush1.msra.mxu0 0.0
    %1183 = vmatprep.subr.mxu0 0.0
    %1184 = vmatpush1.msra.mxu0 0.0
    %1185 = vmatprep.subr.mxu0 0.0
    %1186 = vmatpush1.msra.mxu0 0.0
    %1187 = vmatprep.subr.mxu0 0.0
    %1188 = vmatpush1.msra.mxu0 0.0
    %1189 = vmatprep.subr.mxu0 0.0
    %1190 = vmatpush1.msra.mxu0 0.0
    %1191 = vmatprep.subr.mxu0 0.0
    %1192 = vmatpush1.msra.mxu0 0.0
    %1193 = vmatprep.subr.mxu0 0.0
    %1194 = vmatpush1.msra.mxu0 0.0
    %1195 = vmatprep.subr.mxu0 0.0
    %1196 = vmatpush1.msra.mxu0 0.0
    %1197 = vmatprep.subr.mxu0 0.0
    %1198 = vmatpush1.msra.mxu0 0.0
    %1199 = vmatprep.subr.mxu0 0.0
    %1200 = vmatpush1.msra.mxu0 0.0
    %1201 = vmatprep.subr.mxu0 0.0
    %1202 = vmatpush1.msra.mxu0 0.0
    %1203 = vmatprep.subr.mxu0 0.0
    %1204 = vmatpush1.msra.mxu0 0.0
    %1205 = vmatprep.subr.mxu0 0.0
    %1206 = vmatpush1.msra.mxu0 0.0
    %1207 = vmatprep.subr.mxu0 0.0
    %1208 = vmatpush1.msra.mxu0 0.0
    %1209 = vmatprep.subr.mxu0 0.0
    %1210 = vmatpush1.msra.mxu0 0.0
    %1211 = vmatprep.subr.mxu0 0.0
    %1212 = vmatpush1.msra.mxu0 0.0
    %1213 = vmatprep.subr.mxu0 0.0
    %1214 = vmatpush1.msra.mxu0 0.0
    %1215 = vmatprep.subr.mxu0 0.0
    %1216 = vmatpush1.msra.mxu0 0.0
    %1217 = vmatprep.subr.mxu0 0.0
    %1218 = vmatpush1.msra.mxu0 0.0
    %1219 = vmatprep.subr.mxu0 0.0
    %1220 = vmatpush1.msra.mxu0 0.0
    %1221 = vmatprep.subr.mxu0 0.0
    %1222 = vmatpush1.msra.mxu0 0.0
    %1223 = vmatprep.subr.mxu0 0.0
    %1224 = vmatpush1.msra.mxu0 0.0
    %1225 = vmatprep.subr.mxu0 0.0
    %1226 = vmatpush1.msra.mxu0 0.0
    %1227 = vmatprep.subr.mxu0 0.0
    %1228 = vmatpush1.msra.mxu0 0.0
    %1229 = vmatprep.subr.mxu0 0.0
    %1230 = vmatpush1.msra.mxu0 0.0
    %1231 = vmatprep.subr.mxu0 0.0
    %1232 = vmatpush1.msra.mxu0 0.0
    %1233 = vmatprep.subr.mxu0 0.0
    %1234 = vmatpush1.msra.mxu0 0.0
    %1235 = vmatprep.mubr.f32.mxu0 0.0
    %1236 = vmatmul.mubr.f32.gmra.mrb[0].mxu0 %v177
    %v1237 = vpop.f32.mrb[0].mxu0
    %v1238 = vadd.f32 0.0, %v1237
    %v1239 = vpop.f32.mrb[0].mxu0
    %1240 = vdwg.mxu0
    %v1241 = vmul.f32 %v1238, %v252
    %v1242 = vadd.f32 %v1241, %v257
    %v1243 = vmax.f32 %v1242, 0.0
    %1244 = vrot.lane.b32.xlu0 %v1243, 1
    %v1245 = vpop.permute.xlu0 %1244
    %v1246 = vsel %vm49, %v1245, 0.0
    %v1248 = vsel %vm89, %v1243, 0
    %1250 = vmatprep.subr.mxu0 0.0
    %1251 = vmatpush1.msra.mxu0 %v1248
    %1252 = vmatprep.subr.mxu0 0.0
    %1253 = vmatpush1.msra.mxu0 0.0
    %1254 = vmatprep.subr.mxu0 0.0
    %1255 = vmatpush1.msra.mxu0 0.0
    %1256 = vmatprep.subr.mxu0 0.0
    %1257 = vmatpush1.msra.mxu0 0.0
    %1258 = vmatprep.subr.mxu0 0.0
    %1259 = vmatpush1.msra.mxu0 0.0
    %1260 = vmatprep.subr.mxu0 0.0
    %1261 = vmatpush1.msra.mxu0 0.0
    %1262 = vmatprep.subr.mxu0 0.0
    %1263 = vmatpush1.msra.mxu0 0.0
    %1264 = vmatprep.subr.mxu0 0.0
    %1265 = vmatpush1.msra.mxu0 0.0
    %1266 = vmatprep.subr.mxu0 0.0
    %1267 = vmatpush1.msra.mxu0 0.0
    %1268 = vmatprep.subr.mxu0 0.0
    %1269 = vmatpush1.msra.mxu0 0.0
    %1270 = vmatprep.subr.mxu0 0.0
    %1271 = vmatpush1.msra.mxu0 0.0
    %1272 = vmatprep.subr.mxu0 0.0
    %1273 = vmatpush1.msra.mxu0 0.0
    %1274 = vmatprep.subr.mxu0 0.0
    %1275 = vmatpush1.msra.mxu0 0.0
    %1276 = vmatprep.subr.mxu0 0.0
    %1277 = vmatpush1.msra.mxu0 0.0
    %1278 = vmatprep.subr.mxu0 0.0
    %1279 = vmatpush1.msra.mxu0 0.0
    %1280 = vmatprep.subr.mxu0 0.0
    %1281 = vmatpush1.msra.mxu0 0.0
    %1282 = vmatprep.subr.mxu0 0.0
    %1283 = vmatpush1.msra.mxu0 0.0
    %1284 = vmatprep.subr.mxu0 0.0
    %1285 = vmatpush1.msra.mxu0 0.0
    %1286 = vmatprep.subr.mxu0 0.0
    %1287 = vmatpush1.msra.mxu0 0.0
    %1288 = vmatprep.subr.mxu0 0.0
    %1289 = vmatpush1.msra.mxu0 0.0
    %1290 = vmatprep.subr.mxu0 0.0
    %1291 = vmatpush1.msra.mxu0 0.0
    %1292 = vmatprep.subr.mxu0 0.0
    %1293 = vmatpush1.msra.mxu0 0.0
    %1294 = vmatprep.subr.mxu0 0.0
    %1295 = vmatpush1.msra.mxu0 0.0
    %1296 = vmatprep.subr.mxu0 0.0
    %1297 = vmatpush1.msra.mxu0 0.0
    %1298 = vmatprep.subr.mxu0 0.0
    %1299 = vmatpush1.msra.mxu0 0.0
    %1300 = vmatprep.subr.mxu0 0.0
    %1301 = vmatpush1.msra.mxu0 0.0
    %1302 = vmatprep.subr.mxu0 0.0
    %1303 = vmatpush1.msra.mxu0 0.0
    %1304 = vmatprep.subr.mxu0 0.0
    %1305 = vmatpush1.msra.mxu0 0.0
    %1306 = vmatprep.subr.mxu0 0.0
    %1307 = vmatpush1.msra.mxu0 0.0
    %1308 = vmatprep.subr.mxu0 0.0
    %1309 = vmatpush1.msra.mxu0 0.0
    %1310 = vmatprep.subr.mxu0 0.0
    %1311 = vmatpush1.msra.mxu0 0.0
    %1312 = vmatprep.subr.mxu0 0.0
    %1313 = vmatpush1.msra.mxu0 0.0
    %1314 = vmatprep.mubr.f32.mxu0 0.0
    %1315 = vmatmul.mubr.f32.gmra.mrb[0].mxu0 %v265
    %v1316 = vpop.f32.mrb[0].mxu0
    %v1317 = vadd.f32 0.0, %v1316
    %v1318 = vpop.f32.mrb[0].mxu0
    %1319 = vdwg.mxu0
    %v1321 = vsel %vm89, %v1246, 0
    %1323 = vmatprep.subr.mxu0 0.0
    %1324 = vmatpush1.msra.mxu0 %v1321
    %1325 = vmatprep.subr.mxu0 0.0
    %1326 = vmatpush1.msra.mxu0 0.0
    %1327 = vmatprep.subr.mxu0 0.0
    %1328 = vmatpush1.msra.mxu0 0.0
    %1329 = vmatprep.subr.mxu0 0.0
    %1330 = vmatpush1.msra.mxu0 0.0
    %1331 = vmatprep.subr.mxu0 0.0
    %1332 = vmatpush1.msra.mxu0 0.0
    %1333 = vmatprep.subr.mxu0 0.0
    %1334 = vmatpush1.msra.mxu0 0.0
    %1335 = vmatprep.subr.mxu0 0.0
    %1336 = vmatpush1.msra.mxu0 0.0
    %1337 = vmatprep.subr.mxu0 0.0
    %1338 = vmatpush1.msra.mxu0 0.0
    %1339 = vmatprep.subr.mxu0 0.0
    %1340 = vmatpush1.msra.mxu0 0.0
    %1341 = vmatprep.subr.mxu0 0.0
    %1342 = vmatpush1.msra.mxu0 0.0
    %1343 = vmatprep.subr.mxu0 0.0
    %1344 = vmatpush1.msra.mxu0 0.0
    %1345 = vmatprep.subr.mxu0 0.0
    %1346 = vmatpush1.msra.mxu0 0.0
    %1347 = vmatprep.subr.mxu0 0.0
    %1348 = vmatpush1.msra.mxu0 0.0
    %1349 = vmatprep.subr.mxu0 0.0
    %1350 = vmatpush1.msra.mxu0 0.0
    %1351 = vmatprep.subr.mxu0 0.0
    %1352 = vmatpush1.msra.mxu0 0.0
    %1353 = vmatprep.subr.mxu0 0.0
    %1354 = vmatpush1.msra.mxu0 0.0
    %1355 = vmatprep.subr.mxu0 0.0
    %1356 = vmatpush1.msra.mxu0 0.0
    %1357 = vmatprep.subr.mxu0 0.0
    %1358 = vmatpush1.msra.mxu0 0.0
    %1359 = vmatprep.subr.mxu0 0.0
    %1360 = vmatpush1.msra.mxu0 0.0
    %1361 = vmatprep.subr.mxu0 0.0
    %1362 = vmatpush1.msra.mxu0 0.0
    %1363 = vmatprep.subr.mxu0 0.0
    %1364 = vmatpush1.msra.mxu0 0.0
    %1365 = vmatprep.subr.mxu0 0.0
    %1366 = vmatpush1.msra.mxu0 0.0
    %1367 = vmatprep.subr.mxu0 0.0
    %1368 = vmatpush1.msra.mxu0 0.0
    %1369 = vmatprep.subr.mxu0 0.0
    %1370 = vmatpush1.msra.mxu0 0.0
    %1371 = vmatprep.subr.mxu0 0.0
    %1372 = vmatpush1.msra.mxu0 0.0
    %1373 = vmatprep.subr.mxu0 0.0
    %1374 = vmatpush1.msra.mxu0 0.0
    %1375 = vmatprep.subr.mxu0 0.0
    %1376 = vmatpush1.msra.mxu0 0.0
    %1377 = vmatprep.subr.mxu0 0.0
    %1378 = vmatpush1.msra.mxu0 0.0
    %1379 = vmatprep.subr.mxu0 0.0
    %1380 = vmatpush1.msra.mxu0 0.0
    %1381 = vmatprep.subr.mxu0 0.0
    %1382 = vmatpush1.msra.mxu0 0.0
    %1383 = vmatprep.subr.mxu0 0.0
    %1384 = vmatpush1.msra.mxu0 0.0
    %1385 = vmatprep.subr.mxu0 0.0
    %1386 = vmatpush1.msra.mxu0 0.0
    %1387 = vmatprep.mubr.f32.mxu0 0.0
    %1388 = vmatmul.mubr.f32.gmra.mrb[0].mxu0 %v341
    %v1389 = vpop.f32.mrb[0].mxu0
    %v1390 = vadd.f32 %v1317, %v1389
    %v1391 = vpop.f32.mrb[0].mxu0
    %1392 = vdwg.mxu0
    %1393 = vrot.lane.b32.xlu0 %v1243, 127
    %v1394 = vpop.permute.xlu0 %1393
    %v1395 = vsel %vm56, %v1394, 0.0
    %v1397 = vsel %vm89, %v1395, 0
    %1399 = vmatprep.subr.mxu0 0.0
    %1400 = vmatpush1.msra.mxu0 %v1397
    %1401 = vmatprep.subr.mxu0 0.0
    %1402 = vmatpush1.msra.mxu0 0.0
    %1403 = vmatprep.subr.mxu0 0.0
    %1404 = vmatpush1.msra.mxu0 0.0
    %1405 = vmatprep.subr.mxu0 0.0
    %1406 = vmatpush1.msra.mxu0 0.0
    %1407 = vmatprep.subr.mxu0 0.0
    %1408 = vmatpush1.msra.mxu0 0.0
    %1409 = vmatprep.subr.mxu0 0.0
    %1410 = vmatpush1.msra.mxu0 0.0
    %1411 = vmatprep.subr.mxu0 0.0
    %1412 = vmatpush1.msra.mxu0 0.0
    %1413 = vmatprep.subr.mxu0 0.0
    %1414 = vmatpush1.msra.mxu0 0.0
    %1415 = vmatprep.subr.mxu0 0.0
    %1416 = vmatpush1.msra.mxu0 0.0
    %1417 = vmatprep.subr.mxu0 0.0
    %1418 = vmatpush1.msra.mxu0 0.0
    %1419 = vmatprep.subr.mxu0 0.0
    %1420 = vmatpush1.msra.mxu0 0.0
    %1421 = vmatprep.subr.mxu0 0.0
    %1422 = vmatpush1.msra.mxu0 0.0
    %1423 = vmatprep.subr.mxu0 0.0
    %1424 = vmatpush1.msra.mxu0 0.0
    %1425 = vmatprep.subr.mxu0 0.0
    %1426 = vmatpush1.msra.mxu0 0.0
    %1427 = vmatprep.subr.mxu0 0.0
    %1428 = vmatpush1.msra.mxu0 0.0
    %1429 = vmatprep.subr.mxu0 0.0
    %1430 = vmatpush1.msra.mxu0 0.0
    %1431 = vmatprep.subr.mxu0 0.0
    %1432 = vmatpush1.msra.mxu0 0.0
    %1433 = vmatprep.subr.mxu0 0.0
    %1434 = vmatpush1.msra.mxu0 0.0
    %1435 = vmatprep.subr.mxu0 0.0
    %1436 = vmatpush1.msra.mxu0 0.0
    %1437 = vmatprep.subr.mxu0 0.0
    %1438 = vmatpush1.msra.mxu0 0.0
    %1439 = vmatprep.subr.mxu0 0.0
    %1440 = vmatpush1.msra.mxu0 0.0
    %1441 = vmatprep.subr.mxu0 0.0
    %1442 = vmatpush1.msra.mxu0 0.0
    %1443 = vmatprep.subr.mxu0 0.0
    %1444 = vmatpush1.msra.mxu0 0.0
    %1445 = vmatprep.subr.mxu0 0.0
    %1446 = vmatpush1.msra.mxu0 0.0
    %1447 = vmatprep.subr.mxu0 0.0
    %1448 = vmatpush1.msra.mxu0 0.0
    %1449 = vmatprep.subr.mxu0 0.0
    %1450 = vmatpush1.msra.mxu0 0.0
    %1451 = vmatprep.subr.mxu0 0.0
    %1452 = vmatpush1.msra.mxu0 0.0
    %1453 = vmatprep.subr.mxu0 0.0
    %1454 = vmatpush1.msra.mxu0 0.0
    %1455 = vmatprep.subr.mxu0 0.0
    %1456 = vmatpush1.msra.mxu0 0.0
    %1457 = vmatprep.subr.mxu0 0.0
    %1458 = vmatpush1.msra.mxu0 0.0
    %1459 = vmatprep.subr.mxu0 0.0
    %1460 = vmatpush1.msra.mxu0 0.0
    %1461 = vmatprep.subr.mxu0 0.0
    %1462 = vmatpush1.msra.mxu0 0.0
    %1463 = vmatprep.mubr.f32.mxu0 0.0
    %1464 = vmatmul.mubr.f32.gmra.mrb[0].mxu0 %v420
    %v1465 = vpop.f32.mrb[0].mxu0
    %v1466 = vadd.f32 0.0, %v1465
    %v1467 = vpop.f32.mrb[0].mxu0
    %1468 = vdwg.mxu0
    %v1469 = vadd.f32 %v1390, %v1466
    %v1470 = vmul.f32 %v1469, %v499
    %v1471 = vadd.f32 %v1470, %v504
    %v1472 = vmax.f32 %v1471, 0.0
    %1473 = vst [vmem:[%s1169 + $0x8] sm:$0xff] %v1472
    %1474 = vmatprep.subr.mxu0 0.0
    %1475 = vmatpush1.msra.mxu0 %v1094
    %1476 = vmatprep.subr.mxu0 0.0
    %1477 = vmatpush1.msra.mxu0 0.0
    %1478 = vmatprep.subr.mxu0 0.0
    %1479 = vmatpush1.msra.mxu0 0.0
    %1480 = vmatprep.subr.mxu0 0.0
    %1481 = vmatpush1.msra.mxu0 0.0
    %1482 = vmatprep.subr.mxu0 0.0
    %1483 = vmatpush1.msra.mxu0 0.0
    %1484 = vmatprep.subr.mxu0 0.0
    %1485 = vmatpush1.msra.mxu0 0.0
    %1486 = vmatprep.subr.mxu0 0.0
    %1487 = vmatpush1.msra.mxu0 0.0
    %1488 = vmatprep.subr.mxu0 0.0
    %1489 = vmatpush1.msra.mxu0 0.0
    %1490 = vmatprep.subr.mxu0 0.0
    %1491 = vmatpush1.msra.mxu0 0.0
    %1492 = vmatprep.subr.mxu0 0.0
    %1493 = vmatpush1.msra.mxu0 0.0
    %1494 = vmatprep.subr.mxu0 0.0
    %1495 = vmatpush1.msra.mxu0 0.0
    %1496 = vmatprep.subr.mxu0 0.0
    %1497 = vmatpush1.msra.mxu0 0.0
    %1498 = vmatprep.subr.mxu0 0.0
    %1499 = vmatpush1.msra.mxu0 0.0
    %1500 = vmatprep.subr.mxu0 0.0
    %1501 = vmatpush1.msra.mxu0 0.0
    %1502 = vmatprep.subr.mxu0 0.0
    %1503 = vmatpush1.msra.mxu0 0.0
    %1504 = vmatprep.subr.mxu0 0.0
    %1505 = vmatpush1.msra.mxu0 0.0
    %1506 = vmatprep.subr.mxu0 0.0
    %1507 = vmatpush1.msra.mxu0 0.0
    %1508 = vmatprep.subr.mxu0 0.0
    %1509 = vmatpush1.msra.mxu0 0.0
    %1510 = vmatprep.subr.mxu0 0.0
    %1511 = vmatpush1.msra.mxu0 0.0
    %1512 = vmatprep.subr.mxu0 0.0
    %1513 = vmatpush1.msra.mxu0 0.0
    %1514 = vmatprep.subr.mxu0 0.0
    %1515 = vmatpush1.msra.mxu0 0.0
    %1516 = vmatprep.subr.mxu0 0.0
    %1517 = vmatpush1.msra.mxu0 0.0
    %1518 = vmatprep.subr.mxu0 0.0
    %1519 = vmatpush1.msra.mxu0 0.0
    %1520 = vmatprep.subr.mxu0 0.0
    %1521 = vmatpush1.msra.mxu0 0.0
    %1522 = vmatprep.subr.mxu0 0.0
    %1523 = vmatpush1.msra.mxu0 0.0
    %1524 = vmatprep.subr.mxu0 0.0
    %1525 = vmatpush1.msra.mxu0 0.0
    %1526 = vmatprep.subr.mxu0 0.0
    %1527 = vmatpush1.msra.mxu0 0.0
    %1528 = vmatprep.subr.mxu0 0.0
    %1529 = vmatpush1.msra.mxu0 0.0
    %1530 = vmatprep.subr.mxu0 0.0
    %1531 = vmatpush1.msra.mxu0 0.0
    %1532 = vmatprep.subr.mxu0 0.0
    %1533 = vmatpush1.msra.mxu0 0.0
    %1534 = vmatprep.subr.mxu0 0.0
    %1535 = vmatpush1.msra.mxu0 0.0
    %1536 = vmatprep.subr.mxu0 0.0
    %1537 = vmatpush1.msra.mxu0 0.0
    %1538 = vmatprep.mubr.f32.mxu0 0.0
    %1539 = vmatmul.mubr.f32.gmra.mrb[0].mxu0 %v510
    %v1540 = vpop.f32.mrb[0].mxu0
    %v1541 = vadd.f32 0.0, %v1540
    %v1542 = vpop.f32.mrb[0].mxu0
    %1543 = vdwg.mxu0
    %v1544 = vmul.f32 %v1541, %v585
    %v1545 = vadd.f32 %v1544, %v590
    %v1546 = vmax.f32 %v1545, 0.0
    %1547 = vrot.lane.b32.xlu0 %v1546, 2
    %v1548 = vpop.permute.xlu0 %1547
    %v1549 = vsel %vm596, %v1548, 0.0
    %1550 = vrot.lane.b32.xlu0 %v1546, 1
    %v1551 = vpop.permute.xlu0 %1550
    %v1552 = vsel %vm49, %v1551, 0.0
    %v1554 = vsel %vm89, %v1552, 0
    %1556 = vmatprep.subr.mxu0 0.0
    %1557 = vmatpush1.msra.mxu0 %v1554
    %1558 = vmatprep.subr.mxu0 0.0
    %1559 = vmatpush1.msra.mxu0 0.0
    %1560 = vmatprep.subr.mxu0 0.0
    %1561 = vmatpush1.msra.mxu0 0.0
    %1562 = vmatprep.subr.mxu0 0.0
    %1563 = vmatpush1.msra.mxu0 0.0
    %1564 = vmatprep.subr.mxu0 0.0
    %1565 = vmatpush1.msra.mxu0 0.0
    %1566 = vmatprep.subr.mxu0 0.0
    %1567 = vmatpush1.msra.mxu0 0.0
    %1568 = vmatprep.subr.mxu0 0.0
    %1569 = vmatpush1.msra.mxu0 0.0
    %1570 = vmatprep.subr.mxu0 0.0
    %1571 = vmatpush1.msra.mxu0 0.0
    %1572 = vmatprep.subr.mxu0 0.0
    %1573 = vmatpush1.msra.mxu0 0.0
    %1574 = vmatprep.subr.mxu0 0.0
    %1575 = vmatpush1.msra.mxu0 0.0
    %1576 = vmatprep.subr.mxu0 0.0
    %1577 = vmatpush1.msra.mxu0 0.0
    %1578 = vmatprep.subr.mxu0 0.0
    %1579 = vmatpush1.msra.mxu0 0.0
    %1580 = vmatprep.subr.mxu0 0.0
    %1581 = vmatpush1.msra.mxu0 0.0
    %1582 = vmatprep.subr.mxu0 0.0
    %1583 = vmatpush1.msra.mxu0 0.0
    %1584 = vmatprep.subr.mxu0 0.0
    %1585 = vmatpush1.msra.mxu0 0.0
    %1586 = vmatprep.subr.mxu0 0.0
    %1587 = vmatpush1.msra.mxu0 0.0
    %1588 = vmatprep.subr.mxu0 0.0
    %1589 = vmatpush1.msra.mxu0 0.0
    %1590 = vmatprep.subr.mxu0 0.0
    %1591 = vmatpush1.msra.mxu0 0.0
    %1592 = vmatprep.subr.mxu0 0.0
    %1593 = vmatpush1.msra.mxu0 0.0
    %1594 = vmatprep.subr.mxu0 0.0
    %1595 = vmatpush1.msra.mxu0 0.0
    %1596 = vmatprep.subr.mxu0 0.0
    %1597 = vmatpush1.msra.mxu0 0.0
    %1598 = vmatprep.subr.mxu0 0.0
    %1599 = vmatpush1.msra.mxu0 0.0
    %1600 = vmatprep.subr.mxu0 0.0
    %1601 = vmatpush1.msra.mxu0 0.0
    %1602 = vmatprep.subr.mxu0 0.0
    %1603 = vmatpush1.msra.mxu0 0.0
    %1604 = vmatprep.subr.mxu0 0.0
    %1605 = vmatpush1.msra.mxu0 0.0
    %1606 = vmatprep.subr.mxu0 0.0
    %1607 = vmatpush1.msra.mxu0 0.0
    %1608 = vmatprep.subr.mxu0 0.0
    %1609 = vmatpush1.msra.mxu0 0.0
    %1610 = vmatprep.subr.mxu0 0.0
    %1611 = vmatpush1.msra.mxu0 0.0
    %1612 = vmatprep.subr.mxu0 0.0
    %1613 = vmatpush1.msra.mxu0 0.0
    %1614 = vmatprep.subr.mxu0 0.0
    %1615 = vmatpush1.msra.mxu0 0.0
    %1616 = vmatprep.subr.mxu0 0.0
    %1617 = vmatpush1.msra.mxu0 0.0
    %1618 = vmatprep.subr.mxu0 0.0
    %1619 = vmatpush1.msra.mxu0 0.0
    %1620 = vmatprep.mubr.f32.mxu0 0.0
    %1621 = vmatmul.mubr.f32.gmra.mrb[0].mxu0 %v602
    %v1622 = vpop.f32.mrb[0].mxu0
    %v1623 = vadd.f32 0.0, %v1622
    %v1624 = vpop.f32.mrb[0].mxu0
    %1625 = vdwg.mxu0
    %v1627 = vsel %vm89, %v1549, 0
    %1629 = vmatprep.subr.mxu0 0.0
    %1630 = vmatpush1.msra.mxu0 %v1627
    %1631 = vmatprep.subr.mxu0 0.0
    %1632 = vmatpush1.msra.mxu0 0.0
    %1633 = vmatprep.subr.mxu0 0.0
    %1634 = vmatpush1.msra.mxu0 0.0
    %1635 = vmatprep.subr.mxu0 0.0
    %1636 = vmatpush1.msra.mxu0 0.0
    %1637 = vmatprep.subr.mxu0 0.0
    %1638 = vmatpush1.msra.mxu0 0.0
    %1639 = vmatprep.subr.mxu0 0.0
    %1640 = vmatpush1.msra.mxu0 0.0
    %1641 = vmatprep.subr.mxu0 0.0
    %1642 = vmatpush1.msra.mxu0 0.0
    %1643 = vmatprep.subr.mxu0 0.0
    %1644 = vmatpush1.msra.mxu0 0.0
    %1645 = vmatprep.subr.mxu0 0.0
    %1646 = vmatpush1.msra.mxu0 0.0
    %1647 = vmatprep.subr.mxu0 0.0
    %1648 = vmatpush1.msra.mxu0 0.0
    %1649 = vmatprep.subr.mxu0 0.0
    %1650 = vmatpush1.msra.mxu0 0.0
    %1651 = vmatprep.subr.mxu0 0.0
    %1652 = vmatpush1.msra.mxu0 0.0
    %1653 = vmatprep.subr.mxu0 0.0
    %1654 = vmatpush1.msra.mxu0 0.0
    %1655 = vmatprep.subr.mxu0 0.0
    %1656 = vmatpush1.msra.mxu0 0.0
    %1657 = vmatprep.subr.mxu0 0.0
    %1658 = vmatpush1.msra.mxu0 0.0
    %1659 = vmatprep.subr.mxu0 0.0
    %1660 = vmatpush1.msra.mxu0 0.0
    %1661 = vmatprep.subr.mxu0 0.0
    %1662 = vmatpush1.msra.mxu0 0.0
    %1663 = vmatprep.subr.mxu0 0.0
    %1664 = vmatpush1.msra.mxu0 0.0
    %1665 = vmatprep.subr.mxu0 0.0
    %1666 = vmatpush1.msra.mxu0 0.0
    %1667 = vmatprep.subr.mxu0 0.0
    %1668 = vmatpush1.msra.mxu0 0.0
    %1669 = vmatprep.subr.mxu0 0.0
    %1670 = vmatpush1.msra.mxu0 0.0
    %1671 = vmatprep.subr.mxu0 0.0
    %1672 = vmatpush1.msra.mxu0 0.0
    %1673 = vmatprep.subr.mxu0 0.0
    %1674 = vmatpush1.msra.mxu0 0.0
    %1675 = vmatprep.subr.mxu0 0.0
    %1676 = vmatpush1.msra.mxu0 0.0
    %1677 = vmatprep.subr.mxu0 0.0
    %1678 = vmatpush1.msra.mxu0 0.0
    %1679 = vmatprep.subr.mxu0 0.0
    %1680 = vmatpush1.msra.mxu0 0.0
    %1681 = vmatprep.subr.mxu0 0.0
    %1682 = vmatpush1.msra.mxu0 0.0
    %1683 = vmatprep.subr.mxu0 0.0
    %1684 = vmatpush1.msra.mxu0 0.0
    %1685 = vmatprep.subr.mxu0 0.0
    %1686 = vmatpush1.msra.mxu0 0.0
    %1687 = vmatprep.subr.mxu0 0.0
    %1688 = vmatpush1.msra.mxu0 0.0
    %1689 = vmatprep.subr.mxu0 0.0
    %1690 = vmatpush1.msra.mxu0 0.0
    %1691 = vmatprep.subr.mxu0 0.0
    %1692 = vmatpush1.msra.mxu0 0.0
    %1693 = vmatprep.mubr.f32.mxu0 0.0
    %1694 = vmatmul.mubr.f32.gmra.mrb[0].mxu0 %v678
    %v1695 = vpop.f32.mrb[0].mxu0
    %v1696 = vadd.f32 %v1623, %v1695
    %v1697 = vpop.f32.mrb[0].mxu0
    %1698 = vdwg.mxu0
    %v1700 = vsel %vm89, %v1546, 0
    %1702 = vmatprep.subr.mxu0 0.0
    %1703 = vmatpush1.msra.mxu0 %v1700
    %1704 = vmatprep.subr.mxu0 0.0
    %1705 = vmatpush1.msra.mxu0 0.0
    %1706 = vmatprep.subr.mxu0 0.0
    %1707 = vmatpush1.msra.mxu0 0.0
    %1708 = vmatprep.subr.mxu0 0.0
    %1709 = vmatpush1.msra.mxu0 0.0
    %1710 = vmatprep.subr.mxu0 0.0
    %1711 = vmatpush1.msra.mxu0 0.0
    %1712 = vmatprep.subr.mxu0 0.0
    %1713 = vmatpush1.msra.mxu0 0.0
    %1714 = vmatprep.subr.mxu0 0.0
    %1715 = vmatpush1.msra.mxu0 0.0
    %1716 = vmatprep.subr.mxu0 0.0
    %1717 = vmatpush1.msra.mxu0 0.0
    %1718 = vmatprep.subr.mxu0 0.0
    %1719 = vmatpush1.msra.mxu0 0.0
    %1720 = vmatprep.subr.mxu0 0.0
    %1721 = vmatpush1.msra.mxu0 0.0
    %1722 = vmatprep.subr.mxu0 0.0
    %1723 = vmatpush1.msra.mxu0 0.0
    %1724 = vmatprep.subr.mxu0 0.0
    %1725 = vmatpush1.msra.mxu0 0.0
    %1726 = vmatprep.subr.mxu0 0.0
    %1727 = vmatpush1.msra.mxu0 0.0
    %1728 = vmatprep.subr.mxu0 0.0
    %1729 = vmatpush1.msra.mxu0 0.0
    %1730 = vmatprep.subr.mxu0 0.0
    %1731 = vmatpush1.msra.mxu0 0.0
    %1732 = vmatprep.subr.mxu0 0.0
    %1733 = vmatpush1.msra.mxu0 0.0
    %1734 = vmatprep.subr.mxu0 0.0
    %1735 = vmatpush1.msra.mxu0 0.0
    %1736 = vmatprep.subr.mxu0 0.0
    %1737 = vmatpush1.msra.mxu0 0.0
    %1738 = vmatprep.subr.mxu0 0.0
    %1739 = vmatpush1.msra.mxu0 0.0
    %1740 = vmatprep.subr.mxu0 0.0
    %1741 = vmatpush1.msra.mxu0 0.0
    %1742 = vmatprep.subr.mxu0 0.0
    %1743 = vmatpush1.msra.mxu0 0.0
    %1744 = vmatprep.subr.mxu0 0.0
    %1745 = vmatpush1.msra.mxu0 0.0
    %1746 = vmatprep.subr.mxu0 0.0
    %1747 = vmatpush1.msra.mxu0 0.0
    %1748 = vmatprep.subr.mxu0 0.0
    %1749 = vmatpush1.msra.mxu0 0.0
    %1750 = vmatprep.subr.mxu0 0.0
    %1751 = vmatpush1.msra.mxu0 0.0
    %1752 = vmatprep.subr.mxu0 0.0
    %1753 = vmatpush1.msra.mxu0 0.0
    %1754 = vmatprep.subr.mxu0 0.0
    %1755 = vmatpush1.msra.mxu0 0.0
    %1756 = vmatprep.subr.mxu0 0.0
    %1757 = vmatpush1.msra.mxu0 0.0
    %1758 = vmatprep.subr.mxu0 0.0
    %1759 = vmatpush1.msra.mxu0 0.0
    %1760 = vmatprep.subr.mxu0 0.0
    %1761 = vmatpush1.msra.mxu0 0.0
    %1762 = vmatprep.subr.mxu0 0.0
    %1763 = vmatpush1.msra.mxu0 0.0
    %1764 = vmatprep.subr.mxu0 0.0
    %1765 = vmatpush1.msra.mxu0 0.0
    %1766 = vmatprep.mubr.f32.mxu0 0.0
    %1767 = vmatmul.mubr.f32.gmra.mrb[0].mxu0 %v754
    %v1768 = vpop.f32.mrb[0].mxu0
    %v1769 = vadd.f32 0.0, %v1768
    %v1770 = vpop.f32.mrb[0].mxu0
    %1771 = vdwg.mxu0
    %v1772 = vadd.f32 %v1696, %v1769
    %1773 = vrot.lane.b32.xlu0 %v1546, 127
    %v1774 = vpop.permute.xlu0 %1773
    %v1775 = vsel %vm56, %v1774, 0.0
    %v1777 = vsel %vm89, %v1775, 0
    %1779 = vmatprep.subr.mxu0 0.0
    %1780 = vmatpush1.msra.mxu0 %v1777
    %1781 = vmatprep.subr.mxu0 0.0
    %1782 = vmatpush1.msra.mxu0 0.0
    %1783 = vmatprep.subr.mxu0 0.0
    %1784 = vmatpush1.msra.mxu0 0.0
    %1785 = vmatprep.subr.mxu0 0.0
    %1786 = vmatpush1.msra.mxu0 0.0
    %1787 = vmatprep.subr.mxu0 0.0
    %1788 = vmatpush1.msra.mxu0 0.0
    %1789 = vmatprep.subr.mxu0 0.0
    %1790 = vmatpush1.msra.mxu0 0.0
    %1791 = vmatprep.subr.mxu0 0.0
    %1792 = vmatpush1.msra.mxu0 0.0
    %1793 = vmatprep.subr.mxu0 0.0
    %1794 = vmatpush1.msra.mxu0 0.0
    %1795 = vmatprep.subr.mxu0 0.0
    %1796 = vmatpush1.msra.mxu0 0.0
    %1797 = vmatprep.subr.mxu0 0.0
    %1798 = vmatpush1.msra.mxu0 0.0
    %1799 = vmatprep.subr.mxu0 0.0
    %1800 = vmatpush1.msra.mxu0 0.0
    %1801 = vmatprep.subr.mxu0 0.0
    %1802 = vmatpush1.msra.mxu0 0.0
    %1803 = vmatprep.subr.mxu0 0.0
    %1804 = vmatpush1.msra.mxu0 0.0
    %1805 = vmatprep.subr.mxu0 0.0
    %1806 = vmatpush1.msra.mxu0 0.0
    %1807 = vmatprep.subr.mxu0 0.0
    %1808 = vmatpush1.msra.mxu0 0.0
    %1809 = vmatprep.subr.mxu0 0.0
    %1810 = vmatpush1.msra.mxu0 0.0
    %1811 = vmatprep.subr.mxu0 0.0
    %1812 = vmatpush1.msra.mxu0 0.0
    %1813 = vmatprep.subr.mxu0 0.0
    %1814 = vmatpush1.msra.mxu0 0.0
    %1815 = vmatprep.subr.mxu0 0.0
    %1816 = vmatpush1.msra.mxu0 0.0
    %1817 = vmatprep.subr.mxu0 0.0
    %1818 = vmatpush1.msra.mxu0 0.0
    %1819 = vmatprep.subr.mxu0 0.0
    %1820 = vmatpush1.msra.mxu0 0.0
    %1821 = vmatprep.subr.mxu0 0.0
    %1822 = vmatpush1.msra.mxu0 0.0
    %1823 = vmatprep.subr.mxu0 0.0
    %1824 = vmatpush1.msra.mxu0 0.0
    %1825 = vmatprep.subr.mxu0 0.0
    %1826 = vmatpush1.msra.mxu0 0.0
    %1827 = vmatprep.subr.mxu0 0.0
    %1828 = vmatpush1.msra.mxu0 0.0
    %1829 = vmatprep.subr.mxu0 0.0
    %1830 = vmatpush1.msra.mxu0 0.0
    %1831 = vmatprep.subr.mxu0 0.0
    %1832 = vmatpush1.msra.mxu0 0.0
    %1833 = vmatprep.subr.mxu0 0.0
    %1834 = vmatpush1.msra.mxu0 0.0
    %1835 = vmatprep.subr.mxu0 0.0
    %1836 = vmatpush1.msra.mxu0 0.0
    %1837 = vmatprep.subr.mxu0 0.0
    %1838 = vmatpush1.msra.mxu0 0.0
    %1839 = vmatprep.subr.mxu0 0.0
    %1840 = vmatpush1.msra.mxu0 0.0
    %1841 = vmatprep.subr.mxu0 0.0
    %1842 = vmatpush1.msra.mxu0 0.0
    %1843 = vmatprep.mubr.f32.mxu0 0.0
    %1844 = vmatmul.mubr.f32.gmra.mrb[0].mxu0 %v834
    %v1845 = vpop.f32.mrb[0].mxu0
    %v1846 = vadd.f32 0.0, %v1845
    %v1847 = vpop.f32.mrb[0].mxu0
    %1848 = vdwg.mxu0
    %v1849 = vadd.f32 %v1772, %v1846
    %1850 = vrot.lane.b32.xlu0 %v1546, 126
    %v1851 = vpop.permute.xlu0 %1850
    %v1852 = vsel %vm912, %v1851, 0.0
    %v1854 = vsel %vm89, %v1852, 0
    %1856 = vmatprep.subr.mxu0 0.0
    %1857 = vmatpush1.msra.mxu0 %v1854
    %1858 = vmatprep.subr.mxu0 0.0
    %1859 = vmatpush1.msra.mxu0 0.0
    %1860 = vmatprep.subr.mxu0 0.0
    %1861 = vmatpush1.msra.mxu0 0.0
    %1862 = vmatprep.subr.mxu0 0.0
    %1863 = vmatpush1.msra.mxu0 0.0
    %1864 = vmatprep.subr.mxu0 0.0
    %1865 = vmatpush1.msra.mxu0 0.0
    %1866 = vmatprep.subr.mxu0 0.0
    %1867 = vmatpush1.msra.mxu0 0.0
    %1868 = vmatprep.subr.mxu0 0.0
    %1869 = vmatpush1.msra.mxu0 0.0
    %1870 = vmatprep.subr.mxu0 0.0
    %1871 = vmatpush1.msra.mxu0 0.0
    %1872 = vmatprep.subr.mxu0 0.0
    %1873 = vmatpush1.msra.mxu0 0.0
    %1874 = vmatprep.subr.mxu0 0.0
    %1875 = vmatpush1.msra.mxu0 0.0
    %1876 = vmatprep.subr.mxu0 0.0
    %1877 = vmatpush1.msra.mxu0 0.0
    %1878 = vmatprep.subr.mxu0 0.0
    %1879 = vmatpush1.msra.mxu0 0.0
    %1880 = vmatprep.subr.mxu0 0.0
    %1881 = vmatpush1.msra.mxu0 0.0
    %1882 = vmatprep.subr.mxu0 0.0
    %1883 = vmatpush1.msra.mxu0 0.0
    %1884 = vmatprep.subr.mxu0 0.0
    %1885 = vmatpush1.msra.mxu0 0.0
    %1886 = vmatprep.subr.mxu0 0.0
    %1887 = vmatpush1.msra.mxu0 0.0
    %1888 = vmatprep.subr.mxu0 0.0
    %1889 = vmatpush1.msra.mxu0 0.0
    %1890 = vmatprep.subr.mxu0 0.0
    %1891 = vmatpush1.msra.mxu0 0.0
    %1892 = vmatprep.subr.mxu0 0.0
    %1893 = vmatpush1.msra.mxu0 0.0
    %1894 = vmatprep.subr.mxu0 0.0
    %1895 = vmatpush1.msra.mxu0 0.0
    %1896 = vmatprep.subr.mxu0 0.0
    %1897 = vmatpush1.msra.mxu0 0.0
    %1898 = vmatprep.subr.mxu0 0.0
    %1899 = vmatpush1.msra.mxu0 0.0
    %1900 = vmatprep.subr.mxu0 0.0
    %1901 = vmatpush1.msra.mxu0 0.0
    %1902 = vmatprep.subr.mxu0 0.0
    %1903 = vmatpush1.msra.mxu0 0.0
    %1904 = vmatprep.subr.mxu0 0.0
    %1905 = vmatpush1.msra.mxu0 0.0
    %1906 = vmatprep.subr.mxu0 0.0
    %1907 = vmatpush1.msra.mxu0 0.0
    %1908 = vmatprep.subr.mxu0 0.0
    %1909 = vmatpush1.msra.mxu0 0.0
    %1910 = vmatprep.subr.mxu0 0.0
    %1911 = vmatpush1.msra.mxu0 0.0
    %1912 = vmatprep.subr.mxu0 0.0
    %1913 = vmatpush1.msra.mxu0 0.0
    %1914 = vmatprep.subr.mxu0 0.0
    %1915 = vmatpush1.msra.mxu0 0.0
    %1916 = vmatprep.subr.mxu0 0.0
    %1917 = vmatpush1.msra.mxu0 0.0
    %1918 = vmatprep.subr.mxu0 0.0
    %1919 = vmatpush1.msra.mxu0 0.0
    %1920 = vmatprep.mubr.f32.mxu0 0.0
    %1921 = vmatmul.mubr.f32.gmra.mrb[0].mxu0 %v915
    %v1922 = vpop.f32.mrb[0].mxu0
    %v1923 = vadd.f32 0.0, %v1922
    %v1924 = vpop.f32.mrb[0].mxu0
    %1925 = vdwg.mxu0
    %v1926 = vadd.f32 %v1849, %v1923
    %v1927 = vmul.f32 %v1926, %v994
    %v1928 = vadd.f32 %v1927, %v999
    %v1929 = vmax.f32 %v1928, 0.0
    %1930 = vst [vmem:[%s1169 + $0x10] sm:$0xff] %v1929
    %v1932 = vsel %vm89, %v66, 0
    %1934 = vmatprep.subr.mxu0 0.0
    %1935 = vmatpush1.msra.mxu0 %v1932
    %1936 = vmatprep.subr.mxu0 0.0
    %1937 = vmatpush1.msra.mxu0 0.0
    %1938 = vmatprep.subr.mxu0 0.0
    %1939 = vmatpush1.msra.mxu0 0.0
    %1940 = vmatprep.subr.mxu0 0.0
    %1941 = vmatpush1.msra.mxu0 0.0
    %1942 = vmatprep.subr.mxu0 0.0
    %1943 = vmatpush1.msra.mxu0 0.0
    %1944 = vmatprep.subr.mxu0 0.0
    %1945 = vmatpush1.msra.mxu0 0.0
    %1946 = vmatprep.subr.mxu0 0.0
    %1947 = vmatpush1.msra.mxu0 0.0
    %1948 = vmatprep.subr.mxu0 0.0
    %1949 = vmatpush1.msra.mxu0 0.0
    %1950 = vmatprep.subr.mxu0 0.0
    %1951 = vmatpush1.msra.mxu0 0.0
    %1952 = vmatprep.subr.mxu0 0.0
    %1953 = vmatpush1.msra.mxu0 0.0
    %1954 = vmatprep.subr.mxu0 0.0
    %1955 = vmatpush1.msra.mxu0 0.0
    %1956 = vmatprep.subr.mxu0 0.0
    %1957 = vmatpush1.msra.mxu0 0.0
    %1958 = vmatprep.subr.mxu0 0.0
    %1959 = vmatpush1.msra.mxu0 0.0
    %1960 = vmatprep.subr.mxu0 0.0
    %1961 = vmatpush1.msra.mxu0 0.0
    %1962 = vmatprep.subr.mxu0 0.0
    %1963 = vmatpush1.msra.mxu0 0.0
    %1964 = vmatprep.subr.mxu0 0.0
    %1965 = vmatpush1.msra.mxu0 0.0
    %1966 = vmatprep.subr.mxu0 0.0
    %1967 = vmatpush1.msra.mxu0 0.0
    %1968 = vmatprep.subr.mxu0 0.0
    %1969 = vmatpush1.msra.mxu0 0.0
    %1970 = vmatprep.subr.mxu0 0.0
    %1971 = vmatpush1.msra.mxu0 0.0
    %1972 = vmatprep.subr.mxu0 0.0
    %1973 = vmatpush1.msra.mxu0 0.0
    %1974 = vmatprep.subr.mxu0 0.0
    %1975 = vmatpush1.msra.mxu0 0.0
    %1976 = vmatprep.subr.mxu0 0.0
    %1977 = vmatpush1.msra.mxu0 0.0
    %1978 = vmatprep.subr.mxu0 0.0
    %1979 = vmatpush1.msra.mxu0 0.0
    %1980 = vmatprep.subr.mxu0 0.0
    %1981 = vmatpush1.msra.mxu0 0.0
    %1982 = vmatprep.subr.mxu0 0.0
    %1983 = vmatpush1.msra.mxu0 0.0
    %1984 = vmatprep.subr.mxu0 0.0
    %1985 = vmatpush1.msra.mxu0 0.0
    %1986 = vmatprep.subr.mxu0 0.0
    %1987 = vmatpush1.msra.mxu0 0.0
    %1988 = vmatprep.subr.mxu0 0.0
    %1989 = vmatpush1.msra.mxu0 0.0
    %1990 = vmatprep.subr.mxu0 0.0
    %1991 = vmatpush1.msra.mxu0 0.0
    %1992 = vmatprep.subr.mxu0 0.0
    %1993 = vmatpush1.msra.mxu0 0.0
    %1994 = vmatprep.subr.mxu0 0.0
    %1995 = vmatpush1.msra.mxu0 0.0
    %1996 = vmatprep.subr.mxu0 0.0
    %1997 = vmatpush1.msra.mxu0 0.0
    %1998 = vmatprep.mubr.f32.mxu0 0.0
    %1999 = vmatmul.mubr.f32.gmra.mrb[0].mxu0 %v1005
    %v2000 = vpop.f32.mrb[0].mxu0
    %v2001 = vadd.f32 0.0, %v2000
    %v2002 = vpop.f32.mrb[0].mxu0
    %2003 = vdwg.mxu0
    %v2004 = vmul.f32 %v2001, %v1083
    %v2005 = vadd.f32 %v2004, %v1088
    %v2006 = vmax.f32 %v2005, 0.0
    %2007 = vst [vmem:[%s1169 + $0x18] sm:$0xff] %v2006
    // Predicated region
    $region54: #{inception1d_block_forward.5} parent=1 // pred_check
      _
    $region55: #{inception1d_block_forward.5} parent=1 // pred_check_branch
      %2009 = sbr.rel (0) target = $region57
    $region56: #{inception1d_block_forward.5} parent=1 // pred_region
      %s2011 = ssub.s32 1024, 1024
      %2012 = vsyncadd [#allocation3], %s2011
      %s2013 = sshll.u32 [#allocation2], 4
      %s2014 = int_to_ptr.vmem [resolvable:$true] %s2013
      %2019 = dma.vmem_to_hbm [thread:$0]  %s2014, 1024, %s13, [#allocation3], 128, 128, 8
    $region57: #{inception1d_block_forward.5} parent=1 // pred_fallthru
      _
    // Predicated region
    $region58: #{inception1d_block_forward.5} parent=1 // pred_check
      _
    $region59: #{inception1d_block_forward.5} parent=1 // pred_check_branch
      %2021 = sbr.rel (0) target = $region61
    $region60: #{inception1d_block_forward.5} parent=1 // pred_region
      %2022 = dma.done [#allocation3], 1024
    $region61: #{inception1d_block_forward.5} parent=1 // pred_fallthru
      _
    %2023 = vsyncpa [#allocation3], 1

</llo_original>
